<compile_context>
chip_gen: v7x
topology: tpu7x:2x2x1
jax: 0.10.0
libtpu: 0.0.40
codegen_flags: <defaults>
</compile_context>

<pallas_src>
import functools

import jax
import jax.numpy as jnp
from jax.experimental import pallas as pl
from jax.experimental.pallas import tpu as pltpu


# ----------------------------------------------------------------------------
# Pallas kernel: one grid step == one chunk of `chunk_len` timesteps.
# ----------------------------------------------------------------------------
def _rnn_chunk_kernel(cell_type, hp, chunk_len, unroll,
                      gi_ref, whh_ref, bhn_ref, out_ref, h_scratch):
    """
    gi_ref  : (TC, B, G*Hp) bf16  precomputed input projection (+ folded biases)
    whh_ref : (Hp, G*Hp)    bf16  hidden-to-hidden weight (transposed, padded)
    bhn_ref : (B, Hp)       f32   b_hn pre-broadcast over batch (GRU only)
    out_ref : (TC, B, Hp)   f32   per-timestep hidden states for this chunk
    h_scratch: (B, Hp)      f32   hidden state carried across chunks (grid steps)
    """
    c = pl.program_id(0)

    # h0 = 0 (PyTorch default when no initial hidden state is passed).
    @pl.when(c == 0)
    def _init():
        h_scratch[...] = jnp.zeros_like(h_scratch)

    if cell_type == "GRU":
        # Loaded once per chunk; already (B, Hp) so there is no per-step
        # broadcast_in_dim on the serial critical path.
        bhn = bhn_ref[...]

    def step(t, h):
        gi_t = gi_ref[t].astype(jnp.float32)                    # (B, G*Hp)
        gh = jnp.dot(h.astype(jnp.bfloat16), whh_ref[...],      # MXU bf16 x bf16
                     preferred_element_type=jnp.float32)        # -> (B, G*Hp) f32
        if cell_type == "GRU":
            # PyTorch gate order: r, z, n.  b_ir/b_iz/b_in and b_hr/b_hz are
            # folded into gi; only b_hn must stay inside r*( . ).
            # Hp is a multiple of 128 -> these slices are whole-vreg selects.
            r = jax.nn.sigmoid(gi_t[:, 0:hp] + gh[:, 0:hp])
            z = jax.nn.sigmoid(gi_t[:, hp:2 * hp] + gh[:, hp:2 * hp])
            n = jnp.tanh(gi_t[:, 2 * hp:] + r * (gh[:, 2 * hp:] + bhn))
            h_new = (1.0 - z) * n + z * h
        else:  # 'RNN' (tanh nonlinearity); all biases folded into gi
            h_new = jnp.tanh(gi_t + gh)
        # VMEM store (lane-aligned: last dim = Hp = k*128); the whole
        # (TC, B, Hp) block is DMA'd to HBM once per chunk.
        out_ref[t] = h_new.astype(out_ref.dtype)
        return h_new

    h_scratch[...] = jax.lax.fori_loop(0, chunk_len, step, h_scratch[...],
                                       unroll=unroll)


# ----------------------------------------------------------------------------
# Wrapper: time-chunked grid over the recurrence.
# ----------------------------------------------------------------------------
def run_recurrent_encoder(gi, w_hh_t_p, b_hn_full, cell_type, hp, time_chunk=64):
    """gi: (T, B, G*Hp) bf16 precomputed input projection (biases folded in,
    H padded to Hp per gate).  w_hh_t_p: (Hp, G*Hp) bf16.  b_hn_full: (B, Hp) f32.
    Returns the padded-H output (T, B, Hp) f32."""
    T, B, GHp = gi.shape

    # Balanced time chunks: total padded-tail waste <= num_chunks - 1 steps.
    num_chunks = pl.cdiv(T, time_chunk)
    TC = pl.cdiv(T, num_chunks)
    T_pad = num_chunks * TC
    if T_pad != T:
        # Padded tail runs after the last real step; it cannot affect output[:T]
        # (which contains the final hidden state). h_scratch keeps mutating on
        # those steps but is never read back.
        gi = jnp.pad(gi, ((0, T_pad - T), (0, 0), (0, 0)))

    # Full unroll for short chunks, partial unroll otherwise (LLO visibility).
    unroll = TC if TC <= 16 else 8
    kernel = functools.partial(_rnn_chunk_kernel, cell_type, hp, TC, unroll)

    def build(single_buffer_weights):
        # Constant-index weight/bias specs: double-buffering them is pure VMEM
        # waste, so request a single buffer (most valuable on v7x's 64 MiB VMEM).
        kw = ({"pipeline_mode": pl.Buffered(1)} if single_buffer_weights else {})
        grid_spec = pltpu.PrefetchScalarGridSpec(
            num_scalar_prefetch=0,
            grid=(num_chunks,),
            in_specs=[
                pl.BlockSpec((TC, B, GHp), lambda c: (c, 0, 0)),      # gi chunk
                pl.BlockSpec((hp, GHp), lambda c: (0, 0), **kw),      # W_hh^T (resident)
                pl.BlockSpec((B, hp), lambda c: (0, 0), **kw),        # b_hn   (resident)
            ],
            out_specs=pl.BlockSpec((TC, B, hp), lambda c: (c, 0, 0)),
            scratch_shapes=[pltpu.VMEM((B, hp), jnp.float32)],        # carried hidden
        )
        return pl.pallas_call(
            kernel,
            out_shape=jax.ShapeDtypeStruct((T_pad, B, hp), jnp.float32),
            grid_spec=grid_spec,
            compiler_params=pltpu.CompilerParams(
                # The time-chunk axis is a true recurrence -> sequential.
                dimension_semantics=("arbitrary",),
                # v5e's default scoped VMEM is only 16 MiB; raise it.  Kept at
                # 64 MiB so the same value is also legal on v7x (64 MiB VMEM);
                # on v5e/v6e this could go to ~96-100 MiB for larger chunks.
                vmem_limit_bytes=64 * 1024 * 1024,
            ),
        )

    try:
        out_padded = build(True)(gi, w_hh_t_p, b_hn_full)
    except Exception:
        # Fallback for Pallas versions without pipeline_mode on pallas_call
        # BlockSpecs (double-buffers the resident weights instead).
        out_padded = build(False)(gi, w_hh_t_p, b_hn_full)

    return out_padded[:T]


# ----------------------------------------------------------------------------
# Full Encoder forward (embedding + dropout + hoisted input projection + kernel).
# ----------------------------------------------------------------------------
def encoder_forward(src, params, cell_type, time_chunk=64):
    """src: (T, B) int32 token ids.  Returns (output (T,B,H), hidden (1,B,H))."""
    emb = jnp.take(params["embedding"], src, axis=0).astype(jnp.float32)   # (T, B, E)
    # TODO(synk): nn.Dropout is identity in eval/inference mode; training-mode
    # stochastic dropout is not applied here.
    T, B, E = emb.shape
    H = params["w_hh_t"].shape[0]
    G = 3 if cell_type == "GRU" else 1
    Hp = ((H + 127) // 128) * 128            # pad hidden dim to the 128-lane tile

    w_ih_t = params["w_ih_t"]                # (E, G*H)
    w_hh_t = params["w_hh_t"]                # (H, G*H)
    b_ih, b_hh = params["b_ih"], params["b_hh"]

    if cell_type == "GRU":
        # Fold b_ih fully and the r/z part of b_hh into the precomputed input
        # projection; only b_hn must remain inside the recurrence
        # (PyTorch GRU: n = tanh(W_in x + b_in + r * (W_hn h + b_hn))).
        b_fold = b_ih + jnp.concatenate([b_hh[:2 * H], jnp.zeros((H,), jnp.float32)])
        b_hn = b_hh[2 * H:]
    else:
        b_fold = b_ih + b_hh
        b_hn = jnp.zeros((H,), jnp.float32)

    # Hoisted input projection: one (T*B, E) x (E, G*H) matmul off the serial
    # path, bf16 x bf16 with f32 accumulation on the MXU.
    gi = jnp.dot(emb.reshape(T * B, E).astype(jnp.bfloat16),
                 w_ih_t.astype(jnp.bfloat16),
                 preferred_element_type=jnp.float32) + b_fold              # (T*B, G*H)

    # Gate-wise pad H -> Hp so in-kernel gate slices / stores are lane-aligned.
    gi = gi.reshape(T, B, G, H)
    gi = jnp.pad(gi, ((0, 0), (0, 0), (0, 0), (0, Hp - H)))
    gi = gi.reshape(T, B, G * Hp).astype(jnp.bfloat16)       # bf16: halves gi traffic

    # Pad W_hh^T gate-wise with zeros (padded h lanes stay exactly 0 through the
    # recurrence, so the padding never leaks into the real lanes).
    w_hh_p = jnp.pad(w_hh_t.reshape(H, G, H),
                     ((0, Hp - H), (0, 0), (0, Hp - H))).reshape(Hp, G * Hp)
    w_hh_p = w_hh_p.astype(jnp.bfloat16)

    # Pre-broadcast b_hn over batch -> no per-step broadcast inside the kernel.
    b_hn_full = jnp.broadcast_to(jnp.pad(b_hn, (0, Hp - H)), (B, Hp)).astype(jnp.float32)

    out_padded = run_recurrent_encoder(gi, w_hh_p, b_hn_full, cell_type, Hp, time_chunk)
    output = out_padded[:, :, :H]            # strip the lane padding
    hidden = output[T - 1][None]             # (1, B, H) == (num_layers, B, H)
    return output, hidden


# ----------------------------------------------------------------------------
# Pure-JAX reference (lax.scan, f32 throughout) for correctness checking.
# ----------------------------------------------------------------------------
def encoder_reference(src, params, cell_type):
    embedded = jnp.take(params["embedding"], src, axis=0).astype(jnp.float32)
    H = params["w_hh_t"].shape[0]
    w_ih_t, w_hh_t = params["w_ih_t"], params["w_hh_t"]
    b_ih, b_hh = params["b_ih"], params["b_hh"]

    def step(h, x):
        gi = x @ w_ih_t + b_ih
        gh = h @ w_hh_t + b_hh
        if cell_type == "GRU":
            r = jax.nn.sigmoid(gi[:, :H] + gh[:, :H])
            z = jax.nn.sigmoid(gi[:, H:2 * H] + gh[:, H:2 * H])
            n = jnp.tanh(gi[:, 2 * H:] + r * gh[:, 2 * H:])
            h_new = (1.0 - z) * n + z * h
        else:
            h_new = jnp.tanh(gi + gh)
        return h_new, h_new

    h0 = jnp.zeros((embedded.shape[1], H), jnp.float32)
    hT, outs = jax.lax.scan(step, h0, embedded)
    return outs, hT[None]


# ----------------------------------------------------------------------------
# Deterministic parameter construction (PyTorch-style uniform init).
# ----------------------------------------------------------------------------
def make_params(key, input_dim, embedding_size, hidden_dim, cell_type):
    gates = 3 if cell_type == "GRU" else 1
    k_emb, k_wih, k_whh, k_bih, k_bhh = jax.random.split(key, 5)
    bound = 1.0 / jnp.sqrt(hidden_dim)
    return {
        "embedding": jax.random.normal(k_emb, (input_dim, embedding_size), jnp.float32),
        # stored pre-transposed: (E, G*H) and (H, G*H)
        "w_ih_t": jax.random.uniform(k_wih, (embedding_size, gates * hidden_dim),
                                     jnp.float32, -bound, bound),
        "w_hh_t": jax.random.uniform(k_whh, (hidden_dim, gates * hidden_dim),
                                     jnp.float32, -bound, bound),
        "b_ih": jax.random.uniform(k_bih, (gates * hidden_dim,), jnp.float32, -bound, bound),
        "b_hh": jax.random.uniform(k_bhh, (gates * hidden_dim,), jnp.float32, -bound, bound),
    }


if __name__ == "__main__":
    # Small shapes consistent with the module: vocab=16, seq=8, batch=4,
    # embedding=32, hidden=32, dp=0.1 (identity in eval).
    INPUT_DIM, EMB, HID = 16, 32, 32
    T, B = 8, 4

    key = jax.random.PRNGKey(0)
    k_params, k_src = jax.random.split(key)
    src = jax.random.randint(k_src, (T, B), 0, INPUT_DIM, dtype=jnp.int32)

    for cell in ("GRU", "RNN"):
        params = make_params(k_params, INPUT_DIM, EMB, HID, cell)

        output, hidden = encoder_forward(src, params, cell)
        output = jax.block_until_ready(output)
        hidden = jax.block_until_ready(hidden)

        ref_out, ref_hid = encoder_reference(src, params, cell)
        assert output.shape == (T, B, HID) and hidden.shape == (1, B, HID)
        # Tolerance is loosened vs the all-f32 reference because both the
        # hoisted input projection and the per-step h @ W_hh run bf16 on the
        # MXU (f32 accumulate) and gi is stored in bf16.
        assert jnp.allclose(output, ref_out, atol=3e-2, rtol=1e-2), (
            cell, float(jnp.max(jnp.abs(output - ref_out))))
        assert jnp.allclose(hidden, ref_hid, atol=3e-2, rtol=1e-2), (
            cell, float(jnp.max(jnp.abs(hidden - ref_hid))))

    print("KERNEL_OK")
</pallas_src>

<mosaic_0001>
module attributes {stable_mosaic.version = 11 : i64} {
  func.func @_rnn_chunk_kernel(%arg0: i32, %arg1: memref<8x4x384xbf16, #tpu.memory_space<vmem>>, %arg2: memref<128x384xbf16, #tpu.memory_space<vmem>>, %arg3: memref<4x128xf32, #tpu.memory_space<vmem>>, %arg4: memref<8x4x128xf32, #tpu.memory_space<vmem>>, %arg5: memref<4x128xf32, #tpu.memory_space<vmem>>) attributes {dimension_semantics = [#tpu.dimension_semantics<arbitrary>], iteration_bounds = array<i64: 1>, scalar_prefetch = 0 : i64, scratch_operands = 1 : i64, tpu.core_type = #tpu.core_type<tc>, window_params = [{transform_indices = @transform_0, window_bounds = array<i64: 8, 4, 384>}, {pipeline_mode = #tpu.pipeline_mode<synchronous>, transform_indices = @transform_1, window_bounds = array<i64: 128, 384>}, {pipeline_mode = #tpu.pipeline_mode<synchronous>, transform_indices = @transform_2, window_bounds = array<i64: 4, 128>}, {transform_indices = @transform_3, window_bounds = array<i64: 8, 4, 128>}]} {
    %c0_i32 = arith.constant 0 : i32
    %0 = arith.cmpi eq, %arg0, %c0_i32 : i32
    %1 = arith.extui %0 : i1 to i32
    %c0_i32_0 = arith.constant 0 : i32
    %2 = arith.cmpi ne, %1, %c0_i32_0 : i32
    scf.if %2 {
      %cst_86 = arith.constant 0.000000e+00 : f32
      %310 = vector.broadcast %cst_86 : f32 to vector<4x128xf32>
      %c0_87 = arith.constant 0 : index
      %c0_88 = arith.constant 0 : index
      %311 = vector.load %arg5[%c0_87, %c0_88] : memref<4x128xf32, #tpu.memory_space<vmem>>, vector<4x128xf32>
      tpu.vector_store %arg5[%c0_87, %c0_88], %310 {strides = array<i32>} : memref<4x128xf32, #tpu.memory_space<vmem>>, vector<4x128xf32>,
    } else {
    }
    %c0 = arith.constant 0 : index
    %c0_1 = arith.constant 0 : index
    %3 = vector.load %arg3[%c0, %c0_1] : memref<4x128xf32, #tpu.memory_space<vmem>>, vector<4x128xf32>
    %c0_2 = arith.constant 0 : index
    %c0_3 = arith.constant 0 : index
    %4 = vector.load %arg5[%c0_2, %c0_3] : memref<4x128xf32, #tpu.memory_space<vmem>>, vector<4x128xf32>
    %c0_i32_4 = arith.constant 0 : i32
    %5 = arith.index_cast %c0_i32_4 : i32 to index
    %c0_5 = arith.constant 0 : index
    %c0_6 = arith.constant 0 : index
    %6 = vector.load %arg1[%5, %c0_5, %c0_6] : memref<8x4x384xbf16, #tpu.memory_space<vmem>>, vector<1x4x384xbf16>
    %7 = vector.shape_cast %6 : vector<1x4x384xbf16> to vector<4x384xbf16>
    %8 = arith.extf %7 : vector<4x384xbf16> to vector<4x384xf32>
    %9 = arith.truncf %4 : vector<4x128xf32> to vector<4x128xbf16>
    %c0_7 = arith.constant 0 : index
    %c0_8 = arith.constant 0 : index
    %10 = vector.load %arg2[%c0_7, %c0_8] : memref<128x384xbf16, #tpu.memory_space<vmem>>, vector<128x384xbf16>
    %cst = arith.constant dense<0.000000e+00> : vector<4x384xf32>
    %11 = tpu.matmul %9, %10, %cst {dimension_numbers = #tpu.dot_dimension_numbers<[1], [0], [0], [1], [0, 0, 1, 1], [], []>} : vector<4x128xbf16>, vector<128x384xbf16>, vector<4x384xf32> -> vector<4x384xf32>
    %12 = vector.extract_strided_slice %8 {offsets = [0, 0], sizes = [4, 128], strides = [1, 1]} : vector<4x384xf32> to vector<4x128xf32>
    %13 = vector.extract_strided_slice %11 {offsets = [0, 0], sizes = [4, 128], strides = [1, 1]} : vector<4x384xf32> to vector<4x128xf32>
    %14 = arith.addf %12, %13 : vector<4x128xf32>
    %15 = arith.negf %14 : vector<4x128xf32>
    %16 = math.exp %15 : vector<4x128xf32>
    %cst_9 = arith.constant 1.000000e+00 : f32
    %17 = vector.broadcast %cst_9 : f32 to vector<4x128xf32>
    %18 = arith.addf %17, %16 : vector<4x128xf32>
    %19 = arith.divf %17, %18 : vector<4x128xf32>
    %20 = vector.extract_strided_slice %8 {offsets = [0, 128], sizes = [4, 128], strides = [1, 1]} : vector<4x384xf32> to vector<4x128xf32>
    %21 = vector.extract_strided_slice %11 {offsets = [0, 128], sizes = [4, 128], strides = [1, 1]} : vector<4x384xf32> to vector<4x128xf32>
    %22 = arith.addf %20, %21 : vector<4x128xf32>
    %23 = arith.negf %22 : vector<4x128xf32>
    %24 = math.exp %23 : vector<4x128xf32>
    %cst_10 = arith.constant 1.000000e+00 : f32
    %25 = vector.broadcast %cst_10 : f32 to vector<4x128xf32>
    %26 = arith.addf %25, %24 : vector<4x128xf32>
    %27 = arith.divf %25, %26 : vector<4x128xf32>
    %28 = vector.extract_strided_slice %8 {offsets = [0, 256], sizes = [4, 128], strides = [1, 1]} : vector<4x384xf32> to vector<4x128xf32>
    %29 = vector.extract_strided_slice %11 {offsets = [0, 256], sizes = [4, 128], strides = [1, 1]} : vector<4x384xf32> to vector<4x128xf32>
    %30 = arith.addf %29, %3 : vector<4x128xf32>
    %31 = arith.mulf %19, %30 : vector<4x128xf32>
    %32 = arith.addf %28, %31 : vector<4x128xf32>
    %33 = math.tanh %32 : vector<4x128xf32>
    %cst_11 = arith.constant 1.000000e+00 : f32
    %34 = vector.broadcast %cst_11 : f32 to vector<4x128xf32>
    %35 = arith.subf %34, %27 : vector<4x128xf32>
    %36 = arith.mulf %35, %33 : vector<4x128xf32>
    %37 = arith.mulf %27, %4 : vector<4x128xf32>
    %38 = arith.addf %36, %37 : vector<4x128xf32>
    %39 = arith.index_cast %c0_i32_4 : i32 to index
    %c0_12 = arith.constant 0 : index
    %c0_13 = arith.constant 0 : index
    %40 = vector.load %arg4[%39, %c0_12, %c0_13] : memref<8x4x128xf32, #tpu.memory_space<vmem>>, vector<1x4x128xf32>
    %41 = vector.shape_cast %40 : vector<1x4x128xf32> to vector<4x128xf32>
    %42 = vector.shape_cast %38 : vector<4x128xf32> to vector<1x4x128xf32>
    tpu.vector_store %arg4[%39, %c0_12, %c0_13], %42 {strides = array<i32>} : memref<8x4x128xf32, #tpu.memory_space<vmem>>, vector<1x4x128xf32>,
    %c1_i32 = arith.constant 1 : i32
    %43 = arith.index_cast %c1_i32 : i32 to index
    %c0_14 = arith.constant 0 : index
    %c0_15 = arith.constant 0 : index
    %44 = vector.load %arg1[%43, %c0_14, %c0_15] : memref<8x4x384xbf16, #tpu.memory_space<vmem>>, vector<1x4x384xbf16>
    %45 = vector.shape_cast %44 : vector<1x4x384xbf16> to vector<4x384xbf16>
    %46 = arith.extf %45 : vector<4x384xbf16> to vector<4x384xf32>
    %47 = arith.truncf %38 : vector<4x128xf32> to vector<4x128xbf16>
    %c0_16 = arith.constant 0 : index
    %c0_17 = arith.constant 0 : index
    %48 = vector.load %arg2[%c0_16, %c0_17] : memref<128x384xbf16, #tpu.memory_space<vmem>>, vector<128x384xbf16>
    %cst_18 = arith.constant dense<0.000000e+00> : vector<4x384xf32>
    %49 = tpu.matmul %47, %48, %cst_18 {dimension_numbers = #tpu.dot_dimension_numbers<[1], [0], [0], [1], [0, 0, 1, 1], [], []>} : vector<4x128xbf16>, vector<128x384xbf16>, vector<4x384xf32> -> vector<4x384xf32>
    %50 = vector.extract_strided_slice %46 {offsets = [0, 0], sizes = [4, 128], strides = [1, 1]} : vector<4x384xf32> to vector<4x128xf32>
    %51 = vector.extract_strided_slice %49 {offsets = [0, 0], sizes = [4, 128], strides = [1, 1]} : vector<4x384xf32> to vector<4x128xf32>
    %52 = arith.addf %50, %51 : vector<4x128xf32>
    %53 = arith.negf %52 : vector<4x128xf32>
    %54 = math.exp %53 : vector<4x128xf32>
    %cst_19 = arith.constant 1.000000e+00 : f32
    %55 = vector.broadcast %cst_19 : f32 to vector<4x128xf32>
    %56 = arith.addf %55, %54 : vector<4x128xf32>
    %57 = arith.divf %55, %56 : vector<4x128xf32>
    %58 = vector.extract_strided_slice %46 {offsets = [0, 128], sizes = [4, 128], strides = [1, 1]} : vector<4x384xf32> to vector<4x128xf32>
    %59 = vector.extract_strided_slice %49 {offsets = [0, 128], sizes = [4, 128], strides = [1, 1]} : vector<4x384xf32> to vector<4x128xf32>
    %60 = arith.addf %58, %59 : vector<4x128xf32>
    %61 = arith.negf %60 : vector<4x128xf32>
    %62 = math.exp %61 : vector<4x128xf32>
    %cst_20 = arith.constant 1.000000e+00 : f32
    %63 = vector.broadcast %cst_20 : f32 to vector<4x128xf32>
    %64 = arith.addf %63, %62 : vector<4x128xf32>
    %65 = arith.divf %63, %64 : vector<4x128xf32>
    %66 = vector.extract_strided_slice %46 {offsets = [0, 256], sizes = [4, 128], strides = [1, 1]} : vector<4x384xf32> to vector<4x128xf32>
    %67 = vector.extract_strided_slice %49 {offsets = [0, 256], sizes = [4, 128], strides = [1, 1]} : vector<4x384xf32> to vector<4x128xf32>
    %68 = arith.addf %67, %3 : vector<4x128xf32>
    %69 = arith.mulf %57, %68 : vector<4x128xf32>
    %70 = arith.addf %66, %69 : vector<4x128xf32>
    %71 = math.tanh %70 : vector<4x128xf32>
    %cst_21 = arith.constant 1.000000e+00 : f32
    %72 = vector.broadcast %cst_21 : f32 to vector<4x128xf32>
    %73 = arith.subf %72, %65 : vector<4x128xf32>
    %74 = arith.mulf %73, %71 : vector<4x128xf32>
    %75 = arith.mulf %65, %38 : vector<4x128xf32>
    %76 = arith.addf %74, %75 : vector<4x128xf32>
    %77 = arith.index_cast %c1_i32 : i32 to index
    %c0_22 = arith.constant 0 : index
    %c0_23 = arith.constant 0 : index
    %78 = vector.load %arg4[%77, %c0_22, %c0_23] : memref<8x4x128xf32, #tpu.memory_space<vmem>>, vector<1x4x128xf32>
    %79 = vector.shape_cast %78 : vector<1x4x128xf32> to vector<4x128xf32>
    %80 = vector.shape_cast %76 : vector<4x128xf32> to vector<1x4x128xf32>
    tpu.vector_store %arg4[%77, %c0_22, %c0_23], %80 {strides = array<i32>} : memref<8x4x128xf32, #tpu.memory_space<vmem>>, vector<1x4x128xf32>,
    %c2_i32 = arith.constant 2 : i32
    %81 = arith.index_cast %c2_i32 : i32 to index
    %c0_24 = arith.constant 0 : index
    %c0_25 = arith.constant 0 : index
    %82 = vector.load %arg1[%81, %c0_24, %c0_25] : memref<8x4x384xbf16, #tpu.memory_space<vmem>>, vector<1x4x384xbf16>
    %83 = vector.shape_cast %82 : vector<1x4x384xbf16> to vector<4x384xbf16>
    %84 = arith.extf %83 : vector<4x384xbf16> to vector<4x384xf32>
    %85 = arith.truncf %76 : vector<4x128xf32> to vector<4x128xbf16>
    %c0_26 = arith.constant 0 : index
    %c0_27 = arith.constant 0 : index
    %86 = vector.load %arg2[%c0_26, %c0_27] : memref<128x384xbf16, #tpu.memory_space<vmem>>, vector<128x384xbf16>
    %cst_28 = arith.constant dense<0.000000e+00> : vector<4x384xf32>
    %87 = tpu.matmul %85, %86, %cst_28 {dimension_numbers = #tpu.dot_dimension_numbers<[1], [0], [0], [1], [0, 0, 1, 1], [], []>} : vector<4x128xbf16>, vector<128x384xbf16>, vector<4x384xf32> -> vector<4x384xf32>
    %88 = vector.extract_strided_slice %84 {offsets = [0, 0], sizes = [4, 128], strides = [1, 1]} : vector<4x384xf32> to vector<4x128xf32>
    %89 = vector.extract_strided_slice %87 {offsets = [0, 0], sizes = [4, 128], strides = [1, 1]} : vector<4x384xf32> to vector<4x128xf32>
    %90 = arith.addf %88, %89 : vector<4x128xf32>
    %91 = arith.negf %90 : vector<4x128xf32>
    %92 = math.exp %91 : vector<4x128xf32>
    %cst_29 = arith.constant 1.000000e+00 : f32
    %93 = vector.broadcast %cst_29 : f32 to vector<4x128xf32>
    %94 = arith.addf %93, %92 : vector<4x128xf32>
    %95 = arith.divf %93, %94 : vector<4x128xf32>
    %96 = vector.extract_strided_slice %84 {offsets = [0, 128], sizes = [4, 128], strides = [1, 1]} : vector<4x384xf32> to vector<4x128xf32>
    %97 = vector.extract_strided_slice %87 {offsets = [0, 128], sizes = [4, 128], strides = [1, 1]} : vector<4x384xf32> to vector<4x128xf32>
    %98 = arith.addf %96, %97 : vector<4x128xf32>
    %99 = arith.negf %98 : vector<4x128xf32>
    %100 = math.exp %99 : vector<4x128xf32>
    %cst_30 = arith.constant 1.000000e+00 : f32
    %101 = vector.broadcast %cst_30 : f32 to vector<4x128xf32>
    %102 = arith.addf %101, %100 : vector<4x128xf32>
    %103 = arith.divf %101, %102 : vector<4x128xf32>
    %104 = vector.extract_strided_slice %84 {offsets = [0, 256], sizes = [4, 128], strides = [1, 1]} : vector<4x384xf32> to vector<4x128xf32>
    %105 = vector.extract_strided_slice %87 {offsets = [0, 256], sizes = [4, 128], strides = [1, 1]} : vector<4x384xf32> to vector<4x128xf32>
    %106 = arith.addf %105, %3 : vector<4x128xf32>
    %107 = arith.mulf %95, %106 : vector<4x128xf32>
    %108 = arith.addf %104, %107 : vector<4x128xf32>
    %109 = math.tanh %108 : vector<4x128xf32>
    %cst_31 = arith.constant 1.000000e+00 : f32
    %110 = vector.broadcast %cst_31 : f32 to vector<4x128xf32>
    %111 = arith.subf %110, %103 : vector<4x128xf32>
    %112 = arith.mulf %111, %109 : vector<4x128xf32>
    %113 = arith.mulf %103, %76 : vector<4x128xf32>
    %114 = arith.addf %112, %113 : vector<4x128xf32>
    %115 = arith.index_cast %c2_i32 : i32 to index
    %c0_32 = arith.constant 0 : index
    %c0_33 = arith.constant 0 : index
    %116 = vector.load %arg4[%115, %c0_32, %c0_33] : memref<8x4x128xf32, #tpu.memory_space<vmem>>, vector<1x4x128xf32>
    %117 = vector.shape_cast %116 : vector<1x4x128xf32> to vector<4x128xf32>
    %118 = vector.shape_cast %114 : vector<4x128xf32> to vector<1x4x128xf32>
    tpu.vector_store %arg4[%115, %c0_32, %c0_33], %118 {strides = array<i32>} : memref<8x4x128xf32, #tpu.memory_space<vmem>>, vector<1x4x128xf32>,
    %c3_i32 = arith.constant 3 : i32
    %119 = arith.index_cast %c3_i32 : i32 to index
    %c0_34 = arith.constant 0 : index
    %c0_35 = arith.constant 0 : index
    %120 = vector.load %arg1[%119, %c0_34, %c0_35] : memref<8x4x384xbf16, #tpu.memory_space<vmem>>, vector<1x4x384xbf16>
    %121 = vector.shape_cast %120 : vector<1x4x384xbf16> to vector<4x384xbf16>
    %122 = arith.extf %121 : vector<4x384xbf16> to vector<4x384xf32>
    %123 = arith.truncf %114 : vector<4x128xf32> to vector<4x128xbf16>
    %c0_36 = arith.constant 0 : index
    %c0_37 = arith.constant 0 : index
    %124 = vector.load %arg2[%c0_36, %c0_37] : memref<128x384xbf16, #tpu.memory_space<vmem>>, vector<128x384xbf16>
    %cst_38 = arith.constant dense<0.000000e+00> : vector<4x384xf32>
    %125 = tpu.matmul %123, %124, %cst_38 {dimension_numbers = #tpu.dot_dimension_numbers<[1], [0], [0], [1], [0, 0, 1, 1], [], []>} : vector<4x128xbf16>, vector<128x384xbf16>, vector<4x384xf32> -> vector<4x384xf32>
    %126 = vector.extract_strided_slice %122 {offsets = [0, 0], sizes = [4, 128], strides = [1, 1]} : vector<4x384xf32> to vector<4x128xf32>
    %127 = vector.extract_strided_slice %125 {offsets = [0, 0], sizes = [4, 128], strides = [1, 1]} : vector<4x384xf32> to vector<4x128xf32>
    %128 = arith.addf %126, %127 : vector<4x128xf32>
    %129 = arith.negf %128 : vector<4x128xf32>
    %130 = math.exp %129 : vector<4x128xf32>
    %cst_39 = arith.constant 1.000000e+00 : f32
    %131 = vector.broadcast %cst_39 : f32 to vector<4x128xf32>
    %132 = arith.addf %131, %130 : vector<4x128xf32>
    %133 = arith.divf %131, %132 : vector<4x128xf32>
    %134 = vector.extract_strided_slice %122 {offsets = [0, 128], sizes = [4, 128], strides = [1, 1]} : vector<4x384xf32> to vector<4x128xf32>
    %135 = vector.extract_strided_slice %125 {offsets = [0, 128], sizes = [4, 128], strides = [1, 1]} : vector<4x384xf32> to vector<4x128xf32>
    %136 = arith.addf %134, %135 : vector<4x128xf32>
    %137 = arith.negf %136 : vector<4x128xf32>
    %138 = math.exp %137 : vector<4x128xf32>
    %cst_40 = arith.constant 1.000000e+00 : f32
    %139 = vector.broadcast %cst_40 : f32 to vector<4x128xf32>
    %140 = arith.addf %139, %138 : vector<4x128xf32>
    %141 = arith.divf %139, %140 : vector<4x128xf32>
    %142 = vector.extract_strided_slice %122 {offsets = [0, 256], sizes = [4, 128], strides = [1, 1]} : vector<4x384xf32> to vector<4x128xf32>
    %143 = vector.extract_strided_slice %125 {offsets = [0, 256], sizes = [4, 128], strides = [1, 1]} : vector<4x384xf32> to vector<4x128xf32>
    %144 = arith.addf %143, %3 : vector<4x128xf32>
    %145 = arith.mulf %133, %144 : vector<4x128xf32>
    %146 = arith.addf %142, %145 : vector<4x128xf32>
    %147 = math.tanh %146 : vector<4x128xf32>
    %cst_41 = arith.constant 1.000000e+00 : f32
    %148 = vector.broadcast %cst_41 : f32 to vector<4x128xf32>
    %149 = arith.subf %148, %141 : vector<4x128xf32>
    %150 = arith.mulf %149, %147 : vector<4x128xf32>
    %151 = arith.mulf %141, %114 : vector<4x128xf32>
    %152 = arith.addf %150, %151 : vector<4x128xf32>
    %153 = arith.index_cast %c3_i32 : i32 to index
    %c0_42 = arith.constant 0 : index
    %c0_43 = arith.constant 0 : index
    %154 = vector.load %arg4[%153, %c0_42, %c0_43] : memref<8x4x128xf32, #tpu.memory_space<vmem>>, vector<1x4x128xf32>
    %155 = vector.shape_cast %154 : vector<1x4x128xf32> to vector<4x128xf32>
    %156 = vector.shape_cast %152 : vector<4x128xf32> to vector<1x4x128xf32>
    tpu.vector_store %arg4[%153, %c0_42, %c0_43], %156 {strides = array<i32>} : memref<8x4x128xf32, #tpu.memory_space<vmem>>, vector<1x4x128xf32>,
    %c4_i32 = arith.constant 4 : i32
    %157 = arith.index_cast %c4_i32 : i32 to index
    %c0_44 = arith.constant 0 : index
    %c0_45 = arith.constant 0 : index
    %158 = vector.load %arg1[%157, %c0_44, %c0_45] : memref<8x4x384xbf16, #tpu.memory_space<vmem>>, vector<1x4x384xbf16>
    %159 = vector.shape_cast %158 : vector<1x4x384xbf16> to vector<4x384xbf16>
    %160 = arith.extf %159 : vector<4x384xbf16> to vector<4x384xf32>
    %161 = arith.truncf %152 : vector<4x128xf32> to vector<4x128xbf16>
    %c0_46 = arith.constant 0 : index
    %c0_47 = arith.constant 0 : index
    %162 = vector.load %arg2[%c0_46, %c0_47] : memref<128x384xbf16, #tpu.memory_space<vmem>>, vector<128x384xbf16>
    %cst_48 = arith.constant dense<0.000000e+00> : vector<4x384xf32>
    %163 = tpu.matmul %161, %162, %cst_48 {dimension_numbers = #tpu.dot_dimension_numbers<[1], [0], [0], [1], [0, 0, 1, 1], [], []>} : vector<4x128xbf16>, vector<128x384xbf16>, vector<4x384xf32> -> vector<4x384xf32>
    %164 = vector.extract_strided_slice %160 {offsets = [0, 0], sizes = [4, 128], strides = [1, 1]} : vector<4x384xf32> to vector<4x128xf32>
    %165 = vector.extract_strided_slice %163 {offsets = [0, 0], sizes = [4, 128], strides = [1, 1]} : vector<4x384xf32> to vector<4x128xf32>
    %166 = arith.addf %164, %165 : vector<4x128xf32>
    %167 = arith.negf %166 : vector<4x128xf32>
    %168 = math.exp %167 : vector<4x128xf32>
    %cst_49 = arith.constant 1.000000e+00 : f32
    %169 = vector.broadcast %cst_49 : f32 to vector<4x128xf32>
    %170 = arith.addf %169, %168 : vector<4x128xf32>
    %171 = arith.divf %169, %170 : vector<4x128xf32>
    %172 = vector.extract_strided_slice %160 {offsets = [0, 128], sizes = [4, 128], strides = [1, 1]} : vector<4x384xf32> to vector<4x128xf32>
    %173 = vector.extract_strided_slice %163 {offsets = [0, 128], sizes = [4, 128], strides = [1, 1]} : vector<4x384xf32> to vector<4x128xf32>
    %174 = arith.addf %172, %173 : vector<4x128xf32>
    %175 = arith.negf %174 : vector<4x128xf32>
    %176 = math.exp %175 : vector<4x128xf32>
    %cst_50 = arith.constant 1.000000e+00 : f32
    %177 = vector.broadcast %cst_50 : f32 to vector<4x128xf32>
    %178 = arith.addf %177, %176 : vector<4x128xf32>
    %179 = arith.divf %177, %178 : vector<4x128xf32>
    %180 = vector.extract_strided_slice %160 {offsets = [0, 256], sizes = [4, 128], strides = [1, 1]} : vector<4x384xf32> to vector<4x128xf32>
    %181 = vector.extract_strided_slice %163 {offsets = [0, 256], sizes = [4, 128], strides = [1, 1]} : vector<4x384xf32> to vector<4x128xf32>
    %182 = arith.addf %181, %3 : vector<4x128xf32>
    %183 = arith.mulf %171, %182 : vector<4x128xf32>
    %184 = arith.addf %180, %183 : vector<4x128xf32>
    %185 = math.tanh %184 : vector<4x128xf32>
    %cst_51 = arith.constant 1.000000e+00 : f32
    %186 = vector.broadcast %cst_51 : f32 to vector<4x128xf32>
    %187 = arith.subf %186, %179 : vector<4x128xf32>
    %188 = arith.mulf %187, %185 : vector<4x128xf32>
    %189 = arith.mulf %179, %152 : vector<4x128xf32>
    %190 = arith.addf %188, %189 : vector<4x128xf32>
    %191 = arith.index_cast %c4_i32 : i32 to index
    %c0_52 = arith.constant 0 : index
    %c0_53 = arith.constant 0 : index
    %192 = vector.load %arg4[%191, %c0_52, %c0_53] : memref<8x4x128xf32, #tpu.memory_space<vmem>>, vector<1x4x128xf32>
    %193 = vector.shape_cast %192 : vector<1x4x128xf32> to vector<4x128xf32>
    %194 = vector.shape_cast %190 : vector<4x128xf32> to vector<1x4x128xf32>
    tpu.vector_store %arg4[%191, %c0_52, %c0_53], %194 {strides = array<i32>} : memref<8x4x128xf32, #tpu.memory_space<vmem>>, vector<1x4x128xf32>,
    %c5_i32 = arith.constant 5 : i32
    %195 = arith.index_cast %c5_i32 : i32 to index
    %c0_54 = arith.constant 0 : index
    %c0_55 = arith.constant 0 : index
    %196 = vector.load %arg1[%195, %c0_54, %c0_55] : memref<8x4x384xbf16, #tpu.memory_space<vmem>>, vector<1x4x384xbf16>
    %197 = vector.shape_cast %196 : vector<1x4x384xbf16> to vector<4x384xbf16>
    %198 = arith.extf %197 : vector<4x384xbf16> to vector<4x384xf32>
    %199 = arith.truncf %190 : vector<4x128xf32> to vector<4x128xbf16>
    %c0_56 = arith.constant 0 : index
    %c0_57 = arith.constant 0 : index
    %200 = vector.load %arg2[%c0_56, %c0_57] : memref<128x384xbf16, #tpu.memory_space<vmem>>, vector<128x384xbf16>
    %cst_58 = arith.constant dense<0.000000e+00> : vector<4x384xf32>
    %201 = tpu.matmul %199, %200, %cst_58 {dimension_numbers = #tpu.dot_dimension_numbers<[1], [0], [0], [1], [0, 0, 1, 1], [], []>} : vector<4x128xbf16>, vector<128x384xbf16>, vector<4x384xf32> -> vector<4x384xf32>
    %202 = vector.extract_strided_slice %198 {offsets = [0, 0], sizes = [4, 128], strides = [1, 1]} : vector<4x384xf32> to vector<4x128xf32>
    %203 = vector.extract_strided_slice %201 {offsets = [0, 0], sizes = [4, 128], strides = [1, 1]} : vector<4x384xf32> to vector<4x128xf32>
    %204 = arith.addf %202, %203 : vector<4x128xf32>
    %205 = arith.negf %204 : vector<4x128xf32>
    %206 = math.exp %205 : vector<4x128xf32>
    %cst_59 = arith.constant 1.000000e+00 : f32
    %207 = vector.broadcast %cst_59 : f32 to vector<4x128xf32>
    %208 = arith.addf %207, %206 : vector<4x128xf32>
    %209 = arith.divf %207, %208 : vector<4x128xf32>
    %210 = vector.extract_strided_slice %198 {offsets = [0, 128], sizes = [4, 128], strides = [1, 1]} : vector<4x384xf32> to vector<4x128xf32>
    %211 = vector.extract_strided_slice %201 {offsets = [0, 128], sizes = [4, 128], strides = [1, 1]} : vector<4x384xf32> to vector<4x128xf32>
    %212 = arith.addf %210, %211 : vector<4x128xf32>
    %213 = arith.negf %212 : vector<4x128xf32>
    %214 = math.exp %213 : vector<4x128xf32>
    %cst_60 = arith.constant 1.000000e+00 : f32
    %215 = vector.broadcast %cst_60 : f32 to vector<4x128xf32>
    %216 = arith.addf %215, %214 : vector<4x128xf32>
    %217 = arith.divf %215, %216 : vector<4x128xf32>
    %218 = vector.extract_strided_slice %198 {offsets = [0, 256], sizes = [4, 128], strides = [1, 1]} : vector<4x384xf32> to vector<4x128xf32>
    %219 = vector.extract_strided_slice %201 {offsets = [0, 256], sizes = [4, 128], strides = [1, 1]} : vector<4x384xf32> to vector<4x128xf32>
    %220 = arith.addf %219, %3 : vector<4x128xf32>
    %221 = arith.mulf %209, %220 : vector<4x128xf32>
    %222 = arith.addf %218, %221 : vector<4x128xf32>
    %223 = math.tanh %222 : vector<4x128xf32>
    %cst_61 = arith.constant 1.000000e+00 : f32
    %224 = vector.broadcast %cst_61 : f32 to vector<4x128xf32>
    %225 = arith.subf %224, %217 : vector<4x128xf32>
    %226 = arith.mulf %225, %223 : vector<4x128xf32>
    %227 = arith.mulf %217, %190 : vector<4x128xf32>
    %228 = arith.addf %226, %227 : vector<4x128xf32>
    %229 = arith.index_cast %c5_i32 : i32 to index
    %c0_62 = arith.constant 0 : index
    %c0_63 = arith.constant 0 : index
    %230 = vector.load %arg4[%229, %c0_62, %c0_63] : memref<8x4x128xf32, #tpu.memory_space<vmem>>, vector<1x4x128xf32>
    %231 = vector.shape_cast %230 : vector<1x4x128xf32> to vector<4x128xf32>
    %232 = vector.shape_cast %228 : vector<4x128xf32> to vector<1x4x128xf32>
    tpu.vector_store %arg4[%229, %c0_62, %c0_63], %232 {strides = array<i32>} : memref<8x4x128xf32, #tpu.memory_space<vmem>>, vector<1x4x128xf32>,
    %c6_i32 = arith.constant 6 : i32
    %233 = arith.index_cast %c6_i32 : i32 to index
    %c0_64 = arith.constant 0 : index
    %c0_65 = arith.constant 0 : index
    %234 = vector.load %arg1[%233, %c0_64, %c0_65] : memref<8x4x384xbf16, #tpu.memory_space<vmem>>, vector<1x4x384xbf16>
    %235 = vector.shape_cast %234 : vector<1x4x384xbf16> to vector<4x384xbf16>
    %236 = arith.extf %235 : vector<4x384xbf16> to vector<4x384xf32>
    %237 = arith.truncf %228 : vector<4x128xf32> to vector<4x128xbf16>
    %c0_66 = arith.constant 0 : index
    %c0_67 = arith.constant 0 : index
    %238 = vector.load %arg2[%c0_66, %c0_67] : memref<128x384xbf16, #tpu.memory_space<vmem>>, vector<128x384xbf16>
    %cst_68 = arith.constant dense<0.000000e+00> : vector<4x384xf32>
    %239 = tpu.matmul %237, %238, %cst_68 {dimension_numbers = #tpu.dot_dimension_numbers<[1], [0], [0], [1], [0, 0, 1, 1], [], []>} : vector<4x128xbf16>, vector<128x384xbf16>, vector<4x384xf32> -> vector<4x384xf32>
    %240 = vector.extract_strided_slice %236 {offsets = [0, 0], sizes = [4, 128], strides = [1, 1]} : vector<4x384xf32> to vector<4x128xf32>
    %241 = vector.extract_strided_slice %239 {offsets = [0, 0], sizes = [4, 128], strides = [1, 1]} : vector<4x384xf32> to vector<4x128xf32>
    %242 = arith.addf %240, %241 : vector<4x128xf32>
    %243 = arith.negf %242 : vector<4x128xf32>
    %244 = math.exp %243 : vector<4x128xf32>
    %cst_69 = arith.constant 1.000000e+00 : f32
    %245 = vector.broadcast %cst_69 : f32 to vector<4x128xf32>
    %246 = arith.addf %245, %244 : vector<4x128xf32>
    %247 = arith.divf %245, %246 : vector<4x128xf32>
    %248 = vector.extract_strided_slice %236 {offsets = [0, 128], sizes = [4, 128], strides = [1, 1]} : vector<4x384xf32> to vector<4x128xf32>
    %249 = vector.extract_strided_slice %239 {offsets = [0, 128], sizes = [4, 128], strides = [1, 1]} : vector<4x384xf32> to vector<4x128xf32>
    %250 = arith.addf %248, %249 : vector<4x128xf32>
    %251 = arith.negf %250 : vector<4x128xf32>
    %252 = math.exp %251 : vector<4x128xf32>
    %cst_70 = arith.constant 1.000000e+00 : f32
    %253 = vector.broadcast %cst_70 : f32 to vector<4x128xf32>
    %254 = arith.addf %253, %252 : vector<4x128xf32>
    %255 = arith.divf %253, %254 : vector<4x128xf32>
    %256 = vector.extract_strided_slice %236 {offsets = [0, 256], sizes = [4, 128], strides = [1, 1]} : vector<4x384xf32> to vector<4x128xf32>
    %257 = vector.extract_strided_slice %239 {offsets = [0, 256], sizes = [4, 128], strides = [1, 1]} : vector<4x384xf32> to vector<4x128xf32>
    %258 = arith.addf %257, %3 : vector<4x128xf32>
    %259 = arith.mulf %247, %258 : vector<4x128xf32>
    %260 = arith.addf %256, %259 : vector<4x128xf32>
    %261 = math.tanh %260 : vector<4x128xf32>
    %cst_71 = arith.constant 1.000000e+00 : f32
    %262 = vector.broadcast %cst_71 : f32 to vector<4x128xf32>
    %263 = arith.subf %262, %255 : vector<4x128xf32>
    %264 = arith.mulf %263, %261 : vector<4x128xf32>
    %265 = arith.mulf %255, %228 : vector<4x128xf32>
    %266 = arith.addf %264, %265 : vector<4x128xf32>
    %267 = arith.index_cast %c6_i32 : i32 to index
    %c0_72 = arith.constant 0 : index
    %c0_73 = arith.constant 0 : index
    %268 = vector.load %arg4[%267, %c0_72, %c0_73] : memref<8x4x128xf32, #tpu.memory_space<vmem>>, vector<1x4x128xf32>
    %269 = vector.shape_cast %268 : vector<1x4x128xf32> to vector<4x128xf32>
    %270 = vector.shape_cast %266 : vector<4x128xf32> to vector<1x4x128xf32>
    tpu.vector_store %arg4[%267, %c0_72, %c0_73], %270 {strides = array<i32>} : memref<8x4x128xf32, #tpu.memory_space<vmem>>, vector<1x4x128xf32>,
    %c7_i32 = arith.constant 7 : i32
    %271 = arith.index_cast %c7_i32 : i32 to index
    %c0_74 = arith.constant 0 : index
    %c0_75 = arith.constant 0 : index
    %272 = vector.load %arg1[%271, %c0_74, %c0_75] : memref<8x4x384xbf16, #tpu.memory_space<vmem>>, vector<1x4x384xbf16>
    %273 = vector.shape_cast %272 : vector<1x4x384xbf16> to vector<4x384xbf16>
    %274 = arith.extf %273 : vector<4x384xbf16> to vector<4x384xf32>
    %275 = arith.truncf %266 : vector<4x128xf32> to vector<4x128xbf16>
    %c0_76 = arith.constant 0 : index
    %c0_77 = arith.constant 0 : index
    %276 = vector.load %arg2[%c0_76, %c0_77] : memref<128x384xbf16, #tpu.memory_space<vmem>>, vector<128x384xbf16>
    %cst_78 = arith.constant dense<0.000000e+00> : vector<4x384xf32>
    %277 = tpu.matmul %275, %276, %cst_78 {dimension_numbers = #tpu.dot_dimension_numbers<[1], [0], [0], [1], [0, 0, 1, 1], [], []>} : vector<4x128xbf16>, vector<128x384xbf16>, vector<4x384xf32> -> vector<4x384xf32>
    %278 = vector.extract_strided_slice %274 {offsets = [0, 0], sizes = [4, 128], strides = [1, 1]} : vector<4x384xf32> to vector<4x128xf32>
    %279 = vector.extract_strided_slice %277 {offsets = [0, 0], sizes = [4, 128], strides = [1, 1]} : vector<4x384xf32> to vector<4x128xf32>
    %280 = arith.addf %278, %279 : vector<4x128xf32>
    %281 = arith.negf %280 : vector<4x128xf32>
    %282 = math.exp %281 : vector<4x128xf32>
    %cst_79 = arith.constant 1.000000e+00 : f32
    %283 = vector.broadcast %cst_79 : f32 to vector<4x128xf32>
    %284 = arith.addf %283, %282 : vector<4x128xf32>
    %285 = arith.divf %283, %284 : vector<4x128xf32>
    %286 = vector.extract_strided_slice %274 {offsets = [0, 128], sizes = [4, 128], strides = [1, 1]} : vector<4x384xf32> to vector<4x128xf32>
    %287 = vector.extract_strided_slice %277 {offsets = [0, 128], sizes = [4, 128], strides = [1, 1]} : vector<4x384xf32> to vector<4x128xf32>
    %288 = arith.addf %286, %287 : vector<4x128xf32>
    %289 = arith.negf %288 : vector<4x128xf32>
    %290 = math.exp %289 : vector<4x128xf32>
    %cst_80 = arith.constant 1.000000e+00 : f32
    %291 = vector.broadcast %cst_80 : f32 to vector<4x128xf32>
    %292 = arith.addf %291, %290 : vector<4x128xf32>
    %293 = arith.divf %291, %292 : vector<4x128xf32>
    %294 = vector.extract_strided_slice %274 {offsets = [0, 256], sizes = [4, 128], strides = [1, 1]} : vector<4x384xf32> to vector<4x128xf32>
    %295 = vector.extract_strided_slice %277 {offsets = [0, 256], sizes = [4, 128], strides = [1, 1]} : vector<4x384xf32> to vector<4x128xf32>
    %296 = arith.addf %295, %3 : vector<4x128xf32>
    %297 = arith.mulf %285, %296 : vector<4x128xf32>
    %298 = arith.addf %294, %297 : vector<4x128xf32>
    %299 = math.tanh %298 : vector<4x128xf32>
    %cst_81 = arith.constant 1.000000e+00 : f32
    %300 = vector.broadcast %cst_81 : f32 to vector<4x128xf32>
    %301 = arith.subf %300, %293 : vector<4x128xf32>
    %302 = arith.mulf %301, %299 : vector<4x128xf32>
    %303 = arith.mulf %293, %266 : vector<4x128xf32>
    %304 = arith.addf %302, %303 : vector<4x128xf32>
    %305 = arith.index_cast %c7_i32 : i32 to index
    %c0_82 = arith.constant 0 : index
    %c0_83 = arith.constant 0 : index
    %306 = vector.load %arg4[%305, %c0_82, %c0_83] : memref<8x4x128xf32, #tpu.memory_space<vmem>>, vector<1x4x128xf32>
    %307 = vector.shape_cast %306 : vector<1x4x128xf32> to vector<4x128xf32>
    %308 = vector.shape_cast %304 : vector<4x128xf32> to vector<1x4x128xf32>
    tpu.vector_store %arg4[%305, %c0_82, %c0_83], %308 {strides = array<i32>} : memref<8x4x128xf32, #tpu.memory_space<vmem>>, vector<1x4x128xf32>,
    %c8_i32 = arith.constant 8 : i32
    %c0_84 = arith.constant 0 : index
    %c0_85 = arith.constant 0 : index
    %309 = vector.load %arg5[%c0_84, %c0_85] : memref<4x128xf32, #tpu.memory_space<vmem>>, vector<4x128xf32>
    tpu.vector_store %arg5[%c0_84, %c0_85], %304 {strides = array<i32>} : memref<4x128xf32, #tpu.memory_space<vmem>>, vector<4x128xf32>,
    return
  }
  func.func @transform_0(%arg0: i32) -> (i32, i32, i32) {
    %c0_i32 = arith.constant 0 : i32
    %c0_i32_0 = arith.constant 0 : i32
    %c0_i32_1 = arith.constant 0 : i32
    return %arg0, %c0_i32, %c0_i32_0 : i32, i32, i32
  }
  func.func @transform_1(%arg0: i32) -> (i32, i32) {
    %c0_i32 = arith.constant 0 : i32
    %c0_i32_0 = arith.constant 0 : i32
    %c0_i32_1 = arith.constant 0 : i32
    return %c0_i32, %c0_i32_0 : i32, i32
  }
  func.func @transform_2(%arg0: i32) -> (i32, i32) {
    %c0_i32 = arith.constant 0 : i32
    %c0_i32_0 = arith.constant 0 : i32
    %c0_i32_1 = arith.constant 0 : i32
    return %c0_i32, %c0_i32_0 : i32, i32
  }
  func.func @transform_3(%arg0: i32) -> (i32, i32, i32) {
    %c0_i32 = arith.constant 0 : i32
    %c0_i32_0 = arith.constant 0 : i32
    %c0_i32_1 = arith.constant 0 : i32
    return %arg0, %c0_i32, %c0_i32_0 : i32, i32, i32
  }
}

module attributes {stable_mosaic.version = 11 : i64} {
  func.func @_rnn_chunk_kernel(%arg0: i32, %arg1: memref<8x4x384xbf16, #tpu.memory_space<vmem>>, %arg2: memref<128x384xbf16, #tpu.memory_space<vmem>>, %arg3: memref<4x128xf32, #tpu.memory_space<vmem>>, %arg4: memref<8x4x128xf32, #tpu.memory_space<vmem>>, %arg5: memref<4x128xf32, #tpu.memory_space<vmem>>) attributes {dimension_semantics = [#tpu.dimension_semantics<arbitrary>], iteration_bounds = array<i64: 1>, scalar_prefetch = 0 : i64, scratch_operands = 1 : i64, tpu.core_type = #tpu.core_type<tc>, window_params = [{transform_indices = @transform_0, window_bounds = array<i64: 8, 4, 384>}, {pipeline_mode = #tpu.pipeline_mode<synchronous>, transform_indices = @transform_1, window_bounds = array<i64: 128, 384>}, {pipeline_mode = #tpu.pipeline_mode<synchronous>, transform_indices = @transform_2, window_bounds = array<i64: 4, 128>}, {transform_indices = @transform_3, window_bounds = array<i64: 8, 4, 128>}]} {
    %c0_i32 = arith.constant 0 : i32
    %0 = arith.cmpi eq, %arg0, %c0_i32 : i32
    %1 = arith.extui %0 : i1 to i32
    %c0_i32_0 = arith.constant 0 : i32
    %2 = arith.cmpi ne, %1, %c0_i32_0 : i32
    scf.if %2 {
      %cst_86 = arith.constant 0.000000e+00 : f32
      %310 = vector.broadcast %cst_86 : f32 to vector<4x128xf32>
      %c0_87 = arith.constant 0 : index
      %c0_88 = arith.constant 0 : index
      %311 = vector.load %arg5[%c0_87, %c0_88] : memref<4x128xf32, #tpu.memory_space<vmem>>, vector<4x128xf32>
      tpu.vector_store %arg5[%c0_87, %c0_88], %310 {strides = array<i32>} : memref<4x128xf32, #tpu.memory_space<vmem>>, vector<4x128xf32>,
    } else {
    }
    %c0 = arith.constant 0 : index
    %c0_1 = arith.constant 0 : index
    %3 = vector.load %arg3[%c0, %c0_1] : memref<4x128xf32, #tpu.memory_space<vmem>>, vector<4x128xf32>
    %c0_2 = arith.constant 0 : index
    %c0_3 = arith.constant 0 : index
    %4 = vector.load %arg5[%c0_2, %c0_3] : memref<4x128xf32, #tpu.memory_space<vmem>>, vector<4x128xf32>
    %c0_i32_4 = arith.constant 0 : i32
    %5 = arith.index_cast %c0_i32_4 : i32 to index
    %c0_5 = arith.constant 0 : index
    %c0_6 = arith.constant 0 : index
    %6 = vector.load %arg1[%5, %c0_5, %c0_6] : memref<8x4x384xbf16, #tpu.memory_space<vmem>>, vector<1x4x384xbf16>
    %7 = vector.shape_cast %6 : vector<1x4x384xbf16> to vector<4x384xbf16>
    %8 = arith.extf %7 : vector<4x384xbf16> to vector<4x384xf32>
    %9 = arith.truncf %4 : vector<4x128xf32> to vector<4x128xbf16>
    %c0_7 = arith.constant 0 : index
    %c0_8 = arith.constant 0 : index
    %10 = vector.load %arg2[%c0_7, %c0_8] : memref<128x384xbf16, #tpu.memory_space<vmem>>, vector<128x384xbf16>
    %cst = arith.constant dense<0.000000e+00> : vector<4x384xf32>
    %11 = tpu.matmul %9, %10, %cst {dimension_numbers = #tpu.dot_dimension_numbers<[1], [0], [0], [1], [0, 0, 1, 1], [], []>} : vector<4x128xbf16>, vector<128x384xbf16>, vector<4x384xf32> -> vector<4x384xf32>
    %12 = vector.extract_strided_slice %8 {offsets = [0, 0], sizes = [4, 128], strides = [1, 1]} : vector<4x384xf32> to vector<4x128xf32>
    %13 = vector.extract_strided_slice %11 {offsets = [0, 0], sizes = [4, 128], strides = [1, 1]} : vector<4x384xf32> to vector<4x128xf32>
    %14 = arith.addf %12, %13 : vector<4x128xf32>
    %15 = arith.negf %14 : vector<4x128xf32>
    %16 = math.exp %15 : vector<4x128xf32>
    %cst_9 = arith.constant 1.000000e+00 : f32
    %17 = vector.broadcast %cst_9 : f32 to vector<4x128xf32>
    %18 = arith.addf %17, %16 : vector<4x128xf32>
    %19 = arith.divf %17, %18 : vector<4x128xf32>
    %20 = vector.extract_strided_slice %8 {offsets = [0, 128], sizes = [4, 128], strides = [1, 1]} : vector<4x384xf32> to vector<4x128xf32>
    %21 = vector.extract_strided_slice %11 {offsets = [0, 128], sizes = [4, 128], strides = [1, 1]} : vector<4x384xf32> to vector<4x128xf32>
    %22 = arith.addf %20, %21 : vector<4x128xf32>
    %23 = arith.negf %22 : vector<4x128xf32>
    %24 = math.exp %23 : vector<4x128xf32>
    %cst_10 = arith.constant 1.000000e+00 : f32
    %25 = vector.broadcast %cst_10 : f32 to vector<4x128xf32>
    %26 = arith.addf %25, %24 : vector<4x128xf32>
    %27 = arith.divf %25, %26 : vector<4x128xf32>
    %28 = vector.extract_strided_slice %8 {offsets = [0, 256], sizes = [4, 128], strides = [1, 1]} : vector<4x384xf32> to vector<4x128xf32>
    %29 = vector.extract_strided_slice %11 {offsets = [0, 256], sizes = [4, 128], strides = [1, 1]} : vector<4x384xf32> to vector<4x128xf32>
    %30 = arith.addf %29, %3 : vector<4x128xf32>
    %31 = arith.mulf %19, %30 : vector<4x128xf32>
    %32 = arith.addf %28, %31 : vector<4x128xf32>
    %33 = math.tanh %32 : vector<4x128xf32>
    %cst_11 = arith.constant 1.000000e+00 : f32
    %34 = vector.broadcast %cst_11 : f32 to vector<4x128xf32>
    %35 = arith.subf %34, %27 : vector<4x128xf32>
    %36 = arith.mulf %35, %33 : vector<4x128xf32>
    %37 = arith.mulf %27, %4 : vector<4x128xf32>
    %38 = arith.addf %36, %37 : vector<4x128xf32>
    %39 = arith.index_cast %c0_i32_4 : i32 to index
    %c0_12 = arith.constant 0 : index
    %c0_13 = arith.constant 0 : index
    %40 = vector.load %arg4[%39, %c0_12, %c0_13] : memref<8x4x128xf32, #tpu.memory_space<vmem>>, vector<1x4x128xf32>
    %41 = vector.shape_cast %40 : vector<1x4x128xf32> to vector<4x128xf32>
    %42 = vector.shape_cast %38 : vector<4x128xf32> to vector<1x4x128xf32>
    tpu.vector_store %arg4[%39, %c0_12, %c0_13], %42 {strides = array<i32>} : memref<8x4x128xf32, #tpu.memory_space<vmem>>, vector<1x4x128xf32>,
    %c1_i32 = arith.constant 1 : i32
    %43 = arith.index_cast %c1_i32 : i32 to index
    %c0_14 = arith.constant 0 : index
    %c0_15 = arith.constant 0 : index
    %44 = vector.load %arg1[%43, %c0_14, %c0_15] : memref<8x4x384xbf16, #tpu.memory_space<vmem>>, vector<1x4x384xbf16>
    %45 = vector.shape_cast %44 : vector<1x4x384xbf16> to vector<4x384xbf16>
    %46 = arith.extf %45 : vector<4x384xbf16> to vector<4x384xf32>
    %47 = arith.truncf %38 : vector<4x128xf32> to vector<4x128xbf16>
    %c0_16 = arith.constant 0 : index
    %c0_17 = arith.constant 0 : index
    %48 = vector.load %arg2[%c0_16, %c0_17] : memref<128x384xbf16, #tpu.memory_space<vmem>>, vector<128x384xbf16>
    %cst_18 = arith.constant dense<0.000000e+00> : vector<4x384xf32>
    %49 = tpu.matmul %47, %48, %cst_18 {dimension_numbers = #tpu.dot_dimension_numbers<[1], [0], [0], [1], [0, 0, 1, 1], [], []>} : vector<4x128xbf16>, vector<128x384xbf16>, vector<4x384xf32> -> vector<4x384xf32>
    %50 = vector.extract_strided_slice %46 {offsets = [0, 0], sizes = [4, 128], strides = [1, 1]} : vector<4x384xf32> to vector<4x128xf32>
    %51 = vector.extract_strided_slice %49 {offsets = [0, 0], sizes = [4, 128], strides = [1, 1]} : vector<4x384xf32> to vector<4x128xf32>
    %52 = arith.addf %50, %51 : vector<4x128xf32>
    %53 = arith.negf %52 : vector<4x128xf32>
    %54 = math.exp %53 : vector<4x128xf32>
    %cst_19 = arith.constant 1.000000e+00 : f32
    %55 = vector.broadcast %cst_19 : f32 to vector<4x128xf32>
    %56 = arith.addf %55, %54 : vector<4x128xf32>
    %57 = arith.divf %55, %56 : vector<4x128xf32>
    %58 = vector.extract_strided_slice %46 {offsets = [0, 128], sizes = [4, 128], strides = [1, 1]} : vector<4x384xf32> to vector<4x128xf32>
    %59 = vector.extract_strided_slice %49 {offsets = [0, 128], sizes = [4, 128], strides = [1, 1]} : vector<4x384xf32> to vector<4x128xf32>
    %60 = arith.addf %58, %59 : vector<4x128xf32>
    %61 = arith.negf %60 : vector<4x128xf32>
    %62 = math.exp %61 : vector<4x128xf32>
    %cst_20 = arith.constant 1.000000e+00 : f32
    %63 = vector.broadcast %cst_20 : f32 to vector<4x128xf32>
    %64 = arith.addf %63, %62 : vector<4x128xf32>
    %65 = arith.divf %63, %64 : vector<4x128xf32>
    %66 = vector.extract_strided_slice %46 {offsets = [0, 256], sizes = [4, 128], strides = [1, 1]} : vector<4x384xf32> to vector<4x128xf32>
    %67 = vector.extract_strided_slice %49 {offsets = [0, 256], sizes = [4, 128], strides = [1, 1]} : vector<4x384xf32> to vector<4x128xf32>
    %68 = arith.addf %67, %3 : vector<4x128xf32>
    %69 = arith.mulf %57, %68 : vector<4x128xf32>
    %70 = arith.addf %66, %69 : vector<4x128xf32>
    %71 = math.tanh %70 : vector<4x128xf32>
    %cst_21 = arith.constant 1.000000e+00 : f32
    %72 = vector.broadcast %cst_21 : f32 to vector<4x128xf32>
    %73 = arith.subf %72, %65 : vector<4x128xf32>
    %74 = arith.mulf %73, %71 : vector<4x128xf32>
    %75 = arith.mulf %65, %38 : vector<4x128xf32>
    %76 = arith.addf %74, %75 : vector<4x128xf32>
    %77 = arith.index_cast %c1_i32 : i32 to index
    %c0_22 = arith.constant 0 : index
    %c0_23 = arith.constant 0 : index
    %78 = vector.load %arg4[%77, %c0_22, %c0_23] : memref<8x4x128xf32, #tpu.memory_space<vmem>>, vector<1x4x128xf32>
    %79 = vector.shape_cast %78 : vector<1x4x128xf32> to vector<4x128xf32>
    %80 = vector.shape_cast %76 : vector<4x128xf32> to vector<1x4x128xf32>
    tpu.vector_store %arg4[%77, %c0_22, %c0_23], %80 {strides = array<i32>} : memref<8x4x128xf32, #tpu.memory_space<vmem>>, vector<1x4x128xf32>,
    %c2_i32 = arith.constant 2 : i32
    %81 = arith.index_cast %c2_i32 : i32 to index
    %c0_24 = arith.constant 0 : index
    %c0_25 = arith.constant 0 : index
    %82 = vector.load %arg1[%81, %c0_24, %c0_25] : memref<8x4x384xbf16, #tpu.memory_space<vmem>>, vector<1x4x384xbf16>
    %83 = vector.shape_cast %82 : vector<1x4x384xbf16> to vector<4x384xbf16>
    %84 = arith.extf %83 : vector<4x384xbf16> to vector<4x384xf32>
    %85 = arith.truncf %76 : vector<4x128xf32> to vector<4x128xbf16>
    %c0_26 = arith.constant 0 : index
    %c0_27 = arith.constant 0 : index
    %86 = vector.load %arg2[%c0_26, %c0_27] : memref<128x384xbf16, #tpu.memory_space<vmem>>, vector<128x384xbf16>
    %cst_28 = arith.constant dense<0.000000e+00> : vector<4x384xf32>
    %87 = tpu.matmul %85, %86, %cst_28 {dimension_numbers = #tpu.dot_dimension_numbers<[1], [0], [0], [1], [0, 0, 1, 1], [], []>} : vector<4x128xbf16>, vector<128x384xbf16>, vector<4x384xf32> -> vector<4x384xf32>
    %88 = vector.extract_strided_slice %84 {offsets = [0, 0], sizes = [4, 128], strides = [1, 1]} : vector<4x384xf32> to vector<4x128xf32>
    %89 = vector.extract_strided_slice %87 {offsets = [0, 0], sizes = [4, 128], strides = [1, 1]} : vector<4x384xf32> to vector<4x128xf32>
    %90 = arith.addf %88, %89 : vector<4x128xf32>
    %91 = arith.negf %90 : vector<4x128xf32>
    %92 = math.exp %91 : vector<4x128xf32>
    %cst_29 = arith.constant 1.000000e+00 : f32
    %93 = vector.broadcast %cst_29 : f32 to vector<4x128xf32>
    %94 = arith.addf %93, %92 : vector<4x128xf32>
    %95 = arith.divf %93, %94 : vector<4x128xf32>
    %96 = vector.extract_strided_slice %84 {offsets = [0, 128], sizes = [4, 128], strides = [1, 1]} : vector<4x384xf32> to vector<4x128xf32>
    %97 = vector.extract_strided_slice %87 {offsets = [0, 128], sizes = [4, 128], strides = [1, 1]} : vector<4x384xf32> to vector<4x128xf32>
    %98 = arith.addf %96, %97 : vector<4x128xf32>
    %99 = arith.negf %98 : vector<4x128xf32>
    %100 = math.exp %99 : vector<4x128xf32>
    %cst_30 = arith.constant 1.000000e+00 : f32
    %101 = vector.broadcast %cst_30 : f32 to vector<4x128xf32>
    %102 = arith.addf %101, %100 : vector<4x128xf32>
    %103 = arith.divf %101, %102 : vector<4x128xf32>
    %104 = vector.extract_strided_slice %84 {offsets = [0, 256], sizes = [4, 128], strides = [1, 1]} : vector<4x384xf32> to vector<4x128xf32>
    %105 = vector.extract_strided_slice %87 {offsets = [0, 256], sizes = [4, 128], strides = [1, 1]} : vector<4x384xf32> to vector<4x128xf32>
    %106 = arith.addf %105, %3 : vector<4x128xf32>
    %107 = arith.mulf %95, %106 : vector<4x128xf32>
    %108 = arith.addf %104, %107 : vector<4x128xf32>
    %109 = math.tanh %108 : vector<4x128xf32>
    %cst_31 = arith.constant 1.000000e+00 : f32
    %110 = vector.broadcast %cst_31 : f32 to vector<4x128xf32>
    %111 = arith.subf %110, %103 : vector<4x128xf32>
    %112 = arith.mulf %111, %109 : vector<4x128xf32>
    %113 = arith.mulf %103, %76 : vector<4x128xf32>
    %114 = arith.addf %112, %113 : vector<4x128xf32>
    %115 = arith.index_cast %c2_i32 : i32 to index
    %c0_32 = arith.constant 0 : index
    %c0_33 = arith.constant 0 : index
    %116 = vector.load %arg4[%115, %c0_32, %c0_33] : memref<8x4x128xf32, #tpu.memory_space<vmem>>, vector<1x4x128xf32>
    %117 = vector.shape_cast %116 : vector<1x4x128xf32> to vector<4x128xf32>
    %118 = vector.shape_cast %114 : vector<4x128xf32> to vector<1x4x128xf32>
    tpu.vector_store %arg4[%115, %c0_32, %c0_33], %118 {strides = array<i32>} : memref<8x4x128xf32, #tpu.memory_space<vmem>>, vector<1x4x128xf32>,
    %c3_i32 = arith.constant 3 : i32
    %119 = arith.index_cast %c3_i32 : i32 to index
    %c0_34 = arith.constant 0 : index
    %c0_35 = arith.constant 0 : index
    %120 = vector.load %arg1[%119, %c0_34, %c0_35] : memref<8x4x384xbf16, #tpu.memory_space<vmem>>, vector<1x4x384xbf16>
    %121 = vector.shape_cast %120 : vector<1x4x384xbf16> to vector<4x384xbf16>
    %122 = arith.extf %121 : vector<4x384xbf16> to vector<4x384xf32>
    %123 = arith.truncf %114 : vector<4x128xf32> to vector<4x128xbf16>
    %c0_36 = arith.constant 0 : index
    %c0_37 = arith.constant 0 : index
    %124 = vector.load %arg2[%c0_36, %c0_37] : memref<128x384xbf16, #tpu.memory_space<vmem>>, vector<128x384xbf16>
    %cst_38 = arith.constant dense<0.000000e+00> : vector<4x384xf32>
    %125 = tpu.matmul %123, %124, %cst_38 {dimension_numbers = #tpu.dot_dimension_numbers<[1], [0], [0], [1], [0, 0, 1, 1], [], []>} : vector<4x128xbf16>, vector<128x384xbf16>, vector<4x384xf32> -> vector<4x384xf32>
    %126 = vector.extract_strided_slice %122 {offsets = [0, 0], sizes = [4, 128], strides = [1, 1]} : vector<4x384xf32> to vector<4x128xf32>
    %127 = vector.extract_strided_slice %125 {offsets = [0, 0], sizes = [4, 128], strides = [1, 1]} : vector<4x384xf32> to vector<4x128xf32>
    %128 = arith.addf %126, %127 : vector<4x128xf32>
    %129 = arith.negf %128 : vector<4x128xf32>
    %130 = math.exp %129 : vector<4x128xf32>
    %cst_39 = arith.constant 1.000000e+00 : f32
    %131 = vector.broadcast %cst_39 : f32 to vector<4x128xf32>
    %132 = arith.addf %131, %130 : vector<4x128xf32>
    %133 = arith.divf %131, %132 : vector<4x128xf32>
    %134 = vector.extract_strided_slice %122 {offsets = [0, 128], sizes = [4, 128], strides = [1, 1]} : vector<4x384xf32> to vector<4x128xf32>
    %135 = vector.extract_strided_slice %125 {offsets = [0, 128], sizes = [4, 128], strides = [1, 1]} : vector<4x384xf32> to vector<4x128xf32>
    %136 = arith.addf %134, %135 : vector<4x128xf32>
    %137 = arith.negf %136 : vector<4x128xf32>
    %138 = math.exp %137 : vector<4x128xf32>
    %cst_40 = arith.constant 1.000000e+00 : f32
    %139 = vector.broadcast %cst_40 : f32 to vector<4x128xf32>
    %140 = arith.addf %139, %138 : vector<4x128xf32>
    %141 = arith.divf %139, %140 : vector<4x128xf32>
    %142 = vector.extract_strided_slice %122 {offsets = [0, 256], sizes = [4, 128], strides = [1, 1]} : vector<4x384xf32> to vector<4x128xf32>
    %143 = vector.extract_strided_slice %125 {offsets = [0, 256], sizes = [4, 128], strides = [1, 1]} : vector<4x384xf32> to vector<4x128xf32>
    %144 = arith.addf %143, %3 : vector<4x128xf32>
    %145 = arith.mulf %133, %144 : vector<4x128xf32>
    %146 = arith.addf %142, %145 : vector<4x128xf32>
    %147 = math.tanh %146 : vector<4x128xf32>
    %cst_41 = arith.constant 1.000000e+00 : f32
    %148 = vector.broadcast %cst_41 : f32 to vector<4x128xf32>
    %149 = arith.subf %148, %141 : vector<4x128xf32>
    %150 = arith.mulf %149, %147 : vector<4x128xf32>
    %151 = arith.mulf %141, %114 : vector<4x128xf32>
    %152 = arith.addf %150, %151 : vector<4x128xf32>
    %153 = arith.index_cast %c3_i32 : i32 to index
    %c0_42 = arith.constant 0 : index
    %c0_43 = arith.constant 0 : index
    %154 = vector.load %arg4[%153, %c0_42, %c0_43] : memref<8x4x128xf32, #tpu.memory_space<vmem>>, vector<1x4x128xf32>
    %155 = vector.shape_cast %154 : vector<1x4x128xf32> to vector<4x128xf32>
    %156 = vector.shape_cast %152 : vector<4x128xf32> to vector<1x4x128xf32>
    tpu.vector_store %arg4[%153, %c0_42, %c0_43], %156 {strides = array<i32>} : memref<8x4x128xf32, #tpu.memory_space<vmem>>, vector<1x4x128xf32>,
    %c4_i32 = arith.constant 4 : i32
    %157 = arith.index_cast %c4_i32 : i32 to index
    %c0_44 = arith.constant 0 : index
    %c0_45 = arith.constant 0 : index
    %158 = vector.load %arg1[%157, %c0_44, %c0_45] : memref<8x4x384xbf16, #tpu.memory_space<vmem>>, vector<1x4x384xbf16>
    %159 = vector.shape_cast %158 : vector<1x4x384xbf16> to vector<4x384xbf16>
    %160 = arith.extf %159 : vector<4x384xbf16> to vector<4x384xf32>
    %161 = arith.truncf %152 : vector<4x128xf32> to vector<4x128xbf16>
    %c0_46 = arith.constant 0 : index
    %c0_47 = arith.constant 0 : index
    %162 = vector.load %arg2[%c0_46, %c0_47] : memref<128x384xbf16, #tpu.memory_space<vmem>>, vector<128x384xbf16>
    %cst_48 = arith.constant dense<0.000000e+00> : vector<4x384xf32>
    %163 = tpu.matmul %161, %162, %cst_48 {dimension_numbers = #tpu.dot_dimension_numbers<[1], [0], [0], [1], [0, 0, 1, 1], [], []>} : vector<4x128xbf16>, vector<128x384xbf16>, vector<4x384xf32> -> vector<4x384xf32>
    %164 = vector.extract_strided_slice %160 {offsets = [0, 0], sizes = [4, 128], strides = [1, 1]} : vector<4x384xf32> to vector<4x128xf32>
    %165 = vector.extract_strided_slice %163 {offsets = [0, 0], sizes = [4, 128], strides = [1, 1]} : vector<4x384xf32> to vector<4x128xf32>
    %166 = arith.addf %164, %165 : vector<4x128xf32>
    %167 = arith.negf %166 : vector<4x128xf32>
    %168 = math.exp %167 : vector<4x128xf32>
    %cst_49 = arith.constant 1.000000e+00 : f32
    %169 = vector.broadcast %cst_49 : f32 to vector<4x128xf32>
    %170 = arith.addf %169, %168 : vector<4x128xf32>
    %171 = arith.divf %169, %170 : vector<4x128xf32>
    %172 = vector.extract_strided_slice %160 {offsets = [0, 128], sizes = [4, 128], strides = [1, 1]} : vector<4x384xf32> to vector<4x128xf32>
    %173 = vector.extract_strided_slice %163 {offsets = [0, 128], sizes = [4, 128], strides = [1, 1]} : vector<4x384xf32> to vector<4x128xf32>
    %174 = arith.addf %172, %173 : vector<4x128xf32>
    %175 = arith.negf %174 : vector<4x128xf32>
    %176 = math.exp %175 : vector<4x128xf32>
    %cst_50 = arith.constant 1.000000e+00 : f32
    %177 = vector.broadcast %cst_50 : f32 to vector<4x128xf32>
    %178 = arith.addf %177, %176 : vector<4x128xf32>
    %179 = arith.divf %177, %178 : vector<4x128xf32>
    %180 = vector.extract_strided_slice %160 {offsets = [0, 256], sizes = [4, 128], strides = [1, 1]} : vector<4x384xf32> to vector<4x128xf32>
    %181 = vector.extract_strided_slice %163 {offsets = [0, 256], sizes = [4, 128], strides = [1, 1]} : vector<4x384xf32> to vector<4x128xf32>
    %182 = arith.addf %181, %3 : vector<4x128xf32>
    %183 = arith.mulf %171, %182 : vector<4x128xf32>
    %184 = arith.addf %180, %183 : vector<4x128xf32>
    %185 = math.tanh %184 : vector<4x128xf32>
    %cst_51 = arith.constant 1.000000e+00 : f32
    %186 = vector.broadcast %cst_51 : f32 to vector<4x128xf32>
    %187 = arith.subf %186, %179 : vector<4x128xf32>
    %188 = arith.mulf %187, %185 : vector<4x128xf32>
    %189 = arith.mulf %179, %152 : vector<4x128xf32>
    %190 = arith.addf %188, %189 : vector<4x128xf32>
    %191 = arith.index_cast %c4_i32 : i32 to index
    %c0_52 = arith.constant 0 : index
    %c0_53 = arith.constant 0 : index
    %192 = vector.load %arg4[%191, %c0_52, %c0_53] : memref<8x4x128xf32, #tpu.memory_space<vmem>>, vector<1x4x128xf32>
    %193 = vector.shape_cast %192 : vector<1x4x128xf32> to vector<4x128xf32>
    %194 = vector.shape_cast %190 : vector<4x128xf32> to vector<1x4x128xf32>
    tpu.vector_store %arg4[%191, %c0_52, %c0_53], %194 {strides = array<i32>} : memref<8x4x128xf32, #tpu.memory_space<vmem>>, vector<1x4x128xf32>,
    %c5_i32 = arith.constant 5 : i32
    %195 = arith.index_cast %c5_i32 : i32 to index
    %c0_54 = arith.constant 0 : index
    %c0_55 = arith.constant 0 : index
    %196 = vector.load %arg1[%195, %c0_54, %c0_55] : memref<8x4x384xbf16, #tpu.memory_space<vmem>>, vector<1x4x384xbf16>
    %197 = vector.shape_cast %196 : vector<1x4x384xbf16> to vector<4x384xbf16>
    %198 = arith.extf %197 : vector<4x384xbf16> to vector<4x384xf32>
    %199 = arith.truncf %190 : vector<4x128xf32> to vector<4x128xbf16>
    %c0_56 = arith.constant 0 : index
    %c0_57 = arith.constant 0 : index
    %200 = vector.load %arg2[%c0_56, %c0_57] : memref<128x384xbf16, #tpu.memory_space<vmem>>, vector<128x384xbf16>
    %cst_58 = arith.constant dense<0.000000e+00> : vector<4x384xf32>
    %201 = tpu.matmul %199, %200, %cst_58 {dimension_numbers = #tpu.dot_dimension_numbers<[1], [0], [0], [1], [0, 0, 1, 1], [], []>} : vector<4x128xbf16>, vector<128x384xbf16>, vector<4x384xf32> -> vector<4x384xf32>
    %202 = vector.extract_strided_slice %198 {offsets = [0, 0], sizes = [4, 128], strides = [1, 1]} : vector<4x384xf32> to vector<4x128xf32>
    %203 = vector.extract_strided_slice %201 {offsets = [0, 0], sizes = [4, 128], strides = [1, 1]} : vector<4x384xf32> to vector<4x128xf32>
    %204 = arith.addf %202, %203 : vector<4x128xf32>
    %205 = arith.negf %204 : vector<4x128xf32>
    %206 = math.exp %205 : vector<4x128xf32>
    %cst_59 = arith.constant 1.000000e+00 : f32
    %207 = vector.broadcast %cst_59 : f32 to vector<4x128xf32>
    %208 = arith.addf %207, %206 : vector<4x128xf32>
    %209 = arith.divf %207, %208 : vector<4x128xf32>
    %210 = vector.extract_strided_slice %198 {offsets = [0, 128], sizes = [4, 128], strides = [1, 1]} : vector<4x384xf32> to vector<4x128xf32>
    %211 = vector.extract_strided_slice %201 {offsets = [0, 128], sizes = [4, 128], strides = [1, 1]} : vector<4x384xf32> to vector<4x128xf32>
    %212 = arith.addf %210, %211 : vector<4x128xf32>
    %213 = arith.negf %212 : vector<4x128xf32>
    %214 = math.exp %213 : vector<4x128xf32>
    %cst_60 = arith.constant 1.000000e+00 : f32
    %215 = vector.broadcast %cst_60 : f32 to vector<4x128xf32>
    %216 = arith.addf %215, %214 : vector<4x128xf32>
    %217 = arith.divf %215, %216 : vector<4x128xf32>
    %218 = vector.extract_strided_slice %198 {offsets = [0, 256], sizes = [4, 128], strides = [1, 1]} : vector<4x384xf32> to vector<4x128xf32>
    %219 = vector.extract_strided_slice %201 {offsets = [0, 256], sizes = [4, 128], strides = [1, 1]} : vector<4x384xf32> to vector<4x128xf32>
    %220 = arith.addf %219, %3 : vector<4x128xf32>
    %221 = arith.mulf %209, %220 : vector<4x128xf32>
    %222 = arith.addf %218, %221 : vector<4x128xf32>
    %223 = math.tanh %222 : vector<4x128xf32>
    %cst_61 = arith.constant 1.000000e+00 : f32
    %224 = vector.broadcast %cst_61 : f32 to vector<4x128xf32>
    %225 = arith.subf %224, %217 : vector<4x128xf32>
    %226 = arith.mulf %225, %223 : vector<4x128xf32>
    %227 = arith.mulf %217, %190 : vector<4x128xf32>
    %228 = arith.addf %226, %227 : vector<4x128xf32>
    %229 = arith.index_cast %c5_i32 : i32 to index
    %c0_62 = arith.constant 0 : index
    %c0_63 = arith.constant 0 : index
    %230 = vector.load %arg4[%229, %c0_62, %c0_63] : memref<8x4x128xf32, #tpu.memory_space<vmem>>, vector<1x4x128xf32>
    %231 = vector.shape_cast %230 : vector<1x4x128xf32> to vector<4x128xf32>
    %232 = vector.shape_cast %228 : vector<4x128xf32> to vector<1x4x128xf32>
    tpu.vector_store %arg4[%229, %c0_62, %c0_63], %232 {strides = array<i32>} : memref<8x4x128xf32, #tpu.memory_space<vmem>>, vector<1x4x128xf32>,
    %c6_i32 = arith.constant 6 : i32
    %233 = arith.index_cast %c6_i32 : i32 to index
    %c0_64 = arith.constant 0 : index
    %c0_65 = arith.constant 0 : index
    %234 = vector.load %arg1[%233, %c0_64, %c0_65] : memref<8x4x384xbf16, #tpu.memory_space<vmem>>, vector<1x4x384xbf16>
    %235 = vector.shape_cast %234 : vector<1x4x384xbf16> to vector<4x384xbf16>
    %236 = arith.extf %235 : vector<4x384xbf16> to vector<4x384xf32>
    %237 = arith.truncf %228 : vector<4x128xf32> to vector<4x128xbf16>
    %c0_66 = arith.constant 0 : index
    %c0_67 = arith.constant 0 : index
    %238 = vector.load %arg2[%c0_66, %c0_67] : memref<128x384xbf16, #tpu.memory_space<vmem>>, vector<128x384xbf16>
    %cst_68 = arith.constant dense<0.000000e+00> : vector<4x384xf32>
    %239 = tpu.matmul %237, %238, %cst_68 {dimension_numbers = #tpu.dot_dimension_numbers<[1], [0], [0], [1], [0, 0, 1, 1], [], []>} : vector<4x128xbf16>, vector<128x384xbf16>, vector<4x384xf32> -> vector<4x384xf32>
    %240 = vector.extract_strided_slice %236 {offsets = [0, 0], sizes = [4, 128], strides = [1, 1]} : vector<4x384xf32> to vector<4x128xf32>
    %241 = vector.extract_strided_slice %239 {offsets = [0, 0], sizes = [4, 128], strides = [1, 1]} : vector<4x384xf32> to vector<4x128xf32>
    %242 = arith.addf %240, %241 : vector<4x128xf32>
    %243 = arith.negf %242 : vector<4x128xf32>
    %244 = math.exp %243 : vector<4x128xf32>
    %cst_69 = arith.constant 1.000000e+00 : f32
    %245 = vector.broadcast %cst_69 : f32 to vector<4x128xf32>
    %246 = arith.addf %245, %244 : vector<4x128xf32>
    %247 = arith.divf %245, %246 : vector<4x128xf32>
    %248 = vector.extract_strided_slice %236 {offsets = [0, 128], sizes = [4, 128], strides = [1, 1]} : vector<4x384xf32> to vector<4x128xf32>
    %249 = vector.extract_strided_slice %239 {offsets = [0, 128], sizes = [4, 128], strides = [1, 1]} : vector<4x384xf32> to vector<4x128xf32>
    %250 = arith.addf %248, %249 : vector<4x128xf32>
    %251 = arith.negf %250 : vector<4x128xf32>
    %252 = math.exp %251 : vector<4x128xf32>
    %cst_70 = arith.constant 1.000000e+00 : f32
    %253 = vector.broadcast %cst_70 : f32 to vector<4x128xf32>
    %254 = arith.addf %253, %252 : vector<4x128xf32>
    %255 = arith.divf %253, %254 : vector<4x128xf32>
    %256 = vector.extract_strided_slice %236 {offsets = [0, 256], sizes = [4, 128], strides = [1, 1]} : vector<4x384xf32> to vector<4x128xf32>
    %257 = vector.extract_strided_slice %239 {offsets = [0, 256], sizes = [4, 128], strides = [1, 1]} : vector<4x384xf32> to vector<4x128xf32>
    %258 = arith.addf %257, %3 : vector<4x128xf32>
    %259 = arith.mulf %247, %258 : vector<4x128xf32>
    %260 = arith.addf %256, %259 : vector<4x128xf32>
    %261 = math.tanh %260 : vector<4x128xf32>
    %cst_71 = arith.constant 1.000000e+00 : f32
    %262 = vector.broadcast %cst_71 : f32 to vector<4x128xf32>
    %263 = arith.subf %262, %255 : vector<4x128xf32>
    %264 = arith.mulf %263, %261 : vector<4x128xf32>
    %265 = arith.mulf %255, %228 : vector<4x128xf32>
    %266 = arith.addf %264, %265 : vector<4x128xf32>
    %267 = arith.index_cast %c6_i32 : i32 to index
    %c0_72 = arith.constant 0 : index
    %c0_73 = arith.constant 0 : index
    %268 = vector.load %arg4[%267, %c0_72, %c0_73] : memref<8x4x128xf32, #tpu.memory_space<vmem>>, vector<1x4x128xf32>
    %269 = vector.shape_cast %268 : vector<1x4x128xf32> to vector<4x128xf32>
    %270 = vector.shape_cast %266 : vector<4x128xf32> to vector<1x4x128xf32>
    tpu.vector_store %arg4[%267, %c0_72, %c0_73], %270 {strides = array<i32>} : memref<8x4x128xf32, #tpu.memory_space<vmem>>, vector<1x4x128xf32>,
    %c7_i32 = arith.constant 7 : i32
    %271 = arith.index_cast %c7_i32 : i32 to index
    %c0_74 = arith.constant 0 : index
    %c0_75 = arith.constant 0 : index
    %272 = vector.load %arg1[%271, %c0_74, %c0_75] : memref<8x4x384xbf16, #tpu.memory_space<vmem>>, vector<1x4x384xbf16>
    %273 = vector.shape_cast %272 : vector<1x4x384xbf16> to vector<4x384xbf16>
    %274 = arith.extf %273 : vector<4x384xbf16> to vector<4x384xf32>
    %275 = arith.truncf %266 : vector<4x128xf32> to vector<4x128xbf16>
    %c0_76 = arith.constant 0 : index
    %c0_77 = arith.constant 0 : index
    %276 = vector.load %arg2[%c0_76, %c0_77] : memref<128x384xbf16, #tpu.memory_space<vmem>>, vector<128x384xbf16>
    %cst_78 = arith.constant dense<0.000000e+00> : vector<4x384xf32>
    %277 = tpu.matmul %275, %276, %cst_78 {dimension_numbers = #tpu.dot_dimension_numbers<[1], [0], [0], [1], [0, 0, 1, 1], [], []>} : vector<4x128xbf16>, vector<128x384xbf16>, vector<4x384xf32> -> vector<4x384xf32>
    %278 = vector.extract_strided_slice %274 {offsets = [0, 0], sizes = [4, 128], strides = [1, 1]} : vector<4x384xf32> to vector<4x128xf32>
    %279 = vector.extract_strided_slice %277 {offsets = [0, 0], sizes = [4, 128], strides = [1, 1]} : vector<4x384xf32> to vector<4x128xf32>
    %280 = arith.addf %278, %279 : vector<4x128xf32>
    %281 = arith.negf %280 : vector<4x128xf32>
    %282 = math.exp %281 : vector<4x128xf32>
    %cst_79 = arith.constant 1.000000e+00 : f32
    %283 = vector.broadcast %cst_79 : f32 to vector<4x128xf32>
    %284 = arith.addf %283, %282 : vector<4x128xf32>
    %285 = arith.divf %283, %284 : vector<4x128xf32>
    %286 = vector.extract_strided_slice %274 {offsets = [0, 128], sizes = [4, 128], strides = [1, 1]} : vector<4x384xf32> to vector<4x128xf32>
    %287 = vector.extract_strided_slice %277 {offsets = [0, 128], sizes = [4, 128], strides = [1, 1]} : vector<4x384xf32> to vector<4x128xf32>
    %288 = arith.addf %286, %287 : vector<4x128xf32>
    %289 = arith.negf %288 : vector<4x128xf32>
    %290 = math.exp %289 : vector<4x128xf32>
    %cst_80 = arith.constant 1.000000e+00 : f32
    %291 = vector.broadcast %cst_80 : f32 to vector<4x128xf32>
    %292 = arith.addf %291, %290 : vector<4x128xf32>
    %293 = arith.divf %291, %292 : vector<4x128xf32>
    %294 = vector.extract_strided_slice %274 {offsets = [0, 256], sizes = [4, 128], strides = [1, 1]} : vector<4x384xf32> to vector<4x128xf32>
    %295 = vector.extract_strided_slice %277 {offsets = [0, 256], sizes = [4, 128], strides = [1, 1]} : vector<4x384xf32> to vector<4x128xf32>
    %296 = arith.addf %295, %3 : vector<4x128xf32>
    %297 = arith.mulf %285, %296 : vector<4x128xf32>
    %298 = arith.addf %294, %297 : vector<4x128xf32>
    %299 = math.tanh %298 : vector<4x128xf32>
    %cst_81 = arith.constant 1.000000e+00 : f32
    %300 = vector.broadcast %cst_81 : f32 to vector<4x128xf32>
    %301 = arith.subf %300, %293 : vector<4x128xf32>
    %302 = arith.mulf %301, %299 : vector<4x128xf32>
    %303 = arith.mulf %293, %266 : vector<4x128xf32>
    %304 = arith.addf %302, %303 : vector<4x128xf32>
    %305 = arith.index_cast %c7_i32 : i32 to index
    %c0_82 = arith.constant 0 : index
    %c0_83 = arith.constant 0 : index
    %306 = vector.load %arg4[%305, %c0_82, %c0_83] : memref<8x4x128xf32, #tpu.memory_space<vmem>>, vector<1x4x128xf32>
    %307 = vector.shape_cast %306 : vector<1x4x128xf32> to vector<4x128xf32>
    %308 = vector.shape_cast %304 : vector<4x128xf32> to vector<1x4x128xf32>
    tpu.vector_store %arg4[%305, %c0_82, %c0_83], %308 {strides = array<i32>} : memref<8x4x128xf32, #tpu.memory_space<vmem>>, vector<1x4x128xf32>,
    %c8_i32 = arith.constant 8 : i32
    %c0_84 = arith.constant 0 : index
    %c0_85 = arith.constant 0 : index
    %309 = vector.load %arg5[%c0_84, %c0_85] : memref<4x128xf32, #tpu.memory_space<vmem>>, vector<4x128xf32>
    tpu.vector_store %arg5[%c0_84, %c0_85], %304 {strides = array<i32>} : memref<4x128xf32, #tpu.memory_space<vmem>>, vector<4x128xf32>,
    return
  }
  func.func @transform_0(%arg0: i32) -> (i32, i32, i32) {
    %c0_i32 = arith.constant 0 : i32
    %c0_i32_0 = arith.constant 0 : i32
    %c0_i32_1 = arith.constant 0 : i32
    return %arg0, %c0_i32, %c0_i32_0 : i32, i32, i32
  }
  func.func @transform_1(%arg0: i32) -> (i32, i32) {
    %c0_i32 = arith.constant 0 : i32
    %c0_i32_0 = arith.constant 0 : i32
    %c0_i32_1 = arith.constant 0 : i32
    return %c0_i32, %c0_i32_0 : i32, i32
  }
  func.func @transform_2(%arg0: i32) -> (i32, i32) {
    %c0_i32 = arith.constant 0 : i32
    %c0_i32_0 = arith.constant 0 : i32
    %c0_i32_1 = arith.constant 0 : i32
    return %c0_i32, %c0_i32_0 : i32, i32
  }
  func.func @transform_3(%arg0: i32) -> (i32, i32, i32) {
    %c0_i32 = arith.constant 0 : i32
    %c0_i32_0 = arith.constant 0 : i32
    %c0_i32_1 = arith.constant 0 : i32
    return %arg0, %c0_i32, %c0_i32_0 : i32, i32, i32
  }
}

</mosaic_0001>

<llo_original>
// kernel: tpu_custom_call.1
$region0: #{tpu_custom_call.1}
  #allocation0 [shape = 'u32[]', space=smem, size = 0x4, offset = 0x4, fixed_abs, tag = 'smem constant byte address 0x4 - core index']
  #allocation1 [shape = 'u32[144,128]{1,0:T(1,128)}', space=vmem, size = 0x12000, scoped, tag = 'internal scratch']
  #allocation2 [shape = 'f32[4,128]{1,0:T(4,128)}', space=vmem, size = 0x800, scoped, tag = 'scratch operand']
  %s0 = inlined_call_operand.hbm [shape: bf16[8,4,384], index: 0, kind: input, shape index: {}]
  %s1 = inlined_call_operand.hbm [shape: bf16[128,384], index: 1, kind: input, shape index: {}]
  %s2 = inlined_call_operand.hbm [shape: f32[4,128], index: 2, kind: input, shape index: {}]
  %s3 = inlined_call_operand.hbm [shape: f32[8,4,128], index: 3, kind: output, shape index: {}]
  %s4 = sld [smem:[#allocation0]]
  $region38: #{tpu_custom_call.1} parent=0
    _
  %s6 = ssub.s32 1, %s4
  %s7 = scalar_select 0, %s6, %s4
  $region1: #{tpu_custom_call.1} parent=0
    #allocation3 [shape = 'u8[24576]{0}', space=vmem, size = 0x6000, scoped, tag = 'input window, operand 0, single buffered']
    #allocation4 [shape = 's32[1]{0}', space=sflag, size = 0x4, scoped, tag = 'scoped memory for tpu_custom_call.1']
    #allocation5 [shape = 's32[1]{0}', space=sflag, size = 0x4, scoped, tag = 'scoped memory for tpu_custom_call.1']
    #allocation6 [shape = 'u8[98304]{0}', space=vmem, size = 0x18000, scoped, tag = 'input window, operand 1, single buffered']
    #allocation7 [shape = 's32[1]{0}', space=sflag, size = 0x4, scoped, tag = 'scoped memory for tpu_custom_call.1']
    #allocation8 [shape = 'u8[2048]{0}', space=vmem, size = 0x800, scoped, tag = 'input window, operand 2, single buffered']
    #allocation9 [shape = 'u8[16384]{0}', space=vmem, size = 0x4000, scoped, tag = 'output window, operand 0, single buffered']
    %8 = vsyncpa [#allocation4], 0
    %9 = vsyncpa [#allocation7], 0
    %10 = vsyncpa [#allocation5], 0
    // Predicated region
    $region2: #{tpu_custom_call.1} parent=1 // pred_check
      _
    $region3: #{tpu_custom_call.1} parent=1 // pred_check_branch
      %12 = sbr.rel (0) target = $region5
    $region4: #{tpu_custom_call.1} parent=1 // pred_region
      %s14 = ssub.s32 768, 768
      %15 = vsyncadd [#allocation4], %s14
      %s16 = sshll.u32 [#allocation3], 4
      %s17 = int_to_ptr.vmem [resolvable:$true] %s16
      %22 = dma.hbm_to_vmem [thread:$0]  %s0, 768, %s17, [#allocation4], 96, 96, 6
    $region5: #{tpu_custom_call.1} parent=1 // pred_fallthru
      _
    // Predicated region
    $region6: #{tpu_custom_call.1} parent=1 // pred_check
      _
    $region7: #{tpu_custom_call.1} parent=1 // pred_check_branch
      %24 = sbr.rel (0) target = $region9
    $region8: #{tpu_custom_call.1} parent=1 // pred_region
      %s26 = ssub.s32 3072, 3072
      %27 = vsyncadd [#allocation7], %s26
      %s28 = sshll.u32 [#allocation6], 4
      %s29 = int_to_ptr.vmem [resolvable:$true] %s28
      %34 = dma.hbm_to_vmem [thread:$0]  %s1, 3072, %s29, [#allocation7], 192, 192, 12
    $region9: #{tpu_custom_call.1} parent=1 // pred_fallthru
      _
    // Predicated region
    $region10: #{tpu_custom_call.1} parent=1 // pred_check
      _
    $region11: #{tpu_custom_call.1} parent=1 // pred_check_branch
      %36 = sbr.rel (0) target = $region13
    $region12: #{tpu_custom_call.1} parent=1 // pred_region
      %s38 = ssub.s32 64, 64
      %39 = vsyncadd [#allocation7], %s38
      %s41 = sshll.u32 [#allocation8], 4
      %s42 = int_to_ptr.vmem [resolvable:$true] %s41
      %44 = dma.hbm_to_vmem [thread:$0]  %s2, 64, %s42, [#allocation7]
    $region13: #{tpu_custom_call.1} parent=1 // pred_fallthru
      _
    // Predicated region
    $region14: #{tpu_custom_call.1} parent=1 // pred_check
      _
    $region15: #{tpu_custom_call.1} parent=1 // pred_check_branch
      %46 = sbr.rel (0) target = $region17
    $region16: #{tpu_custom_call.1} parent=1 // pred_region
      %47 = dma.done [#allocation4], 768
    $region17: #{tpu_custom_call.1} parent=1 // pred_fallthru
      _
    // Predicated region
    $region18: #{tpu_custom_call.1} parent=1 // pred_check
      _
    $region19: #{tpu_custom_call.1} parent=1 // pred_check_branch
      %49 = sbr.rel (0) target = $region21
    $region20: #{tpu_custom_call.1} parent=1 // pred_region
      %50 = dma.done [#allocation7], 3072
    $region21: #{tpu_custom_call.1} parent=1 // pred_fallthru
      _
    // Predicated region
    $region22: #{tpu_custom_call.1} parent=1 // pred_check
      _
    $region23: #{tpu_custom_call.1} parent=1 // pred_check_branch
      %52 = sbr.rel (0) target = $region25
    $region24: #{tpu_custom_call.1} parent=1 // pred_region
      %53 = dma.done [#allocation7], 64
    $region25: #{tpu_custom_call.1} parent=1 // pred_fallthru
      _
    %p55 = scmp.eq.s32.totalorder 0, 0
    // Predicated region
    $region26: #{tpu_custom_call.1} parent=1 // pred_check
      %p56 = pneg %p55
    $region27: #{tpu_custom_call.1} parent=1 // pred_check_branch
      %58 = sbr.rel (%p56) target = $region29
    $region28: #{tpu_custom_call.1} parent=1 // pred_region
      %59 = vst [vmem:[#allocation2] sm:$0xf] 0.0
    $region29: #{tpu_custom_call.1} parent=1 // pred_fallthru
      _
    %v60 = vld [vmem:[#allocation8] sm:$0xf]
    %v61 = vld [vmem:[#allocation2] sm:$0xf]
    %v62 = vld [vmem:[#allocation3] sm:$0x3f]
    %v63 = vunpack.c.l.bf16 %v62
    %v64 = vunpack.c.h.bf16 %v62
    %v65 = vpack.c.bf16 %v61, %v61
    %v66 = vld [vmem:[#allocation6] sm:$0xff]
    %v67 = vld [vmem:[#allocation6 + $0x8] sm:$0xf]
    %v68 = vld [vmem:[#allocation6 + $0xc] sm:$0xff]
    %v69 = vld [vmem:[#allocation6 + $0x14] sm:$0xf]
    %v70 = vld [vmem:[#allocation6 + $0x18] sm:$0xff]
    %v71 = vld [vmem:[#allocation6 + $0x20] sm:$0xf]
    %v72 = vld [vmem:[#allocation6 + $0x24] sm:$0xff]
    %v73 = vld [vmem:[#allocation6 + $0x2c] sm:$0xf]
    %v74 = vld [vmem:[#allocation6 + $0x30] sm:$0xff]
    %v75 = vld [vmem:[#allocation6 + $0x38] sm:$0xf]
    %v76 = vld [vmem:[#allocation6 + $0x3c] sm:$0xff]
    %v77 = vld [vmem:[#allocation6 + $0x44] sm:$0xf]
    %v78 = vld [vmem:[#allocation6 + $0x48] sm:$0xff]
    %v79 = vld [vmem:[#allocation6 + $0x50] sm:$0xf]
    %v80 = vld [vmem:[#allocation6 + $0x54] sm:$0xff]
    %v81 = vld [vmem:[#allocation6 + $0x5c] sm:$0xf]
    %v82 = vld [vmem:[#allocation6 + $0x60] sm:$0xff]
    %v83 = vld [vmem:[#allocation6 + $0x68] sm:$0xf]
    %v84 = vld [vmem:[#allocation6 + $0x6c] sm:$0xff]
    %v85 = vld [vmem:[#allocation6 + $0x74] sm:$0xf]
    %v86 = vld [vmem:[#allocation6 + $0x78] sm:$0xff]
    %v87 = vld [vmem:[#allocation6 + $0x80] sm:$0xf]
    %v88 = vld [vmem:[#allocation6 + $0x84] sm:$0xff]
    %v89 = vld [vmem:[#allocation6 + $0x8c] sm:$0xf]
    %v90 = vld [vmem:[#allocation6 + $0x90] sm:$0xff]
    %v91 = vld [vmem:[#allocation6 + $0x98] sm:$0xf]
    %v92 = vld [vmem:[#allocation6 + $0x9c] sm:$0xff]
    %v93 = vld [vmem:[#allocation6 + $0xa4] sm:$0xf]
    %v94 = vld [vmem:[#allocation6 + $0xa8] sm:$0xff]
    %v95 = vld [vmem:[#allocation6 + $0xb0] sm:$0xf]
    %v96 = vld [vmem:[#allocation6 + $0xb4] sm:$0xff]
    %v97 = vld [vmem:[#allocation6 + $0xbc] sm:$0xf]
    %v130 = vunpack.c.l.b16 %v66
    %v131 = vunpack.c.h.b16 %v66
    %v132 = vunpack.c.l.b16 %v67
    %v133 = vunpack.c.l.b16 %v68
    %v134 = vunpack.c.h.b16 %v68
    %v135 = vunpack.c.l.b16 %v69
    %v136 = vunpack.c.l.b16 %v70
    %v137 = vunpack.c.h.b16 %v70
    %v138 = vunpack.c.l.b16 %v71
    %v139 = vunpack.c.l.b16 %v72
    %v140 = vunpack.c.h.b16 %v72
    %v141 = vunpack.c.l.b16 %v73
    %v142 = vunpack.c.l.b16 %v74
    %v143 = vunpack.c.h.b16 %v74
    %v144 = vunpack.c.l.b16 %v75
    %v145 = vunpack.c.l.b16 %v76
    %v146 = vunpack.c.h.b16 %v76
    %v147 = vunpack.c.l.b16 %v77
    %v148 = vunpack.c.l.b16 %v78
    %v149 = vunpack.c.h.b16 %v78
    %v150 = vunpack.c.l.b16 %v79
    %v151 = vunpack.c.l.b16 %v80
    %v152 = vunpack.c.h.b16 %v80
    %v153 = vunpack.c.l.b16 %v81
    %v154 = vunpack.c.l.b16 %v82
    %v155 = vunpack.c.h.b16 %v82
    %v156 = vunpack.c.l.b16 %v83
    %v157 = vunpack.c.l.b16 %v84
    %v158 = vunpack.c.h.b16 %v84
    %v159 = vunpack.c.l.b16 %v85
    %v160 = vunpack.c.l.b16 %v86
    %v161 = vunpack.c.h.b16 %v86
    %v162 = vunpack.c.l.b16 %v87
    %v163 = vunpack.c.l.b16 %v88
    %v164 = vunpack.c.h.b16 %v88
    %v165 = vunpack.c.l.b16 %v89
    %v166 = vunpack.c.l.b16 %v90
    %v167 = vunpack.c.h.b16 %v90
    %v168 = vunpack.c.l.b16 %v91
    %v169 = vunpack.c.l.b16 %v92
    %v170 = vunpack.c.h.b16 %v92
    %v171 = vunpack.c.l.b16 %v93
    %v172 = vunpack.c.l.b16 %v94
    %v173 = vunpack.c.h.b16 %v94
    %v174 = vunpack.c.l.b16 %v95
    %v175 = vunpack.c.l.b16 %v96
    %v176 = vunpack.c.h.b16 %v96
    %v177 = vunpack.c.l.b16 %v97
    %v178 = vpack.c.b16 %v133, %v130
    %v179 = vpack.c.b16 %v134, %v131
    %v180 = vpack.c.b16 %v135, %v132
    %v181 = vpack.c.b16 %v139, %v136
    %v182 = vpack.c.b16 %v140, %v137
    %v183 = vpack.c.b16 %v141, %v138
    %v184 = vpack.c.b16 %v145, %v142
    %v185 = vpack.c.b16 %v146, %v143
    %v186 = vpack.c.b16 %v147, %v144
    %v187 = vpack.c.b16 %v151, %v148
    %v188 = vpack.c.b16 %v152, %v149
    %v189 = vpack.c.b16 %v153, %v150
    %v190 = vpack.c.b16 %v157, %v154
    %v191 = vpack.c.b16 %v158, %v155
    %v192 = vpack.c.b16 %v159, %v156
    %v193 = vpack.c.b16 %v163, %v160
    %v194 = vpack.c.b16 %v164, %v161
    %v195 = vpack.c.b16 %v165, %v162
    %v196 = vpack.c.b16 %v169, %v166
    %v197 = vpack.c.b16 %v170, %v167
    %v198 = vpack.c.b16 %v171, %v168
    %v199 = vpack.c.b16 %v175, %v172
    %v200 = vpack.c.b16 %v176, %v173
    %v201 = vpack.c.b16 %v177, %v174
    %226 = vmatprep.subr.bf16.mxu0 %v179
    %227 = vmatpush1.bf16.msra.mxu0 %v178
    %228 = vmatprep.subr.bf16.mxu0 %v182
    %229 = vmatpush1.bf16.msra.mxu0 %v181
    %230 = vmatprep.subr.bf16.mxu0 %v185
    %231 = vmatpush1.bf16.msra.mxu0 %v184
    %232 = vmatprep.subr.bf16.mxu0 %v188
    %233 = vmatpush1.bf16.msra.mxu0 %v187
    %234 = vmatprep.subr.bf16.mxu0 %v191
    %235 = vmatpush1.bf16.msra.mxu0 %v190
    %236 = vmatprep.subr.bf16.mxu0 %v194
    %237 = vmatpush1.bf16.msra.mxu0 %v193
    %238 = vmatprep.subr.bf16.mxu0 %v197
    %239 = vmatpush1.bf16.msra.mxu0 %v196
    %240 = vmatprep.subr.bf16.mxu0 %v200
    %241 = vmatpush1.bf16.msra.mxu0 %v199
    %242 = vmatprep.subr.bf16.mxu0 0
    %243 = vmatpush1.bf16.msra.mxu0 0
    %244 = vmatprep.subr.bf16.mxu0 0
    %245 = vmatpush1.bf16.msra.mxu0 0
    %246 = vmatprep.subr.bf16.mxu0 0
    %247 = vmatpush1.bf16.msra.mxu0 0
    %248 = vmatprep.subr.bf16.mxu0 0
    %249 = vmatpush1.bf16.msra.mxu0 0
    %250 = vmatprep.subr.bf16.mxu0 0
    %251 = vmatpush1.bf16.msra.mxu0 0
    %252 = vmatprep.subr.bf16.mxu0 0
    %253 = vmatpush1.bf16.msra.mxu0 0
    %254 = vmatprep.subr.bf16.mxu0 0
    %255 = vmatpush1.bf16.msra.mxu0 0
    %256 = vmatprep.subr.bf16.mxu0 0
    %257 = vmatpush1.bf16.msra.mxu0 0
    %258 = vmatprep.mubr.bf16.mxu0 0
    %259 = vmatmul.mubr.bf16.gmra.mrb[0].mxu0 %v65
    %v260 = vpop.f32.mrb[0].mxu0
    %v261 = vadd.f32 0.0, %v260
    %v262 = vpop.f32.mrb[0].mxu0
    %v263 = vadd.f32 0.0, %v262
    %v264 = vpop.f32.mrb[0].mxu0
    %v265 = vpop.f32.mrb[0].mxu0
    %266 = vdwg.mxu0
    %267 = vmatprep.subr.bf16.mxu0 0
    %268 = vmatpush1.bf16.msra.mxu0 %v180
    %269 = vmatprep.subr.bf16.mxu0 0
    %270 = vmatpush1.bf16.msra.mxu0 %v183
    %271 = vmatprep.subr.bf16.mxu0 0
    %272 = vmatpush1.bf16.msra.mxu0 %v186
    %273 = vmatprep.subr.bf16.mxu0 0
    %274 = vmatpush1.bf16.msra.mxu0 %v189
    %275 = vmatprep.subr.bf16.mxu0 0
    %276 = vmatpush1.bf16.msra.mxu0 %v192
    %277 = vmatprep.subr.bf16.mxu0 0
    %278 = vmatpush1.bf16.msra.mxu0 %v195
    %279 = vmatprep.subr.bf16.mxu0 0
    %280 = vmatpush1.bf16.msra.mxu0 %v198
    %281 = vmatprep.subr.bf16.mxu0 0
    %282 = vmatpush1.bf16.msra.mxu0 %v201
    %283 = vmatprep.subr.bf16.mxu0 0
    %284 = vmatpush1.bf16.msra.mxu0 0
    %285 = vmatprep.subr.bf16.mxu0 0
    %286 = vmatpush1.bf16.msra.mxu0 0
    %287 = vmatprep.subr.bf16.mxu0 0
    %288 = vmatpush1.bf16.msra.mxu0 0
    %289 = vmatprep.subr.bf16.mxu0 0
    %290 = vmatpush1.bf16.msra.mxu0 0
    %291 = vmatprep.subr.bf16.mxu0 0
    %292 = vmatpush1.bf16.msra.mxu0 0
    %293 = vmatprep.subr.bf16.mxu0 0
    %294 = vmatpush1.bf16.msra.mxu0 0
    %295 = vmatprep.subr.bf16.mxu0 0
    %296 = vmatpush1.bf16.msra.mxu0 0
    %297 = vmatprep.subr.bf16.mxu0 0
    %298 = vmatpush1.bf16.msra.mxu0 0
    %299 = vmatprep.mubr.bf16.mxu0 0
    %300 = vmatmul.mubr.bf16.gmra.mrb[0].mxu0 %v65
    %v301 = vpop.f32.mrb[0].mxu0
    %v302 = vadd.f32 0.0, %v301
    %v303 = vpop.f32.mrb[0].mxu0
    %v304 = vpop.f32.mrb[0].mxu0
    %v305 = vpop.f32.mrb[0].mxu0
    %306 = vdwg.mxu0
    %v307 = vadd.f32 %v63, %v261
    %v308 = vxor.u32 %v307, 2147483648
    %v309 = vmul.f32 %v308, 1.442695
    %v310 = vpow.pop %v309
    %v311 = vadd.f32 %v310, 1.0
    %v312 = vrcp.pop %v311
    %v313 = vmul.f32 1.0, %v312
    %v315 = vrot.slane %v63, 4
    %v317 = vadd.f32 %v315, %v263
    %v318 = vxor.u32 %v317, 2147483648
    %v319 = vmul.f32 %v318, 1.442695
    %v320 = vpow.pop %v319
    %v321 = vadd.f32 %v320, 1.0
    %v322 = vrcp.pop %v321
    %v323 = vmul.f32 1.0, %v322
    %v324 = vadd.f32 %v302, %v60
    %v325 = vmul.f32 %v313, %v324
    %v326 = vadd.f32 %v64, %v325
    %v327 = vtanh.pop %v326
    %v328 = vsub.f32 1.0, %v323
    %v329 = vmul.f32 %v328, %v327
    %v330 = vmul.f32 %v323, %v61
    %v331 = vadd.f32 %v329, %v330
    %332 = vst [vmem:[#allocation9] sm:$0xf] %v331
    %s333 = scalar_lea.vmem [#allocation3], 6
    %v334 = vld [vmem:[%s333] sm:$0x3f]
    %v335 = vunpack.c.l.bf16 %v334
    %v336 = vunpack.c.h.bf16 %v334
    %v337 = vpack.c.bf16 %v331, %v331
    %v338 = vld [vmem:[#allocation6] sm:$0xff]
    %v339 = vld [vmem:[#allocation6 + $0x8] sm:$0xf]
    %v340 = vld [vmem:[#allocation6 + $0xc] sm:$0xff]
    %v341 = vld [vmem:[#allocation6 + $0x14] sm:$0xf]
    %v342 = vld [vmem:[#allocation6 + $0x18] sm:$0xff]
    %v343 = vld [vmem:[#allocation6 + $0x20] sm:$0xf]
    %v344 = vld [vmem:[#allocation6 + $0x24] sm:$0xff]
    %v345 = vld [vmem:[#allocation6 + $0x2c] sm:$0xf]
    %v346 = vld [vmem:[#allocation6 + $0x30] sm:$0xff]
    %v347 = vld [vmem:[#allocation6 + $0x38] sm:$0xf]
    %v348 = vld [vmem:[#allocation6 + $0x3c] sm:$0xff]
    %v349 = vld [vmem:[#allocation6 + $0x44] sm:$0xf]
    %v350 = vld [vmem:[#allocation6 + $0x48] sm:$0xff]
    %v351 = vld [vmem:[#allocation6 + $0x50] sm:$0xf]
    %v352 = vld [vmem:[#allocation6 + $0x54] sm:$0xff]
    %v353 = vld [vmem:[#allocation6 + $0x5c] sm:$0xf]
    %v354 = vld [vmem:[#allocation6 + $0x60] sm:$0xff]
    %v355 = vld [vmem:[#allocation6 + $0x68] sm:$0xf]
    %v356 = vld [vmem:[#allocation6 + $0x6c] sm:$0xff]
    %v357 = vld [vmem:[#allocation6 + $0x74] sm:$0xf]
    %v358 = vld [vmem:[#allocation6 + $0x78] sm:$0xff]
    %v359 = vld [vmem:[#allocation6 + $0x80] sm:$0xf]
    %v360 = vld [vmem:[#allocation6 + $0x84] sm:$0xff]
    %v361 = vld [vmem:[#allocation6 + $0x8c] sm:$0xf]
    %v362 = vld [vmem:[#allocation6 + $0x90] sm:$0xff]
    %v363 = vld [vmem:[#allocation6 + $0x98] sm:$0xf]
    %v364 = vld [vmem:[#allocation6 + $0x9c] sm:$0xff]
    %v365 = vld [vmem:[#allocation6 + $0xa4] sm:$0xf]
    %v366 = vld [vmem:[#allocation6 + $0xa8] sm:$0xff]
    %v367 = vld [vmem:[#allocation6 + $0xb0] sm:$0xf]
    %v368 = vld [vmem:[#allocation6 + $0xb4] sm:$0xff]
    %v369 = vld [vmem:[#allocation6 + $0xbc] sm:$0xf]
    %v402 = vunpack.c.l.b16 %v338
    %v403 = vunpack.c.h.b16 %v338
    %v404 = vunpack.c.l.b16 %v339
    %v405 = vunpack.c.l.b16 %v340
    %v406 = vunpack.c.h.b16 %v340
    %v407 = vunpack.c.l.b16 %v341
    %v408 = vunpack.c.l.b16 %v342
    %v409 = vunpack.c.h.b16 %v342
    %v410 = vunpack.c.l.b16 %v343
    %v411 = vunpack.c.l.b16 %v344
    %v412 = vunpack.c.h.b16 %v344
    %v413 = vunpack.c.l.b16 %v345
    %v414 = vunpack.c.l.b16 %v346
    %v415 = vunpack.c.h.b16 %v346
    %v416 = vunpack.c.l.b16 %v347
    %v417 = vunpack.c.l.b16 %v348
    %v418 = vunpack.c.h.b16 %v348
    %v419 = vunpack.c.l.b16 %v349
    %v420 = vunpack.c.l.b16 %v350
    %v421 = vunpack.c.h.b16 %v350
    %v422 = vunpack.c.l.b16 %v351
    %v423 = vunpack.c.l.b16 %v352
    %v424 = vunpack.c.h.b16 %v352
    %v425 = vunpack.c.l.b16 %v353
    %v426 = vunpack.c.l.b16 %v354
    %v427 = vunpack.c.h.b16 %v354
    %v428 = vunpack.c.l.b16 %v355
    %v429 = vunpack.c.l.b16 %v356
    %v430 = vunpack.c.h.b16 %v356
    %v431 = vunpack.c.l.b16 %v357
    %v432 = vunpack.c.l.b16 %v358
    %v433 = vunpack.c.h.b16 %v358
    %v434 = vunpack.c.l.b16 %v359
    %v435 = vunpack.c.l.b16 %v360
    %v436 = vunpack.c.h.b16 %v360
    %v437 = vunpack.c.l.b16 %v361
    %v438 = vunpack.c.l.b16 %v362
    %v439 = vunpack.c.h.b16 %v362
    %v440 = vunpack.c.l.b16 %v363
    %v441 = vunpack.c.l.b16 %v364
    %v442 = vunpack.c.h.b16 %v364
    %v443 = vunpack.c.l.b16 %v365
    %v444 = vunpack.c.l.b16 %v366
    %v445 = vunpack.c.h.b16 %v366
    %v446 = vunpack.c.l.b16 %v367
    %v447 = vunpack.c.l.b16 %v368
    %v448 = vunpack.c.h.b16 %v368
    %v449 = vunpack.c.l.b16 %v369
    %v450 = vpack.c.b16 %v405, %v402
    %v451 = vpack.c.b16 %v406, %v403
    %v452 = vpack.c.b16 %v407, %v404
    %v453 = vpack.c.b16 %v411, %v408
    %v454 = vpack.c.b16 %v412, %v409
    %v455 = vpack.c.b16 %v413, %v410
    %v456 = vpack.c.b16 %v417, %v414
    %v457 = vpack.c.b16 %v418, %v415
    %v458 = vpack.c.b16 %v419, %v416
    %v459 = vpack.c.b16 %v423, %v420
    %v460 = vpack.c.b16 %v424, %v421
    %v461 = vpack.c.b16 %v425, %v422
    %v462 = vpack.c.b16 %v429, %v426
    %v463 = vpack.c.b16 %v430, %v427
    %v464 = vpack.c.b16 %v431, %v428
    %v465 = vpack.c.b16 %v435, %v432
    %v466 = vpack.c.b16 %v436, %v433
    %v467 = vpack.c.b16 %v437, %v434
    %v468 = vpack.c.b16 %v441, %v438
    %v469 = vpack.c.b16 %v442, %v439
    %v470 = vpack.c.b16 %v443, %v440
    %v471 = vpack.c.b16 %v447, %v444
    %v472 = vpack.c.b16 %v448, %v445
    %v473 = vpack.c.b16 %v449, %v446
    %498 = vmatprep.subr.bf16.mxu0 %v451
    %499 = vmatpush1.bf16.msra.mxu0 %v450
    %500 = vmatprep.subr.bf16.mxu0 %v454
    %501 = vmatpush1.bf16.msra.mxu0 %v453
    %502 = vmatprep.subr.bf16.mxu0 %v457
    %503 = vmatpush1.bf16.msra.mxu0 %v456
    %504 = vmatprep.subr.bf16.mxu0 %v460
    %505 = vmatpush1.bf16.msra.mxu0 %v459
    %506 = vmatprep.subr.bf16.mxu0 %v463
    %507 = vmatpush1.bf16.msra.mxu0 %v462
    %508 = vmatprep.subr.bf16.mxu0 %v466
    %509 = vmatpush1.bf16.msra.mxu0 %v465
    %510 = vmatprep.subr.bf16.mxu0 %v469
    %511 = vmatpush1.bf16.msra.mxu0 %v468
    %512 = vmatprep.subr.bf16.mxu0 %v472
    %513 = vmatpush1.bf16.msra.mxu0 %v471
    %514 = vmatprep.subr.bf16.mxu0 0
    %515 = vmatpush1.bf16.msra.mxu0 0
    %516 = vmatprep.subr.bf16.mxu0 0
    %517 = vmatpush1.bf16.msra.mxu0 0
    %518 = vmatprep.subr.bf16.mxu0 0
    %519 = vmatpush1.bf16.msra.mxu0 0
    %520 = vmatprep.subr.bf16.mxu0 0
    %521 = vmatpush1.bf16.msra.mxu0 0
    %522 = vmatprep.subr.bf16.mxu0 0
    %523 = vmatpush1.bf16.msra.mxu0 0
    %524 = vmatprep.subr.bf16.mxu0 0
    %525 = vmatpush1.bf16.msra.mxu0 0
    %526 = vmatprep.subr.bf16.mxu0 0
    %527 = vmatpush1.bf16.msra.mxu0 0
    %528 = vmatprep.subr.bf16.mxu0 0
    %529 = vmatpush1.bf16.msra.mxu0 0
    %530 = vmatprep.mubr.bf16.mxu0 0
    %531 = vmatmul.mubr.bf16.gmra.mrb[0].mxu0 %v337
    %v532 = vpop.f32.mrb[0].mxu0
    %v533 = vadd.f32 0.0, %v532
    %v534 = vpop.f32.mrb[0].mxu0
    %v535 = vadd.f32 0.0, %v534
    %v536 = vpop.f32.mrb[0].mxu0
    %v537 = vpop.f32.mrb[0].mxu0
    %538 = vdwg.mxu0
    %539 = vmatprep.subr.bf16.mxu0 0
    %540 = vmatpush1.bf16.msra.mxu0 %v452
    %541 = vmatprep.subr.bf16.mxu0 0
    %542 = vmatpush1.bf16.msra.mxu0 %v455
    %543 = vmatprep.subr.bf16.mxu0 0
    %544 = vmatpush1.bf16.msra.mxu0 %v458
    %545 = vmatprep.subr.bf16.mxu0 0
    %546 = vmatpush1.bf16.msra.mxu0 %v461
    %547 = vmatprep.subr.bf16.mxu0 0
    %548 = vmatpush1.bf16.msra.mxu0 %v464
    %549 = vmatprep.subr.bf16.mxu0 0
    %550 = vmatpush1.bf16.msra.mxu0 %v467
    %551 = vmatprep.subr.bf16.mxu0 0
    %552 = vmatpush1.bf16.msra.mxu0 %v470
    %553 = vmatprep.subr.bf16.mxu0 0
    %554 = vmatpush1.bf16.msra.mxu0 %v473
    %555 = vmatprep.subr.bf16.mxu0 0
    %556 = vmatpush1.bf16.msra.mxu0 0
    %557 = vmatprep.subr.bf16.mxu0 0
    %558 = vmatpush1.bf16.msra.mxu0 0
    %559 = vmatprep.subr.bf16.mxu0 0
    %560 = vmatpush1.bf16.msra.mxu0 0
    %561 = vmatprep.subr.bf16.mxu0 0
    %562 = vmatpush1.bf16.msra.mxu0 0
    %563 = vmatprep.subr.bf16.mxu0 0
    %564 = vmatpush1.bf16.msra.mxu0 0
    %565 = vmatprep.subr.bf16.mxu0 0
    %566 = vmatpush1.bf16.msra.mxu0 0
    %567 = vmatprep.subr.bf16.mxu0 0
    %568 = vmatpush1.bf16.msra.mxu0 0
    %569 = vmatprep.subr.bf16.mxu0 0
    %570 = vmatpush1.bf16.msra.mxu0 0
    %571 = vmatprep.mubr.bf16.mxu0 0
    %572 = vmatmul.mubr.bf16.gmra.mrb[0].mxu0 %v337
    %v573 = vpop.f32.mrb[0].mxu0
    %v574 = vadd.f32 0.0, %v573
    %v575 = vpop.f32.mrb[0].mxu0
    %v576 = vpop.f32.mrb[0].mxu0
    %v577 = vpop.f32.mrb[0].mxu0
    %578 = vdwg.mxu0
    %v579 = vadd.f32 %v335, %v533
    %v580 = vxor.u32 %v579, 2147483648
    %v581 = vmul.f32 %v580, 1.442695
    %v582 = vpow.pop %v581
    %v583 = vadd.f32 %v582, 1.0
    %v584 = vrcp.pop %v583
    %v585 = vmul.f32 1.0, %v584
    %v587 = vrot.slane %v335, 4
    %v589 = vadd.f32 %v587, %v535
    %v590 = vxor.u32 %v589, 2147483648
    %v591 = vmul.f32 %v590, 1.442695
    %v592 = vpow.pop %v591
    %v593 = vadd.f32 %v592, 1.0
    %v594 = vrcp.pop %v593
    %v595 = vmul.f32 1.0, %v594
    %v596 = vadd.f32 %v574, %v60
    %v597 = vmul.f32 %v585, %v596
    %v598 = vadd.f32 %v336, %v597
    %v599 = vtanh.pop %v598
    %v600 = vsub.f32 1.0, %v595
    %v601 = vmul.f32 %v600, %v599
    %v602 = vmul.f32 %v595, %v331
    %v603 = vadd.f32 %v601, %v602
    %s604 = scalar_lea.vmem [#allocation9], 4
    %605 = vst [vmem:[%s604] sm:$0xf] %v603
    %s606 = scalar_lea.vmem [#allocation3], 12
    %v607 = vld [vmem:[%s606] sm:$0x3f]
    %v608 = vunpack.c.l.bf16 %v607
    %v609 = vunpack.c.h.bf16 %v607
    %v610 = vpack.c.bf16 %v603, %v603
    %v611 = vld [vmem:[#allocation6] sm:$0xff]
    %v612 = vld [vmem:[#allocation6 + $0x8] sm:$0xf]
    %v613 = vld [vmem:[#allocation6 + $0xc] sm:$0xff]
    %v614 = vld [vmem:[#allocation6 + $0x14] sm:$0xf]
    %v615 = vld [vmem:[#allocation6 + $0x18] sm:$0xff]
    %v616 = vld [vmem:[#allocation6 + $0x20] sm:$0xf]
    %v617 = vld [vmem:[#allocation6 + $0x24] sm:$0xff]
    %v618 = vld [vmem:[#allocation6 + $0x2c] sm:$0xf]
    %v619 = vld [vmem:[#allocation6 + $0x30] sm:$0xff]
    %v620 = vld [vmem:[#allocation6 + $0x38] sm:$0xf]
    %v621 = vld [vmem:[#allocation6 + $0x3c] sm:$0xff]
    %v622 = vld [vmem:[#allocation6 + $0x44] sm:$0xf]
    %v623 = vld [vmem:[#allocation6 + $0x48] sm:$0xff]
    %v624 = vld [vmem:[#allocation6 + $0x50] sm:$0xf]
    %v625 = vld [vmem:[#allocation6 + $0x54] sm:$0xff]
    %v626 = vld [vmem:[#allocation6 + $0x5c] sm:$0xf]
    %v627 = vld [vmem:[#allocation6 + $0x60] sm:$0xff]
    %v628 = vld [vmem:[#allocation6 + $0x68] sm:$0xf]
    %v629 = vld [vmem:[#allocation6 + $0x6c] sm:$0xff]
    %v630 = vld [vmem:[#allocation6 + $0x74] sm:$0xf]
    %v631 = vld [vmem:[#allocation6 + $0x78] sm:$0xff]
    %v632 = vld [vmem:[#allocation6 + $0x80] sm:$0xf]
    %v633 = vld [vmem:[#allocation6 + $0x84] sm:$0xff]
    %v634 = vld [vmem:[#allocation6 + $0x8c] sm:$0xf]
    %v635 = vld [vmem:[#allocation6 + $0x90] sm:$0xff]
    %v636 = vld [vmem:[#allocation6 + $0x98] sm:$0xf]
    %v637 = vld [vmem:[#allocation6 + $0x9c] sm:$0xff]
    %v638 = vld [vmem:[#allocation6 + $0xa4] sm:$0xf]
    %v639 = vld [vmem:[#allocation6 + $0xa8] sm:$0xff]
    %v640 = vld [vmem:[#allocation6 + $0xb0] sm:$0xf]
    %v641 = vld [vmem:[#allocation6 + $0xb4] sm:$0xff]
    %v642 = vld [vmem:[#allocation6 + $0xbc] sm:$0xf]
    %v675 = vunpack.c.l.b16 %v611
    %v676 = vunpack.c.h.b16 %v611
    %v677 = vunpack.c.l.b16 %v612
    %v678 = vunpack.c.l.b16 %v613
    %v679 = vunpack.c.h.b16 %v613
    %v680 = vunpack.c.l.b16 %v614
    %v681 = vunpack.c.l.b16 %v615
    %v682 = vunpack.c.h.b16 %v615
    %v683 = vunpack.c.l.b16 %v616
    %v684 = vunpack.c.l.b16 %v617
    %v685 = vunpack.c.h.b16 %v617
    %v686 = vunpack.c.l.b16 %v618
    %v687 = vunpack.c.l.b16 %v619
    %v688 = vunpack.c.h.b16 %v619
    %v689 = vunpack.c.l.b16 %v620
    %v690 = vunpack.c.l.b16 %v621
    %v691 = vunpack.c.h.b16 %v621
    %v692 = vunpack.c.l.b16 %v622
    %v693 = vunpack.c.l.b16 %v623
    %v694 = vunpack.c.h.b16 %v623
    %v695 = vunpack.c.l.b16 %v624
    %v696 = vunpack.c.l.b16 %v625
    %v697 = vunpack.c.h.b16 %v625
    %v698 = vunpack.c.l.b16 %v626
    %v699 = vunpack.c.l.b16 %v627
    %v700 = vunpack.c.h.b16 %v627
    %v701 = vunpack.c.l.b16 %v628
    %v702 = vunpack.c.l.b16 %v629
    %v703 = vunpack.c.h.b16 %v629
    %v704 = vunpack.c.l.b16 %v630
    %v705 = vunpack.c.l.b16 %v631
    %v706 = vunpack.c.h.b16 %v631
    %v707 = vunpack.c.l.b16 %v632
    %v708 = vunpack.c.l.b16 %v633
    %v709 = vunpack.c.h.b16 %v633
    %v710 = vunpack.c.l.b16 %v634
    %v711 = vunpack.c.l.b16 %v635
    %v712 = vunpack.c.h.b16 %v635
    %v713 = vunpack.c.l.b16 %v636
    %v714 = vunpack.c.l.b16 %v637
    %v715 = vunpack.c.h.b16 %v637
    %v716 = vunpack.c.l.b16 %v638
    %v717 = vunpack.c.l.b16 %v639
    %v718 = vunpack.c.h.b16 %v639
    %v719 = vunpack.c.l.b16 %v640
    %v720 = vunpack.c.l.b16 %v641
    %v721 = vunpack.c.h.b16 %v641
    %v722 = vunpack.c.l.b16 %v642
    %v723 = vpack.c.b16 %v678, %v675
    %v724 = vpack.c.b16 %v679, %v676
    %v725 = vpack.c.b16 %v680, %v677
    %v726 = vpack.c.b16 %v684, %v681
    %v727 = vpack.c.b16 %v685, %v682
    %v728 = vpack.c.b16 %v686, %v683
    %v729 = vpack.c.b16 %v690, %v687
    %v730 = vpack.c.b16 %v691, %v688
    %v731 = vpack.c.b16 %v692, %v689
    %v732 = vpack.c.b16 %v696, %v693
    %v733 = vpack.c.b16 %v697, %v694
    %v734 = vpack.c.b16 %v698, %v695
    %v735 = vpack.c.b16 %v702, %v699
    %v736 = vpack.c.b16 %v703, %v700
    %v737 = vpack.c.b16 %v704, %v701
    %v738 = vpack.c.b16 %v708, %v705
    %v739 = vpack.c.b16 %v709, %v706
    %v740 = vpack.c.b16 %v710, %v707
    %v741 = vpack.c.b16 %v714, %v711
    %v742 = vpack.c.b16 %v715, %v712
    %v743 = vpack.c.b16 %v716, %v713
    %v744 = vpack.c.b16 %v720, %v717
    %v745 = vpack.c.b16 %v721, %v718
    %v746 = vpack.c.b16 %v722, %v719
    %771 = vmatprep.subr.bf16.mxu0 %v724
    %772 = vmatpush1.bf16.msra.mxu0 %v723
    %773 = vmatprep.subr.bf16.mxu0 %v727
    %774 = vmatpush1.bf16.msra.mxu0 %v726
    %775 = vmatprep.subr.bf16.mxu0 %v730
    %776 = vmatpush1.bf16.msra.mxu0 %v729
    %777 = vmatprep.subr.bf16.mxu0 %v733
    %778 = vmatpush1.bf16.msra.mxu0 %v732
    %779 = vmatprep.subr.bf16.mxu0 %v736
    %780 = vmatpush1.bf16.msra.mxu0 %v735
    %781 = vmatprep.subr.bf16.mxu0 %v739
    %782 = vmatpush1.bf16.msra.mxu0 %v738
    %783 = vmatprep.subr.bf16.mxu0 %v742
    %784 = vmatpush1.bf16.msra.mxu0 %v741
    %785 = vmatprep.subr.bf16.mxu0 %v745
    %786 = vmatpush1.bf16.msra.mxu0 %v744
    %787 = vmatprep.subr.bf16.mxu0 0
    %788 = vmatpush1.bf16.msra.mxu0 0
    %789 = vmatprep.subr.bf16.mxu0 0
    %790 = vmatpush1.bf16.msra.mxu0 0
    %791 = vmatprep.subr.bf16.mxu0 0
    %792 = vmatpush1.bf16.msra.mxu0 0
    %793 = vmatprep.subr.bf16.mxu0 0
    %794 = vmatpush1.bf16.msra.mxu0 0
    %795 = vmatprep.subr.bf16.mxu0 0
    %796 = vmatpush1.bf16.msra.mxu0 0
    %797 = vmatprep.subr.bf16.mxu0 0
    %798 = vmatpush1.bf16.msra.mxu0 0
    %799 = vmatprep.subr.bf16.mxu0 0
    %800 = vmatpush1.bf16.msra.mxu0 0
    %801 = vmatprep.subr.bf16.mxu0 0
    %802 = vmatpush1.bf16.msra.mxu0 0
    %803 = vmatprep.mubr.bf16.mxu0 0
    %804 = vmatmul.mubr.bf16.gmra.mrb[0].mxu0 %v610
    %v805 = vpop.f32.mrb[0].mxu0
    %v806 = vadd.f32 0.0, %v805
    %v807 = vpop.f32.mrb[0].mxu0
    %v808 = vadd.f32 0.0, %v807
    %v809 = vpop.f32.mrb[0].mxu0
    %v810 = vpop.f32.mrb[0].mxu0
    %811 = vdwg.mxu0
    %812 = vmatprep.subr.bf16.mxu0 0
    %813 = vmatpush1.bf16.msra.mxu0 %v725
    %814 = vmatprep.subr.bf16.mxu0 0
    %815 = vmatpush1.bf16.msra.mxu0 %v728
    %816 = vmatprep.subr.bf16.mxu0 0
    %817 = vmatpush1.bf16.msra.mxu0 %v731
    %818 = vmatprep.subr.bf16.mxu0 0
    %819 = vmatpush1.bf16.msra.mxu0 %v734
    %820 = vmatprep.subr.bf16.mxu0 0
    %821 = vmatpush1.bf16.msra.mxu0 %v737
    %822 = vmatprep.subr.bf16.mxu0 0
    %823 = vmatpush1.bf16.msra.mxu0 %v740
    %824 = vmatprep.subr.bf16.mxu0 0
    %825 = vmatpush1.bf16.msra.mxu0 %v743
    %826 = vmatprep.subr.bf16.mxu0 0
    %827 = vmatpush1.bf16.msra.mxu0 %v746
    %828 = vmatprep.subr.bf16.mxu0 0
    %829 = vmatpush1.bf16.msra.mxu0 0
    %830 = vmatprep.subr.bf16.mxu0 0
    %831 = vmatpush1.bf16.msra.mxu0 0
    %832 = vmatprep.subr.bf16.mxu0 0
    %833 = vmatpush1.bf16.msra.mxu0 0
    %834 = vmatprep.subr.bf16.mxu0 0
    %835 = vmatpush1.bf16.msra.mxu0 0
    %836 = vmatprep.subr.bf16.mxu0 0
    %837 = vmatpush1.bf16.msra.mxu0 0
    %838 = vmatprep.subr.bf16.mxu0 0
    %839 = vmatpush1.bf16.msra.mxu0 0
    %840 = vmatprep.subr.bf16.mxu0 0
    %841 = vmatpush1.bf16.msra.mxu0 0
    %842 = vmatprep.subr.bf16.mxu0 0
    %843 = vmatpush1.bf16.msra.mxu0 0
    %844 = vmatprep.mubr.bf16.mxu0 0
    %845 = vmatmul.mubr.bf16.gmra.mrb[0].mxu0 %v610
    %v846 = vpop.f32.mrb[0].mxu0
    %v847 = vadd.f32 0.0, %v846
    %v848 = vpop.f32.mrb[0].mxu0
    %v849 = vpop.f32.mrb[0].mxu0
    %v850 = vpop.f32.mrb[0].mxu0
    %851 = vdwg.mxu0
    %v852 = vadd.f32 %v608, %v806
    %v853 = vxor.u32 %v852, 2147483648
    %v854 = vmul.f32 %v853, 1.442695
    %v855 = vpow.pop %v854
    %v856 = vadd.f32 %v855, 1.0
    %v857 = vrcp.pop %v856
    %v858 = vmul.f32 1.0, %v857
    %v860 = vrot.slane %v608, 4
    %v862 = vadd.f32 %v860, %v808
    %v863 = vxor.u32 %v862, 2147483648
    %v864 = vmul.f32 %v863, 1.442695
    %v865 = vpow.pop %v864
    %v866 = vadd.f32 %v865, 1.0
    %v867 = vrcp.pop %v866
    %v868 = vmul.f32 1.0, %v867
    %v869 = vadd.f32 %v847, %v60
    %v870 = vmul.f32 %v858, %v869
    %v871 = vadd.f32 %v609, %v870
    %v872 = vtanh.pop %v871
    %v873 = vsub.f32 1.0, %v868
    %v874 = vmul.f32 %v873, %v872
    %v875 = vmul.f32 %v868, %v603
    %v876 = vadd.f32 %v874, %v875
    %s877 = scalar_lea.vmem [#allocation9], 8
    %878 = vst [vmem:[%s877] sm:$0xf] %v876
    %s879 = scalar_lea.vmem [#allocation3], 18
    %v880 = vld [vmem:[%s879] sm:$0x3f]
    %v881 = vunpack.c.l.bf16 %v880
    %v882 = vunpack.c.h.bf16 %v880
    %v883 = vpack.c.bf16 %v876, %v876
    %v884 = vld [vmem:[#allocation6] sm:$0xff]
    %v885 = vld [vmem:[#allocation6 + $0x8] sm:$0xf]
    %v886 = vld [vmem:[#allocation6 + $0xc] sm:$0xff]
    %v887 = vld [vmem:[#allocation6 + $0x14] sm:$0xf]
    %v888 = vld [vmem:[#allocation6 + $0x18] sm:$0xff]
    %v889 = vld [vmem:[#allocation6 + $0x20] sm:$0xf]
    %v890 = vld [vmem:[#allocation6 + $0x24] sm:$0xff]
    %v891 = vld [vmem:[#allocation6 + $0x2c] sm:$0xf]
    %v892 = vld [vmem:[#allocation6 + $0x30] sm:$0xff]
    %v893 = vld [vmem:[#allocation6 + $0x38] sm:$0xf]
    %v894 = vld [vmem:[#allocation6 + $0x3c] sm:$0xff]
    %v895 = vld [vmem:[#allocation6 + $0x44] sm:$0xf]
    %v896 = vld [vmem:[#allocation6 + $0x48] sm:$0xff]
    %v897 = vld [vmem:[#allocation6 + $0x50] sm:$0xf]
    %v898 = vld [vmem:[#allocation6 + $0x54] sm:$0xff]
    %v899 = vld [vmem:[#allocation6 + $0x5c] sm:$0xf]
    %v900 = vld [vmem:[#allocation6 + $0x60] sm:$0xff]
    %v901 = vld [vmem:[#allocation6 + $0x68] sm:$0xf]
    %v902 = vld [vmem:[#allocation6 + $0x6c] sm:$0xff]
    %v903 = vld [vmem:[#allocation6 + $0x74] sm:$0xf]
    %v904 = vld [vmem:[#allocation6 + $0x78] sm:$0xff]
    %v905 = vld [vmem:[#allocation6 + $0x80] sm:$0xf]
    %v906 = vld [vmem:[#allocation6 + $0x84] sm:$0xff]
    %v907 = vld [vmem:[#allocation6 + $0x8c] sm:$0xf]
    %v908 = vld [vmem:[#allocation6 + $0x90] sm:$0xff]
    %v909 = vld [vmem:[#allocation6 + $0x98] sm:$0xf]
    %v910 = vld [vmem:[#allocation6 + $0x9c] sm:$0xff]
    %v911 = vld [vmem:[#allocation6 + $0xa4] sm:$0xf]
    %v912 = vld [vmem:[#allocation6 + $0xa8] sm:$0xff]
    %v913 = vld [vmem:[#allocation6 + $0xb0] sm:$0xf]
    %v914 = vld [vmem:[#allocation6 + $0xb4] sm:$0xff]
    %v915 = vld [vmem:[#allocation6 + $0xbc] sm:$0xf]
    %v948 = vunpack.c.l.b16 %v884
    %v949 = vunpack.c.h.b16 %v884
    %v950 = vunpack.c.l.b16 %v885
    %v951 = vunpack.c.l.b16 %v886
    %v952 = vunpack.c.h.b16 %v886
    %v953 = vunpack.c.l.b16 %v887
    %v954 = vunpack.c.l.b16 %v888
    %v955 = vunpack.c.h.b16 %v888
    %v956 = vunpack.c.l.b16 %v889
    %v957 = vunpack.c.l.b16 %v890
    %v958 = vunpack.c.h.b16 %v890
    %v959 = vunpack.c.l.b16 %v891
    %v960 = vunpack.c.l.b16 %v892
    %v961 = vunpack.c.h.b16 %v892
    %v962 = vunpack.c.l.b16 %v893
    %v963 = vunpack.c.l.b16 %v894
    %v964 = vunpack.c.h.b16 %v894
    %v965 = vunpack.c.l.b16 %v895
    %v966 = vunpack.c.l.b16 %v896
    %v967 = vunpack.c.h.b16 %v896
    %v968 = vunpack.c.l.b16 %v897
    %v969 = vunpack.c.l.b16 %v898
    %v970 = vunpack.c.h.b16 %v898
    %v971 = vunpack.c.l.b16 %v899
    %v972 = vunpack.c.l.b16 %v900
    %v973 = vunpack.c.h.b16 %v900
    %v974 = vunpack.c.l.b16 %v901
    %v975 = vunpack.c.l.b16 %v902
    %v976 = vunpack.c.h.b16 %v902
    %v977 = vunpack.c.l.b16 %v903
    %v978 = vunpack.c.l.b16 %v904
    %v979 = vunpack.c.h.b16 %v904
    %v980 = vunpack.c.l.b16 %v905
    %v981 = vunpack.c.l.b16 %v906
    %v982 = vunpack.c.h.b16 %v906
    %v983 = vunpack.c.l.b16 %v907
    %v984 = vunpack.c.l.b16 %v908
    %v985 = vunpack.c.h.b16 %v908
    %v986 = vunpack.c.l.b16 %v909
    %v987 = vunpack.c.l.b16 %v910
    %v988 = vunpack.c.h.b16 %v910
    %v989 = vunpack.c.l.b16 %v911
    %v990 = vunpack.c.l.b16 %v912
    %v991 = vunpack.c.h.b16 %v912
    %v992 = vunpack.c.l.b16 %v913
    %v993 = vunpack.c.l.b16 %v914
    %v994 = vunpack.c.h.b16 %v914
    %v995 = vunpack.c.l.b16 %v915
    %v996 = vpack.c.b16 %v951, %v948
    %v997 = vpack.c.b16 %v952, %v949
    %v998 = vpack.c.b16 %v953, %v950
    %v999 = vpack.c.b16 %v957, %v954
    %v1000 = vpack.c.b16 %v958, %v955
    %v1001 = vpack.c.b16 %v959, %v956
    %v1002 = vpack.c.b16 %v963, %v960
    %v1003 = vpack.c.b16 %v964, %v961
    %v1004 = vpack.c.b16 %v965, %v962
    %v1005 = vpack.c.b16 %v969, %v966
    %v1006 = vpack.c.b16 %v970, %v967
    %v1007 = vpack.c.b16 %v971, %v968
    %v1008 = vpack.c.b16 %v975, %v972
    %v1009 = vpack.c.b16 %v976, %v973
    %v1010 = vpack.c.b16 %v977, %v974
    %v1011 = vpack.c.b16 %v981, %v978
    %v1012 = vpack.c.b16 %v982, %v979
    %v1013 = vpack.c.b16 %v983, %v980
    %v1014 = vpack.c.b16 %v987, %v984
    %v1015 = vpack.c.b16 %v988, %v985
    %v1016 = vpack.c.b16 %v989, %v986
    %v1017 = vpack.c.b16 %v993, %v990
    %v1018 = vpack.c.b16 %v994, %v991
    %v1019 = vpack.c.b16 %v995, %v992
    %1044 = vmatprep.subr.bf16.mxu0 %v997
    %1045 = vmatpush1.bf16.msra.mxu0 %v996
    %1046 = vmatprep.subr.bf16.mxu0 %v1000
    %1047 = vmatpush1.bf16.msra.mxu0 %v999
    %1048 = vmatprep.subr.bf16.mxu0 %v1003
    %1049 = vmatpush1.bf16.msra.mxu0 %v1002
    %1050 = vmatprep.subr.bf16.mxu0 %v1006
    %1051 = vmatpush1.bf16.msra.mxu0 %v1005
    %1052 = vmatprep.subr.bf16.mxu0 %v1009
    %1053 = vmatpush1.bf16.msra.mxu0 %v1008
    %1054 = vmatprep.subr.bf16.mxu0 %v1012
    %1055 = vmatpush1.bf16.msra.mxu0 %v1011
    %1056 = vmatprep.subr.bf16.mxu0 %v1015
    %1057 = vmatpush1.bf16.msra.mxu0 %v1014
    %1058 = vmatprep.subr.bf16.mxu0 %v1018
    %1059 = vmatpush1.bf16.msra.mxu0 %v1017
    %1060 = vmatprep.subr.bf16.mxu0 0
    %1061 = vmatpush1.bf16.msra.mxu0 0
    %1062 = vmatprep.subr.bf16.mxu0 0
    %1063 = vmatpush1.bf16.msra.mxu0 0
    %1064 = vmatprep.subr.bf16.mxu0 0
    %1065 = vmatpush1.bf16.msra.mxu0 0
    %1066 = vmatprep.subr.bf16.mxu0 0
    %1067 = vmatpush1.bf16.msra.mxu0 0
    %1068 = vmatprep.subr.bf16.mxu0 0
    %1069 = vmatpush1.bf16.msra.mxu0 0
    %1070 = vmatprep.subr.bf16.mxu0 0
    %1071 = vmatpush1.bf16.msra.mxu0 0
    %1072 = vmatprep.subr.bf16.mxu0 0
    %1073 = vmatpush1.bf16.msra.mxu0 0
    %1074 = vmatprep.subr.bf16.mxu0 0
    %1075 = vmatpush1.bf16.msra.mxu0 0
    %1076 = vmatprep.mubr.bf16.mxu0 0
    %1077 = vmatmul.mubr.bf16.gmra.mrb[0].mxu0 %v883
    %v1078 = vpop.f32.mrb[0].mxu0
    %v1079 = vadd.f32 0.0, %v1078
    %v1080 = vpop.f32.mrb[0].mxu0
    %v1081 = vadd.f32 0.0, %v1080
    %v1082 = vpop.f32.mrb[0].mxu0
    %v1083 = vpop.f32.mrb[0].mxu0
    %1084 = vdwg.mxu0
    %1085 = vmatprep.subr.bf16.mxu0 0
    %1086 = vmatpush1.bf16.msra.mxu0 %v998
    %1087 = vmatprep.subr.bf16.mxu0 0
    %1088 = vmatpush1.bf16.msra.mxu0 %v1001
    %1089 = vmatprep.subr.bf16.mxu0 0
    %1090 = vmatpush1.bf16.msra.mxu0 %v1004
    %1091 = vmatprep.subr.bf16.mxu0 0
    %1092 = vmatpush1.bf16.msra.mxu0 %v1007
    %1093 = vmatprep.subr.bf16.mxu0 0
    %1094 = vmatpush1.bf16.msra.mxu0 %v1010
    %1095 = vmatprep.subr.bf16.mxu0 0
    %1096 = vmatpush1.bf16.msra.mxu0 %v1013
    %1097 = vmatprep.subr.bf16.mxu0 0
    %1098 = vmatpush1.bf16.msra.mxu0 %v1016
    %1099 = vmatprep.subr.bf16.mxu0 0
    %1100 = vmatpush1.bf16.msra.mxu0 %v1019
    %1101 = vmatprep.subr.bf16.mxu0 0
    %1102 = vmatpush1.bf16.msra.mxu0 0
    %1103 = vmatprep.subr.bf16.mxu0 0
    %1104 = vmatpush1.bf16.msra.mxu0 0
    %1105 = vmatprep.subr.bf16.mxu0 0
    %1106 = vmatpush1.bf16.msra.mxu0 0
    %1107 = vmatprep.subr.bf16.mxu0 0
    %1108 = vmatpush1.bf16.msra.mxu0 0
    %1109 = vmatprep.subr.bf16.mxu0 0
    %1110 = vmatpush1.bf16.msra.mxu0 0
    %1111 = vmatprep.subr.bf16.mxu0 0
    %1112 = vmatpush1.bf16.msra.mxu0 0
    %1113 = vmatprep.subr.bf16.mxu0 0
    %1114 = vmatpush1.bf16.msra.mxu0 0
    %1115 = vmatprep.subr.bf16.mxu0 0
    %1116 = vmatpush1.bf16.msra.mxu0 0
    %1117 = vmatprep.mubr.bf16.mxu0 0
    %1118 = vmatmul.mubr.bf16.gmra.mrb[0].mxu0 %v883
    %v1119 = vpop.f32.mrb[0].mxu0
    %v1120 = vadd.f32 0.0, %v1119
    %v1121 = vpop.f32.mrb[0].mxu0
    %v1122 = vpop.f32.mrb[0].mxu0
    %v1123 = vpop.f32.mrb[0].mxu0
    %1124 = vdwg.mxu0
    %v1125 = vadd.f32 %v881, %v1079
    %v1126 = vxor.u32 %v1125, 2147483648
    %v1127 = vmul.f32 %v1126, 1.442695
    %v1128 = vpow.pop %v1127
    %v1129 = vadd.f32 %v1128, 1.0
    %v1130 = vrcp.pop %v1129
    %v1131 = vmul.f32 1.0, %v1130
    %v1133 = vrot.slane %v881, 4
    %v1135 = vadd.f32 %v1133, %v1081
    %v1136 = vxor.u32 %v1135, 2147483648
    %v1137 = vmul.f32 %v1136, 1.442695
    %v1138 = vpow.pop %v1137
    %v1139 = vadd.f32 %v1138, 1.0
    %v1140 = vrcp.pop %v1139
    %v1141 = vmul.f32 1.0, %v1140
    %v1142 = vadd.f32 %v1120, %v60
    %v1143 = vmul.f32 %v1131, %v1142
    %v1144 = vadd.f32 %v882, %v1143
    %v1145 = vtanh.pop %v1144
    %v1146 = vsub.f32 1.0, %v1141
    %v1147 = vmul.f32 %v1146, %v1145
    %v1148 = vmul.f32 %v1141, %v876
    %v1149 = vadd.f32 %v1147, %v1148
    %s1150 = scalar_lea.vmem [#allocation9], 12
    %1151 = vst [vmem:[%s1150] sm:$0xf] %v1149
    %s1152 = scalar_lea.vmem [#allocation3], 24
    %v1153 = vld [vmem:[%s1152] sm:$0x3f]
    %v1154 = vunpack.c.l.bf16 %v1153
    %v1155 = vunpack.c.h.bf16 %v1153
    %v1156 = vpack.c.bf16 %v1149, %v1149
    %v1157 = vld [vmem:[#allocation6] sm:$0xff]
    %v1158 = vld [vmem:[#allocation6 + $0x8] sm:$0xf]
    %v1159 = vld [vmem:[#allocation6 + $0xc] sm:$0xff]
    %v1160 = vld [vmem:[#allocation6 + $0x14] sm:$0xf]
    %v1161 = vld [vmem:[#allocation6 + $0x18] sm:$0xff]
    %v1162 = vld [vmem:[#allocation6 + $0x20] sm:$0xf]
    %v1163 = vld [vmem:[#allocation6 + $0x24] sm:$0xff]
    %v1164 = vld [vmem:[#allocation6 + $0x2c] sm:$0xf]
    %v1165 = vld [vmem:[#allocation6 + $0x30] sm:$0xff]
    %v1166 = vld [vmem:[#allocation6 + $0x38] sm:$0xf]
    %v1167 = vld [vmem:[#allocation6 + $0x3c] sm:$0xff]
    %v1168 = vld [vmem:[#allocation6 + $0x44] sm:$0xf]
    %v1169 = vld [vmem:[#allocation6 + $0x48] sm:$0xff]
    %v1170 = vld [vmem:[#allocation6 + $0x50] sm:$0xf]
    %v1171 = vld [vmem:[#allocation6 + $0x54] sm:$0xff]
    %v1172 = vld [vmem:[#allocation6 + $0x5c] sm:$0xf]
    %v1173 = vld [vmem:[#allocation6 + $0x60] sm:$0xff]
    %v1174 = vld [vmem:[#allocation6 + $0x68] sm:$0xf]
    %v1175 = vld [vmem:[#allocation6 + $0x6c] sm:$0xff]
    %v1176 = vld [vmem:[#allocation6 + $0x74] sm:$0xf]
    %v1177 = vld [vmem:[#allocation6 + $0x78] sm:$0xff]
    %v1178 = vld [vmem:[#allocation6 + $0x80] sm:$0xf]
    %v1179 = vld [vmem:[#allocation6 + $0x84] sm:$0xff]
    %v1180 = vld [vmem:[#allocation6 + $0x8c] sm:$0xf]
    %v1181 = vld [vmem:[#allocation6 + $0x90] sm:$0xff]
    %v1182 = vld [vmem:[#allocation6 + $0x98] sm:$0xf]
    %v1183 = vld [vmem:[#allocation6 + $0x9c] sm:$0xff]
    %v1184 = vld [vmem:[#allocation6 + $0xa4] sm:$0xf]
    %v1185 = vld [vmem:[#allocation6 + $0xa8] sm:$0xff]
    %v1186 = vld [vmem:[#allocation6 + $0xb0] sm:$0xf]
    %v1187 = vld [vmem:[#allocation6 + $0xb4] sm:$0xff]
    %v1188 = vld [vmem:[#allocation6 + $0xbc] sm:$0xf]
    %v1221 = vunpack.c.l.b16 %v1157
    %v1222 = vunpack.c.h.b16 %v1157
    %v1223 = vunpack.c.l.b16 %v1158
    %v1224 = vunpack.c.l.b16 %v1159
    %v1225 = vunpack.c.h.b16 %v1159
    %v1226 = vunpack.c.l.b16 %v1160
    %v1227 = vunpack.c.l.b16 %v1161
    %v1228 = vunpack.c.h.b16 %v1161
    %v1229 = vunpack.c.l.b16 %v1162
    %v1230 = vunpack.c.l.b16 %v1163
    %v1231 = vunpack.c.h.b16 %v1163
    %v1232 = vunpack.c.l.b16 %v1164
    %v1233 = vunpack.c.l.b16 %v1165
    %v1234 = vunpack.c.h.b16 %v1165
    %v1235 = vunpack.c.l.b16 %v1166
    %v1236 = vunpack.c.l.b16 %v1167
    %v1237 = vunpack.c.h.b16 %v1167
    %v1238 = vunpack.c.l.b16 %v1168
    %v1239 = vunpack.c.l.b16 %v1169
    %v1240 = vunpack.c.h.b16 %v1169
    %v1241 = vunpack.c.l.b16 %v1170
    %v1242 = vunpack.c.l.b16 %v1171
    %v1243 = vunpack.c.h.b16 %v1171
    %v1244 = vunpack.c.l.b16 %v1172
    %v1245 = vunpack.c.l.b16 %v1173
    %v1246 = vunpack.c.h.b16 %v1173
    %v1247 = vunpack.c.l.b16 %v1174
    %v1248 = vunpack.c.l.b16 %v1175
    %v1249 = vunpack.c.h.b16 %v1175
    %v1250 = vunpack.c.l.b16 %v1176
    %v1251 = vunpack.c.l.b16 %v1177
    %v1252 = vunpack.c.h.b16 %v1177
    %v1253 = vunpack.c.l.b16 %v1178
    %v1254 = vunpack.c.l.b16 %v1179
    %v1255 = vunpack.c.h.b16 %v1179
    %v1256 = vunpack.c.l.b16 %v1180
    %v1257 = vunpack.c.l.b16 %v1181
    %v1258 = vunpack.c.h.b16 %v1181
    %v1259 = vunpack.c.l.b16 %v1182
    %v1260 = vunpack.c.l.b16 %v1183
    %v1261 = vunpack.c.h.b16 %v1183
    %v1262 = vunpack.c.l.b16 %v1184
    %v1263 = vunpack.c.l.b16 %v1185
    %v1264 = vunpack.c.h.b16 %v1185
    %v1265 = vunpack.c.l.b16 %v1186
    %v1266 = vunpack.c.l.b16 %v1187
    %v1267 = vunpack.c.h.b16 %v1187
    %v1268 = vunpack.c.l.b16 %v1188
    %v1269 = vpack.c.b16 %v1224, %v1221
    %v1270 = vpack.c.b16 %v1225, %v1222
    %v1271 = vpack.c.b16 %v1226, %v1223
    %v1272 = vpack.c.b16 %v1230, %v1227
    %v1273 = vpack.c.b16 %v1231, %v1228
    %v1274 = vpack.c.b16 %v1232, %v1229
    %v1275 = vpack.c.b16 %v1236, %v1233
    %v1276 = vpack.c.b16 %v1237, %v1234
    %v1277 = vpack.c.b16 %v1238, %v1235
    %v1278 = vpack.c.b16 %v1242, %v1239
    %v1279 = vpack.c.b16 %v1243, %v1240
    %v1280 = vpack.c.b16 %v1244, %v1241
    %v1281 = vpack.c.b16 %v1248, %v1245
    %v1282 = vpack.c.b16 %v1249, %v1246
    %v1283 = vpack.c.b16 %v1250, %v1247
    %v1284 = vpack.c.b16 %v1254, %v1251
    %v1285 = vpack.c.b16 %v1255, %v1252
    %v1286 = vpack.c.b16 %v1256, %v1253
    %v1287 = vpack.c.b16 %v1260, %v1257
    %v1288 = vpack.c.b16 %v1261, %v1258
    %v1289 = vpack.c.b16 %v1262, %v1259
    %v1290 = vpack.c.b16 %v1266, %v1263
    %v1291 = vpack.c.b16 %v1267, %v1264
    %v1292 = vpack.c.b16 %v1268, %v1265
    %1317 = vmatprep.subr.bf16.mxu0 %v1270
    %1318 = vmatpush1.bf16.msra.mxu0 %v1269
    %1319 = vmatprep.subr.bf16.mxu0 %v1273
    %1320 = vmatpush1.bf16.msra.mxu0 %v1272
    %1321 = vmatprep.subr.bf16.mxu0 %v1276
    %1322 = vmatpush1.bf16.msra.mxu0 %v1275
    %1323 = vmatprep.subr.bf16.mxu0 %v1279
    %1324 = vmatpush1.bf16.msra.mxu0 %v1278
    %1325 = vmatprep.subr.bf16.mxu0 %v1282
    %1326 = vmatpush1.bf16.msra.mxu0 %v1281
    %1327 = vmatprep.subr.bf16.mxu0 %v1285
    %1328 = vmatpush1.bf16.msra.mxu0 %v1284
    %1329 = vmatprep.subr.bf16.mxu0 %v1288
    %1330 = vmatpush1.bf16.msra.mxu0 %v1287
    %1331 = vmatprep.subr.bf16.mxu0 %v1291
    %1332 = vmatpush1.bf16.msra.mxu0 %v1290
    %1333 = vmatprep.subr.bf16.mxu0 0
    %1334 = vmatpush1.bf16.msra.mxu0 0
    %1335 = vmatprep.subr.bf16.mxu0 0
    %1336 = vmatpush1.bf16.msra.mxu0 0
    %1337 = vmatprep.subr.bf16.mxu0 0
    %1338 = vmatpush1.bf16.msra.mxu0 0
    %1339 = vmatprep.subr.bf16.mxu0 0
    %1340 = vmatpush1.bf16.msra.mxu0 0
    %1341 = vmatprep.subr.bf16.mxu0 0
    %1342 = vmatpush1.bf16.msra.mxu0 0
    %1343 = vmatprep.subr.bf16.mxu0 0
    %1344 = vmatpush1.bf16.msra.mxu0 0
    %1345 = vmatprep.subr.bf16.mxu0 0
    %1346 = vmatpush1.bf16.msra.mxu0 0
    %1347 = vmatprep.subr.bf16.mxu0 0
    %1348 = vmatpush1.bf16.msra.mxu0 0
    %1349 = vmatprep.mubr.bf16.mxu0 0
    %1350 = vmatmul.mubr.bf16.gmra.mrb[0].mxu0 %v1156
    %v1351 = vpop.f32.mrb[0].mxu0
    %v1352 = vadd.f32 0.0, %v1351
    %v1353 = vpop.f32.mrb[0].mxu0
    %v1354 = vadd.f32 0.0, %v1353
    %v1355 = vpop.f32.mrb[0].mxu0
    %v1356 = vpop.f32.mrb[0].mxu0
    %1357 = vdwg.mxu0
    %1358 = vmatprep.subr.bf16.mxu0 0
    %1359 = vmatpush1.bf16.msra.mxu0 %v1271
    %1360 = vmatprep.subr.bf16.mxu0 0
    %1361 = vmatpush1.bf16.msra.mxu0 %v1274
    %1362 = vmatprep.subr.bf16.mxu0 0
    %1363 = vmatpush1.bf16.msra.mxu0 %v1277
    %1364 = vmatprep.subr.bf16.mxu0 0
    %1365 = vmatpush1.bf16.msra.mxu0 %v1280
    %1366 = vmatprep.subr.bf16.mxu0 0
    %1367 = vmatpush1.bf16.msra.mxu0 %v1283
    %1368 = vmatprep.subr.bf16.mxu0 0
    %1369 = vmatpush1.bf16.msra.mxu0 %v1286
    %1370 = vmatprep.subr.bf16.mxu0 0
    %1371 = vmatpush1.bf16.msra.mxu0 %v1289
    %1372 = vmatprep.subr.bf16.mxu0 0
    %1373 = vmatpush1.bf16.msra.mxu0 %v1292
    %1374 = vmatprep.subr.bf16.mxu0 0
    %1375 = vmatpush1.bf16.msra.mxu0 0
    %1376 = vmatprep.subr.bf16.mxu0 0
    %1377 = vmatpush1.bf16.msra.mxu0 0
    %1378 = vmatprep.subr.bf16.mxu0 0
    %1379 = vmatpush1.bf16.msra.mxu0 0
    %1380 = vmatprep.subr.bf16.mxu0 0
    %1381 = vmatpush1.bf16.msra.mxu0 0
    %1382 = vmatprep.subr.bf16.mxu0 0
    %1383 = vmatpush1.bf16.msra.mxu0 0
    %1384 = vmatprep.subr.bf16.mxu0 0
    %1385 = vmatpush1.bf16.msra.mxu0 0
    %1386 = vmatprep.subr.bf16.mxu0 0
    %1387 = vmatpush1.bf16.msra.mxu0 0
    %1388 = vmatprep.subr.bf16.mxu0 0
    %1389 = vmatpush1.bf16.msra.mxu0 0
    %1390 = vmatprep.mubr.bf16.mxu0 0
    %1391 = vmatmul.mubr.bf16.gmra.mrb[0].mxu0 %v1156
    %v1392 = vpop.f32.mrb[0].mxu0
    %v1393 = vadd.f32 0.0, %v1392
    %v1394 = vpop.f32.mrb[0].mxu0
    %v1395 = vpop.f32.mrb[0].mxu0
    %v1396 = vpop.f32.mrb[0].mxu0
    %1397 = vdwg.mxu0
    %v1398 = vadd.f32 %v1154, %v1352
    %v1399 = vxor.u32 %v1398, 2147483648
    %v1400 = vmul.f32 %v1399, 1.442695
    %v1401 = vpow.pop %v1400
    %v1402 = vadd.f32 %v1401, 1.0
    %v1403 = vrcp.pop %v1402
    %v1404 = vmul.f32 1.0, %v1403
    %v1406 = vrot.slane %v1154, 4
    %v1408 = vadd.f32 %v1406, %v1354
    %v1409 = vxor.u32 %v1408, 2147483648
    %v1410 = vmul.f32 %v1409, 1.442695
    %v1411 = vpow.pop %v1410
    %v1412 = vadd.f32 %v1411, 1.0
    %v1413 = vrcp.pop %v1412
    %v1414 = vmul.f32 1.0, %v1413
    %v1415 = vadd.f32 %v1393, %v60
    %v1416 = vmul.f32 %v1404, %v1415
    %v1417 = vadd.f32 %v1155, %v1416
    %v1418 = vtanh.pop %v1417
    %v1419 = vsub.f32 1.0, %v1414
    %v1420 = vmul.f32 %v1419, %v1418
    %v1421 = vmul.f32 %v1414, %v1149
    %v1422 = vadd.f32 %v1420, %v1421
    %s1423 = scalar_lea.vmem [#allocation9], 16
    %1424 = vst [vmem:[%s1423] sm:$0xf] %v1422
    %s1425 = scalar_lea.vmem [#allocation3], 30
    %v1426 = vld [vmem:[%s1425] sm:$0x3f]
    %v1427 = vunpack.c.l.bf16 %v1426
    %v1428 = vunpack.c.h.bf16 %v1426
    %v1429 = vpack.c.bf16 %v1422, %v1422
    %v1430 = vld [vmem:[#allocation6] sm:$0xff]
    %v1431 = vld [vmem:[#allocation6 + $0x8] sm:$0xf]
    %v1432 = vld [vmem:[#allocation6 + $0xc] sm:$0xff]
    %v1433 = vld [vmem:[#allocation6 + $0x14] sm:$0xf]
    %v1434 = vld [vmem:[#allocation6 + $0x18] sm:$0xff]
    %v1435 = vld [vmem:[#allocation6 + $0x20] sm:$0xf]
    %v1436 = vld [vmem:[#allocation6 + $0x24] sm:$0xff]
    %v1437 = vld [vmem:[#allocation6 + $0x2c] sm:$0xf]
    %v1438 = vld [vmem:[#allocation6 + $0x30] sm:$0xff]
    %v1439 = vld [vmem:[#allocation6 + $0x38] sm:$0xf]
    %v1440 = vld [vmem:[#allocation6 + $0x3c] sm:$0xff]
    %v1441 = vld [vmem:[#allocation6 + $0x44] sm:$0xf]
    %v1442 = vld [vmem:[#allocation6 + $0x48] sm:$0xff]
    %v1443 = vld [vmem:[#allocation6 + $0x50] sm:$0xf]
    %v1444 = vld [vmem:[#allocation6 + $0x54] sm:$0xff]
    %v1445 = vld [vmem:[#allocation6 + $0x5c] sm:$0xf]
    %v1446 = vld [vmem:[#allocation6 + $0x60] sm:$0xff]
    %v1447 = vld [vmem:[#allocation6 + $0x68] sm:$0xf]
    %v1448 = vld [vmem:[#allocation6 + $0x6c] sm:$0xff]
    %v1449 = vld [vmem:[#allocation6 + $0x74] sm:$0xf]
    %v1450 = vld [vmem:[#allocation6 + $0x78] sm:$0xff]
    %v1451 = vld [vmem:[#allocation6 + $0x80] sm:$0xf]
    %v1452 = vld [vmem:[#allocation6 + $0x84] sm:$0xff]
    %v1453 = vld [vmem:[#allocation6 + $0x8c] sm:$0xf]
    %v1454 = vld [vmem:[#allocation6 + $0x90] sm:$0xff]
    %v1455 = vld [vmem:[#allocation6 + $0x98] sm:$0xf]
    %v1456 = vld [vmem:[#allocation6 + $0x9c] sm:$0xff]
    %v1457 = vld [vmem:[#allocation6 + $0xa4] sm:$0xf]
    %v1458 = vld [vmem:[#allocation6 + $0xa8] sm:$0xff]
    %v1459 = vld [vmem:[#allocation6 + $0xb0] sm:$0xf]
    %v1460 = vld [vmem:[#allocation6 + $0xb4] sm:$0xff]
    %v1461 = vld [vmem:[#allocation6 + $0xbc] sm:$0xf]
    %v1494 = vunpack.c.l.b16 %v1430
    %v1495 = vunpack.c.h.b16 %v1430
    %v1496 = vunpack.c.l.b16 %v1431
    %v1497 = vunpack.c.l.b16 %v1432
    %v1498 = vunpack.c.h.b16 %v1432
    %v1499 = vunpack.c.l.b16 %v1433
    %v1500 = vunpack.c.l.b16 %v1434
    %v1501 = vunpack.c.h.b16 %v1434
    %v1502 = vunpack.c.l.b16 %v1435
    %v1503 = vunpack.c.l.b16 %v1436
    %v1504 = vunpack.c.h.b16 %v1436
    %v1505 = vunpack.c.l.b16 %v1437
    %v1506 = vunpack.c.l.b16 %v1438
    %v1507 = vunpack.c.h.b16 %v1438
    %v1508 = vunpack.c.l.b16 %v1439
    %v1509 = vunpack.c.l.b16 %v1440
    %v1510 = vunpack.c.h.b16 %v1440
    %v1511 = vunpack.c.l.b16 %v1441
    %v1512 = vunpack.c.l.b16 %v1442
    %v1513 = vunpack.c.h.b16 %v1442
    %v1514 = vunpack.c.l.b16 %v1443
    %v1515 = vunpack.c.l.b16 %v1444
    %v1516 = vunpack.c.h.b16 %v1444
    %v1517 = vunpack.c.l.b16 %v1445
    %v1518 = vunpack.c.l.b16 %v1446
    %v1519 = vunpack.c.h.b16 %v1446
    %v1520 = vunpack.c.l.b16 %v1447
    %v1521 = vunpack.c.l.b16 %v1448
    %v1522 = vunpack.c.h.b16 %v1448
    %v1523 = vunpack.c.l.b16 %v1449
    %v1524 = vunpack.c.l.b16 %v1450
    %v1525 = vunpack.c.h.b16 %v1450
    %v1526 = vunpack.c.l.b16 %v1451
    %v1527 = vunpack.c.l.b16 %v1452
    %v1528 = vunpack.c.h.b16 %v1452
    %v1529 = vunpack.c.l.b16 %v1453
    %v1530 = vunpack.c.l.b16 %v1454
    %v1531 = vunpack.c.h.b16 %v1454
    %v1532 = vunpack.c.l.b16 %v1455
    %v1533 = vunpack.c.l.b16 %v1456
    %v1534 = vunpack.c.h.b16 %v1456
    %v1535 = vunpack.c.l.b16 %v1457
    %v1536 = vunpack.c.l.b16 %v1458
    %v1537 = vunpack.c.h.b16 %v1458
    %v1538 = vunpack.c.l.b16 %v1459
    %v1539 = vunpack.c.l.b16 %v1460
    %v1540 = vunpack.c.h.b16 %v1460
    %v1541 = vunpack.c.l.b16 %v1461
    %v1542 = vpack.c.b16 %v1497, %v1494
    %v1543 = vpack.c.b16 %v1498, %v1495
    %v1544 = vpack.c.b16 %v1499, %v1496
    %v1545 = vpack.c.b16 %v1503, %v1500
    %v1546 = vpack.c.b16 %v1504, %v1501
    %v1547 = vpack.c.b16 %v1505, %v1502
    %v1548 = vpack.c.b16 %v1509, %v1506
    %v1549 = vpack.c.b16 %v1510, %v1507
    %v1550 = vpack.c.b16 %v1511, %v1508
    %v1551 = vpack.c.b16 %v1515, %v1512
    %v1552 = vpack.c.b16 %v1516, %v1513
    %v1553 = vpack.c.b16 %v1517, %v1514
    %v1554 = vpack.c.b16 %v1521, %v1518
    %v1555 = vpack.c.b16 %v1522, %v1519
    %v1556 = vpack.c.b16 %v1523, %v1520
    %v1557 = vpack.c.b16 %v1527, %v1524
    %v1558 = vpack.c.b16 %v1528, %v1525
    %v1559 = vpack.c.b16 %v1529, %v1526
    %v1560 = vpack.c.b16 %v1533, %v1530
    %v1561 = vpack.c.b16 %v1534, %v1531
    %v1562 = vpack.c.b16 %v1535, %v1532
    %v1563 = vpack.c.b16 %v1539, %v1536
    %v1564 = vpack.c.b16 %v1540, %v1537
    %v1565 = vpack.c.b16 %v1541, %v1538
    %1590 = vmatprep.subr.bf16.mxu0 %v1543
    %1591 = vmatpush1.bf16.msra.mxu0 %v1542
    %1592 = vmatprep.subr.bf16.mxu0 %v1546
    %1593 = vmatpush1.bf16.msra.mxu0 %v1545
    %1594 = vmatprep.subr.bf16.mxu0 %v1549
    %1595 = vmatpush1.bf16.msra.mxu0 %v1548
    %1596 = vmatprep.subr.bf16.mxu0 %v1552
    %1597 = vmatpush1.bf16.msra.mxu0 %v1551
    %1598 = vmatprep.subr.bf16.mxu0 %v1555
    %1599 = vmatpush1.bf16.msra.mxu0 %v1554
    %1600 = vmatprep.subr.bf16.mxu0 %v1558
    %1601 = vmatpush1.bf16.msra.mxu0 %v1557
    %1602 = vmatprep.subr.bf16.mxu0 %v1561
    %1603 = vmatpush1.bf16.msra.mxu0 %v1560
    %1604 = vmatprep.subr.bf16.mxu0 %v1564
    %1605 = vmatpush1.bf16.msra.mxu0 %v1563
    %1606 = vmatprep.subr.bf16.mxu0 0
    %1607 = vmatpush1.bf16.msra.mxu0 0
    %1608 = vmatprep.subr.bf16.mxu0 0
    %1609 = vmatpush1.bf16.msra.mxu0 0
    %1610 = vmatprep.subr.bf16.mxu0 0
    %1611 = vmatpush1.bf16.msra.mxu0 0
    %1612 = vmatprep.subr.bf16.mxu0 0
    %1613 = vmatpush1.bf16.msra.mxu0 0
    %1614 = vmatprep.subr.bf16.mxu0 0
    %1615 = vmatpush1.bf16.msra.mxu0 0
    %1616 = vmatprep.subr.bf16.mxu0 0
    %1617 = vmatpush1.bf16.msra.mxu0 0
    %1618 = vmatprep.subr.bf16.mxu0 0
    %1619 = vmatpush1.bf16.msra.mxu0 0
    %1620 = vmatprep.subr.bf16.mxu0 0
    %1621 = vmatpush1.bf16.msra.mxu0 0
    %1622 = vmatprep.mubr.bf16.mxu0 0
    %1623 = vmatmul.mubr.bf16.gmra.mrb[0].mxu0 %v1429
    %v1624 = vpop.f32.mrb[0].mxu0
    %v1625 = vadd.f32 0.0, %v1624
    %v1626 = vpop.f32.mrb[0].mxu0
    %v1627 = vadd.f32 0.0, %v1626
    %v1628 = vpop.f32.mrb[0].mxu0
    %v1629 = vpop.f32.mrb[0].mxu0
    %1630 = vdwg.mxu0
    %1631 = vmatprep.subr.bf16.mxu0 0
    %1632 = vmatpush1.bf16.msra.mxu0 %v1544
    %1633 = vmatprep.subr.bf16.mxu0 0
    %1634 = vmatpush1.bf16.msra.mxu0 %v1547
    %1635 = vmatprep.subr.bf16.mxu0 0
    %1636 = vmatpush1.bf16.msra.mxu0 %v1550
    %1637 = vmatprep.subr.bf16.mxu0 0
    %1638 = vmatpush1.bf16.msra.mxu0 %v1553
    %1639 = vmatprep.subr.bf16.mxu0 0
    %1640 = vmatpush1.bf16.msra.mxu0 %v1556
    %1641 = vmatprep.subr.bf16.mxu0 0
    %1642 = vmatpush1.bf16.msra.mxu0 %v1559
    %1643 = vmatprep.subr.bf16.mxu0 0
    %1644 = vmatpush1.bf16.msra.mxu0 %v1562
    %1645 = vmatprep.subr.bf16.mxu0 0
    %1646 = vmatpush1.bf16.msra.mxu0 %v1565
    %1647 = vmatprep.subr.bf16.mxu0 0
    %1648 = vmatpush1.bf16.msra.mxu0 0
    %1649 = vmatprep.subr.bf16.mxu0 0
    %1650 = vmatpush1.bf16.msra.mxu0 0
    %1651 = vmatprep.subr.bf16.mxu0 0
    %1652 = vmatpush1.bf16.msra.mxu0 0
    %1653 = vmatprep.subr.bf16.mxu0 0
    %1654 = vmatpush1.bf16.msra.mxu0 0
    %1655 = vmatprep.subr.bf16.mxu0 0
    %1656 = vmatpush1.bf16.msra.mxu0 0
    %1657 = vmatprep.subr.bf16.mxu0 0
    %1658 = vmatpush1.bf16.msra.mxu0 0
    %1659 = vmatprep.subr.bf16.mxu0 0
    %1660 = vmatpush1.bf16.msra.mxu0 0
    %1661 = vmatprep.subr.bf16.mxu0 0
    %1662 = vmatpush1.bf16.msra.mxu0 0
    %1663 = vmatprep.mubr.bf16.mxu0 0
    %1664 = vmatmul.mubr.bf16.gmra.mrb[0].mxu0 %v1429
    %v1665 = vpop.f32.mrb[0].mxu0
    %v1666 = vadd.f32 0.0, %v1665
    %v1667 = vpop.f32.mrb[0].mxu0
    %v1668 = vpop.f32.mrb[0].mxu0
    %v1669 = vpop.f32.mrb[0].mxu0
    %1670 = vdwg.mxu0
    %v1671 = vadd.f32 %v1427, %v1625
    %v1672 = vxor.u32 %v1671, 2147483648
    %v1673 = vmul.f32 %v1672, 1.442695
    %v1674 = vpow.pop %v1673
    %v1675 = vadd.f32 %v1674, 1.0
    %v1676 = vrcp.pop %v1675
    %v1677 = vmul.f32 1.0, %v1676
    %v1679 = vrot.slane %v1427, 4
    %v1681 = vadd.f32 %v1679, %v1627
    %v1682 = vxor.u32 %v1681, 2147483648
    %v1683 = vmul.f32 %v1682, 1.442695
    %v1684 = vpow.pop %v1683
    %v1685 = vadd.f32 %v1684, 1.0
    %v1686 = vrcp.pop %v1685
    %v1687 = vmul.f32 1.0, %v1686
    %v1688 = vadd.f32 %v1666, %v60
    %v1689 = vmul.f32 %v1677, %v1688
    %v1690 = vadd.f32 %v1428, %v1689
    %v1691 = vtanh.pop %v1690
    %v1692 = vsub.f32 1.0, %v1687
    %v1693 = vmul.f32 %v1692, %v1691
    %v1694 = vmul.f32 %v1687, %v1422
    %v1695 = vadd.f32 %v1693, %v1694
    %s1696 = scalar_lea.vmem [#allocation9], 20
    %1697 = vst [vmem:[%s1696] sm:$0xf] %v1695
    %s1698 = scalar_lea.vmem [#allocation3], 36
    %v1699 = vld [vmem:[%s1698] sm:$0x3f]
    %v1700 = vunpack.c.l.bf16 %v1699
    %v1701 = vunpack.c.h.bf16 %v1699
    %v1702 = vpack.c.bf16 %v1695, %v1695
    %v1703 = vld [vmem:[#allocation6] sm:$0xff]
    %v1704 = vld [vmem:[#allocation6 + $0x8] sm:$0xf]
    %v1705 = vld [vmem:[#allocation6 + $0xc] sm:$0xff]
    %v1706 = vld [vmem:[#allocation6 + $0x14] sm:$0xf]
    %v1707 = vld [vmem:[#allocation6 + $0x18] sm:$0xff]
    %v1708 = vld [vmem:[#allocation6 + $0x20] sm:$0xf]
    %v1709 = vld [vmem:[#allocation6 + $0x24] sm:$0xff]
    %v1710 = vld [vmem:[#allocation6 + $0x2c] sm:$0xf]
    %v1711 = vld [vmem:[#allocation6 + $0x30] sm:$0xff]
    %v1712 = vld [vmem:[#allocation6 + $0x38] sm:$0xf]
    %v1713 = vld [vmem:[#allocation6 + $0x3c] sm:$0xff]
    %v1714 = vld [vmem:[#allocation6 + $0x44] sm:$0xf]
    %v1715 = vld [vmem:[#allocation6 + $0x48] sm:$0xff]
    %v1716 = vld [vmem:[#allocation6 + $0x50] sm:$0xf]
    %v1717 = vld [vmem:[#allocation6 + $0x54] sm:$0xff]
    %v1718 = vld [vmem:[#allocation6 + $0x5c] sm:$0xf]
    %v1719 = vld [vmem:[#allocation6 + $0x60] sm:$0xff]
    %v1720 = vld [vmem:[#allocation6 + $0x68] sm:$0xf]
    %v1721 = vld [vmem:[#allocation6 + $0x6c] sm:$0xff]
    %v1722 = vld [vmem:[#allocation6 + $0x74] sm:$0xf]
    %v1723 = vld [vmem:[#allocation6 + $0x78] sm:$0xff]
    %v1724 = vld [vmem:[#allocation6 + $0x80] sm:$0xf]
    %v1725 = vld [vmem:[#allocation6 + $0x84] sm:$0xff]
    %v1726 = vld [vmem:[#allocation6 + $0x8c] sm:$0xf]
    %v1727 = vld [vmem:[#allocation6 + $0x90] sm:$0xff]
    %v1728 = vld [vmem:[#allocation6 + $0x98] sm:$0xf]
    %v1729 = vld [vmem:[#allocation6 + $0x9c] sm:$0xff]
    %v1730 = vld [vmem:[#allocation6 + $0xa4] sm:$0xf]
    %v1731 = vld [vmem:[#allocation6 + $0xa8] sm:$0xff]
    %v1732 = vld [vmem:[#allocation6 + $0xb0] sm:$0xf]
    %v1733 = vld [vmem:[#allocation6 + $0xb4] sm:$0xff]
    %v1734 = vld [vmem:[#allocation6 + $0xbc] sm:$0xf]
    %v1767 = vunpack.c.l.b16 %v1703
    %v1768 = vunpack.c.h.b16 %v1703
    %v1769 = vunpack.c.l.b16 %v1704
    %v1770 = vunpack.c.l.b16 %v1705
    %v1771 = vunpack.c.h.b16 %v1705
    %v1772 = vunpack.c.l.b16 %v1706
    %v1773 = vunpack.c.l.b16 %v1707
    %v1774 = vunpack.c.h.b16 %v1707
    %v1775 = vunpack.c.l.b16 %v1708
    %v1776 = vunpack.c.l.b16 %v1709
    %v1777 = vunpack.c.h.b16 %v1709
    %v1778 = vunpack.c.l.b16 %v1710
    %v1779 = vunpack.c.l.b16 %v1711
    %v1780 = vunpack.c.h.b16 %v1711
    %v1781 = vunpack.c.l.b16 %v1712
    %v1782 = vunpack.c.l.b16 %v1713
    %v1783 = vunpack.c.h.b16 %v1713
    %v1784 = vunpack.c.l.b16 %v1714
    %v1785 = vunpack.c.l.b16 %v1715
    %v1786 = vunpack.c.h.b16 %v1715
    %v1787 = vunpack.c.l.b16 %v1716
    %v1788 = vunpack.c.l.b16 %v1717
    %v1789 = vunpack.c.h.b16 %v1717
    %v1790 = vunpack.c.l.b16 %v1718
    %v1791 = vunpack.c.l.b16 %v1719
    %v1792 = vunpack.c.h.b16 %v1719
    %v1793 = vunpack.c.l.b16 %v1720
    %v1794 = vunpack.c.l.b16 %v1721
    %v1795 = vunpack.c.h.b16 %v1721
    %v1796 = vunpack.c.l.b16 %v1722
    %v1797 = vunpack.c.l.b16 %v1723
    %v1798 = vunpack.c.h.b16 %v1723
    %v1799 = vunpack.c.l.b16 %v1724
    %v1800 = vunpack.c.l.b16 %v1725
    %v1801 = vunpack.c.h.b16 %v1725
    %v1802 = vunpack.c.l.b16 %v1726
    %v1803 = vunpack.c.l.b16 %v1727
    %v1804 = vunpack.c.h.b16 %v1727
    %v1805 = vunpack.c.l.b16 %v1728
    %v1806 = vunpack.c.l.b16 %v1729
    %v1807 = vunpack.c.h.b16 %v1729
    %v1808 = vunpack.c.l.b16 %v1730
    %v1809 = vunpack.c.l.b16 %v1731
    %v1810 = vunpack.c.h.b16 %v1731
    %v1811 = vunpack.c.l.b16 %v1732
    %v1812 = vunpack.c.l.b16 %v1733
    %v1813 = vunpack.c.h.b16 %v1733
    %v1814 = vunpack.c.l.b16 %v1734
    %v1815 = vpack.c.b16 %v1770, %v1767
    %v1816 = vpack.c.b16 %v1771, %v1768
    %v1817 = vpack.c.b16 %v1772, %v1769
    %v1818 = vpack.c.b16 %v1776, %v1773
    %v1819 = vpack.c.b16 %v1777, %v1774
    %v1820 = vpack.c.b16 %v1778, %v1775
    %v1821 = vpack.c.b16 %v1782, %v1779
    %v1822 = vpack.c.b16 %v1783, %v1780
    %v1823 = vpack.c.b16 %v1784, %v1781
    %v1824 = vpack.c.b16 %v1788, %v1785
    %v1825 = vpack.c.b16 %v1789, %v1786
    %v1826 = vpack.c.b16 %v1790, %v1787
    %v1827 = vpack.c.b16 %v1794, %v1791
    %v1828 = vpack.c.b16 %v1795, %v1792
    %v1829 = vpack.c.b16 %v1796, %v1793
    %v1830 = vpack.c.b16 %v1800, %v1797
    %v1831 = vpack.c.b16 %v1801, %v1798
    %v1832 = vpack.c.b16 %v1802, %v1799
    %v1833 = vpack.c.b16 %v1806, %v1803
    %v1834 = vpack.c.b16 %v1807, %v1804
    %v1835 = vpack.c.b16 %v1808, %v1805
    %v1836 = vpack.c.b16 %v1812, %v1809
    %v1837 = vpack.c.b16 %v1813, %v1810
    %v1838 = vpack.c.b16 %v1814, %v1811
    %1863 = vmatprep.subr.bf16.mxu0 %v1816
    %1864 = vmatpush1.bf16.msra.mxu0 %v1815
    %1865 = vmatprep.subr.bf16.mxu0 %v1819
    %1866 = vmatpush1.bf16.msra.mxu0 %v1818
    %1867 = vmatprep.subr.bf16.mxu0 %v1822
    %1868 = vmatpush1.bf16.msra.mxu0 %v1821
    %1869 = vmatprep.subr.bf16.mxu0 %v1825
    %1870 = vmatpush1.bf16.msra.mxu0 %v1824
    %1871 = vmatprep.subr.bf16.mxu0 %v1828
    %1872 = vmatpush1.bf16.msra.mxu0 %v1827
    %1873 = vmatprep.subr.bf16.mxu0 %v1831
    %1874 = vmatpush1.bf16.msra.mxu0 %v1830
    %1875 = vmatprep.subr.bf16.mxu0 %v1834
    %1876 = vmatpush1.bf16.msra.mxu0 %v1833
    %1877 = vmatprep.subr.bf16.mxu0 %v1837
    %1878 = vmatpush1.bf16.msra.mxu0 %v1836
    %1879 = vmatprep.subr.bf16.mxu0 0
    %1880 = vmatpush1.bf16.msra.mxu0 0
    %1881 = vmatprep.subr.bf16.mxu0 0
    %1882 = vmatpush1.bf16.msra.mxu0 0
    %1883 = vmatprep.subr.bf16.mxu0 0
    %1884 = vmatpush1.bf16.msra.mxu0 0
    %1885 = vmatprep.subr.bf16.mxu0 0
    %1886 = vmatpush1.bf16.msra.mxu0 0
    %1887 = vmatprep.subr.bf16.mxu0 0
    %1888 = vmatpush1.bf16.msra.mxu0 0
    %1889 = vmatprep.subr.bf16.mxu0 0
    %1890 = vmatpush1.bf16.msra.mxu0 0
    %1891 = vmatprep.subr.bf16.mxu0 0
    %1892 = vmatpush1.bf16.msra.mxu0 0
    %1893 = vmatprep.subr.bf16.mxu0 0
    %1894 = vmatpush1.bf16.msra.mxu0 0
    %1895 = vmatprep.mubr.bf16.mxu0 0
    %1896 = vmatmul.mubr.bf16.gmra.mrb[0].mxu0 %v1702
    %v1897 = vpop.f32.mrb[0].mxu0
    %v1898 = vadd.f32 0.0, %v1897
    %v1899 = vpop.f32.mrb[0].mxu0
    %v1900 = vadd.f32 0.0, %v1899
    %v1901 = vpop.f32.mrb[0].mxu0
    %v1902 = vpop.f32.mrb[0].mxu0
    %1903 = vdwg.mxu0
    %1904 = vmatprep.subr.bf16.mxu0 0
    %1905 = vmatpush1.bf16.msra.mxu0 %v1817
    %1906 = vmatprep.subr.bf16.mxu0 0
    %1907 = vmatpush1.bf16.msra.mxu0 %v1820
    %1908 = vmatprep.subr.bf16.mxu0 0
    %1909 = vmatpush1.bf16.msra.mxu0 %v1823
    %1910 = vmatprep.subr.bf16.mxu0 0
    %1911 = vmatpush1.bf16.msra.mxu0 %v1826
    %1912 = vmatprep.subr.bf16.mxu0 0
    %1913 = vmatpush1.bf16.msra.mxu0 %v1829
    %1914 = vmatprep.subr.bf16.mxu0 0
    %1915 = vmatpush1.bf16.msra.mxu0 %v1832
    %1916 = vmatprep.subr.bf16.mxu0 0
    %1917 = vmatpush1.bf16.msra.mxu0 %v1835
    %1918 = vmatprep.subr.bf16.mxu0 0
    %1919 = vmatpush1.bf16.msra.mxu0 %v1838
    %1920 = vmatprep.subr.bf16.mxu0 0
    %1921 = vmatpush1.bf16.msra.mxu0 0
    %1922 = vmatprep.subr.bf16.mxu0 0
    %1923 = vmatpush1.bf16.msra.mxu0 0
    %1924 = vmatprep.subr.bf16.mxu0 0
    %1925 = vmatpush1.bf16.msra.mxu0 0
    %1926 = vmatprep.subr.bf16.mxu0 0
    %1927 = vmatpush1.bf16.msra.mxu0 0
    %1928 = vmatprep.subr.bf16.mxu0 0
    %1929 = vmatpush1.bf16.msra.mxu0 0
    %1930 = vmatprep.subr.bf16.mxu0 0
    %1931 = vmatpush1.bf16.msra.mxu0 0
    %1932 = vmatprep.subr.bf16.mxu0 0
    %1933 = vmatpush1.bf16.msra.mxu0 0
    %1934 = vmatprep.subr.bf16.mxu0 0
    %1935 = vmatpush1.bf16.msra.mxu0 0
    %1936 = vmatprep.mubr.bf16.mxu0 0
    %1937 = vmatmul.mubr.bf16.gmra.mrb[0].mxu0 %v1702
    %v1938 = vpop.f32.mrb[0].mxu0
    %v1939 = vadd.f32 0.0, %v1938
    %v1940 = vpop.f32.mrb[0].mxu0
    %v1941 = vpop.f32.mrb[0].mxu0
    %v1942 = vpop.f32.mrb[0].mxu0
    %1943 = vdwg.mxu0
    %v1944 = vadd.f32 %v1700, %v1898
    %v1945 = vxor.u32 %v1944, 2147483648
    %v1946 = vmul.f32 %v1945, 1.442695
    %v1947 = vpow.pop %v1946
    %v1948 = vadd.f32 %v1947, 1.0
    %v1949 = vrcp.pop %v1948
    %v1950 = vmul.f32 1.0, %v1949
    %v1952 = vrot.slane %v1700, 4
    %v1954 = vadd.f32 %v1952, %v1900
    %v1955 = vxor.u32 %v1954, 2147483648
    %v1956 = vmul.f32 %v1955, 1.442695
    %v1957 = vpow.pop %v1956
    %v1958 = vadd.f32 %v1957, 1.0
    %v1959 = vrcp.pop %v1958
    %v1960 = vmul.f32 1.0, %v1959
    %v1961 = vadd.f32 %v1939, %v60
    %v1962 = vmul.f32 %v1950, %v1961
    %v1963 = vadd.f32 %v1701, %v1962
    %v1964 = vtanh.pop %v1963
    %v1965 = vsub.f32 1.0, %v1960
    %v1966 = vmul.f32 %v1965, %v1964
    %v1967 = vmul.f32 %v1960, %v1695
    %v1968 = vadd.f32 %v1966, %v1967
    %s1969 = scalar_lea.vmem [#allocation9], 24
    %1970 = vst [vmem:[%s1969] sm:$0xf] %v1968
    %s1971 = scalar_lea.vmem [#allocation3], 42
    %v1972 = vld [vmem:[%s1971] sm:$0x3f]
    %v1973 = vunpack.c.l.bf16 %v1972
    %v1974 = vunpack.c.h.bf16 %v1972
    %v1975 = vpack.c.bf16 %v1968, %v1968
    %v1976 = vld [vmem:[#allocation6] sm:$0xff]
    %v1977 = vld [vmem:[#allocation6 + $0x8] sm:$0xf]
    %v1978 = vld [vmem:[#allocation6 + $0xc] sm:$0xff]
    %v1979 = vld [vmem:[#allocation6 + $0x14] sm:$0xf]
    %v1980 = vld [vmem:[#allocation6 + $0x18] sm:$0xff]
    %v1981 = vld [vmem:[#allocation6 + $0x20] sm:$0xf]
    %v1982 = vld [vmem:[#allocation6 + $0x24] sm:$0xff]
    %v1983 = vld [vmem:[#allocation6 + $0x2c] sm:$0xf]
    %v1984 = vld [vmem:[#allocation6 + $0x30] sm:$0xff]
    %v1985 = vld [vmem:[#allocation6 + $0x38] sm:$0xf]
    %v1986 = vld [vmem:[#allocation6 + $0x3c] sm:$0xff]
    %v1987 = vld [vmem:[#allocation6 + $0x44] sm:$0xf]
    %v1988 = vld [vmem:[#allocation6 + $0x48] sm:$0xff]
    %v1989 = vld [vmem:[#allocation6 + $0x50] sm:$0xf]
    %v1990 = vld [vmem:[#allocation6 + $0x54] sm:$0xff]
    %v1991 = vld [vmem:[#allocation6 + $0x5c] sm:$0xf]
    %v1992 = vld [vmem:[#allocation6 + $0x60] sm:$0xff]
    %v1993 = vld [vmem:[#allocation6 + $0x68] sm:$0xf]
    %v1994 = vld [vmem:[#allocation6 + $0x6c] sm:$0xff]
    %v1995 = vld [vmem:[#allocation6 + $0x74] sm:$0xf]
    %v1996 = vld [vmem:[#allocation6 + $0x78] sm:$0xff]
    %v1997 = vld [vmem:[#allocation6 + $0x80] sm:$0xf]
    %v1998 = vld [vmem:[#allocation6 + $0x84] sm:$0xff]
    %v1999 = vld [vmem:[#allocation6 + $0x8c] sm:$0xf]
    %v2000 = vld [vmem:[#allocation6 + $0x90] sm:$0xff]
    %v2001 = vld [vmem:[#allocation6 + $0x98] sm:$0xf]
    %v2002 = vld [vmem:[#allocation6 + $0x9c] sm:$0xff]
    %v2003 = vld [vmem:[#allocation6 + $0xa4] sm:$0xf]
    %v2004 = vld [vmem:[#allocation6 + $0xa8] sm:$0xff]
    %v2005 = vld [vmem:[#allocation6 + $0xb0] sm:$0xf]
    %v2006 = vld [vmem:[#allocation6 + $0xb4] sm:$0xff]
    %v2007 = vld [vmem:[#allocation6 + $0xbc] sm:$0xf]
    %v2040 = vunpack.c.l.b16 %v1976
    %v2041 = vunpack.c.h.b16 %v1976
    %v2042 = vunpack.c.l.b16 %v1977
    %v2043 = vunpack.c.l.b16 %v1978
    %v2044 = vunpack.c.h.b16 %v1978
    %v2045 = vunpack.c.l.b16 %v1979
    %v2046 = vunpack.c.l.b16 %v1980
    %v2047 = vunpack.c.h.b16 %v1980
    %v2048 = vunpack.c.l.b16 %v1981
    %v2049 = vunpack.c.l.b16 %v1982
    %v2050 = vunpack.c.h.b16 %v1982
    %v2051 = vunpack.c.l.b16 %v1983
    %v2052 = vunpack.c.l.b16 %v1984
    %v2053 = vunpack.c.h.b16 %v1984
    %v2054 = vunpack.c.l.b16 %v1985
    %v2055 = vunpack.c.l.b16 %v1986
    %v2056 = vunpack.c.h.b16 %v1986
    %v2057 = vunpack.c.l.b16 %v1987
    %v2058 = vunpack.c.l.b16 %v1988
    %v2059 = vunpack.c.h.b16 %v1988
    %v2060 = vunpack.c.l.b16 %v1989
    %v2061 = vunpack.c.l.b16 %v1990
    %v2062 = vunpack.c.h.b16 %v1990
    %v2063 = vunpack.c.l.b16 %v1991
    %v2064 = vunpack.c.l.b16 %v1992
    %v2065 = vunpack.c.h.b16 %v1992
    %v2066 = vunpack.c.l.b16 %v1993
    %v2067 = vunpack.c.l.b16 %v1994
    %v2068 = vunpack.c.h.b16 %v1994
    %v2069 = vunpack.c.l.b16 %v1995
    %v2070 = vunpack.c.l.b16 %v1996
    %v2071 = vunpack.c.h.b16 %v1996
    %v2072 = vunpack.c.l.b16 %v1997
    %v2073 = vunpack.c.l.b16 %v1998
    %v2074 = vunpack.c.h.b16 %v1998
    %v2075 = vunpack.c.l.b16 %v1999
    %v2076 = vunpack.c.l.b16 %v2000
    %v2077 = vunpack.c.h.b16 %v2000
    %v2078 = vunpack.c.l.b16 %v2001
    %v2079 = vunpack.c.l.b16 %v2002
    %v2080 = vunpack.c.h.b16 %v2002
    %v2081 = vunpack.c.l.b16 %v2003
    %v2082 = vunpack.c.l.b16 %v2004
    %v2083 = vunpack.c.h.b16 %v2004
    %v2084 = vunpack.c.l.b16 %v2005
    %v2085 = vunpack.c.l.b16 %v2006
    %v2086 = vunpack.c.h.b16 %v2006
    %v2087 = vunpack.c.l.b16 %v2007
    %v2088 = vpack.c.b16 %v2043, %v2040
    %v2089 = vpack.c.b16 %v2044, %v2041
    %v2090 = vpack.c.b16 %v2045, %v2042
    %v2091 = vpack.c.b16 %v2049, %v2046
    %v2092 = vpack.c.b16 %v2050, %v2047
    %v2093 = vpack.c.b16 %v2051, %v2048
    %v2094 = vpack.c.b16 %v2055, %v2052
    %v2095 = vpack.c.b16 %v2056, %v2053
    %v2096 = vpack.c.b16 %v2057, %v2054
    %v2097 = vpack.c.b16 %v2061, %v2058
    %v2098 = vpack.c.b16 %v2062, %v2059
    %v2099 = vpack.c.b16 %v2063, %v2060
    %v2100 = vpack.c.b16 %v2067, %v2064
    %v2101 = vpack.c.b16 %v2068, %v2065
    %v2102 = vpack.c.b16 %v2069, %v2066
    %v2103 = vpack.c.b16 %v2073, %v2070
    %v2104 = vpack.c.b16 %v2074, %v2071
    %v2105 = vpack.c.b16 %v2075, %v2072
    %v2106 = vpack.c.b16 %v2079, %v2076
    %v2107 = vpack.c.b16 %v2080, %v2077
    %v2108 = vpack.c.b16 %v2081, %v2078
    %v2109 = vpack.c.b16 %v2085, %v2082
    %v2110 = vpack.c.b16 %v2086, %v2083
    %v2111 = vpack.c.b16 %v2087, %v2084
    %2136 = vmatprep.subr.bf16.mxu0 %v2089
    %2137 = vmatpush1.bf16.msra.mxu0 %v2088
    %2138 = vmatprep.subr.bf16.mxu0 %v2092
    %2139 = vmatpush1.bf16.msra.mxu0 %v2091
    %2140 = vmatprep.subr.bf16.mxu0 %v2095
    %2141 = vmatpush1.bf16.msra.mxu0 %v2094
    %2142 = vmatprep.subr.bf16.mxu0 %v2098
    %2143 = vmatpush1.bf16.msra.mxu0 %v2097
    %2144 = vmatprep.subr.bf16.mxu0 %v2101
    %2145 = vmatpush1.bf16.msra.mxu0 %v2100
    %2146 = vmatprep.subr.bf16.mxu0 %v2104
    %2147 = vmatpush1.bf16.msra.mxu0 %v2103
    %2148 = vmatprep.subr.bf16.mxu0 %v2107
    %2149 = vmatpush1.bf16.msra.mxu0 %v2106
    %2150 = vmatprep.subr.bf16.mxu0 %v2110
    %2151 = vmatpush1.bf16.msra.mxu0 %v2109
    %2152 = vmatprep.subr.bf16.mxu0 0
    %2153 = vmatpush1.bf16.msra.mxu0 0
    %2154 = vmatprep.subr.bf16.mxu0 0
    %2155 = vmatpush1.bf16.msra.mxu0 0
    %2156 = vmatprep.subr.bf16.mxu0 0
    %2157 = vmatpush1.bf16.msra.mxu0 0
    %2158 = vmatprep.subr.bf16.mxu0 0
    %2159 = vmatpush1.bf16.msra.mxu0 0
    %2160 = vmatprep.subr.bf16.mxu0 0
    %2161 = vmatpush1.bf16.msra.mxu0 0
    %2162 = vmatprep.subr.bf16.mxu0 0
    %2163 = vmatpush1.bf16.msra.mxu0 0
    %2164 = vmatprep.subr.bf16.mxu0 0
    %2165 = vmatpush1.bf16.msra.mxu0 0
    %2166 = vmatprep.subr.bf16.mxu0 0
    %2167 = vmatpush1.bf16.msra.mxu0 0
    %2168 = vmatprep.mubr.bf16.mxu0 0
    %2169 = vmatmul.mubr.bf16.gmra.mrb[0].mxu0 %v1975
    %v2170 = vpop.f32.mrb[0].mxu0
    %v2171 = vadd.f32 0.0, %v2170
    %v2172 = vpop.f32.mrb[0].mxu0
    %v2173 = vadd.f32 0.0, %v2172
    %v2174 = vpop.f32.mrb[0].mxu0
    %v2175 = vpop.f32.mrb[0].mxu0
    %2176 = vdwg.mxu0
    %2177 = vmatprep.subr.bf16.mxu0 0
    %2178 = vmatpush1.bf16.msra.mxu0 %v2090
    %2179 = vmatprep.subr.bf16.mxu0 0
    %2180 = vmatpush1.bf16.msra.mxu0 %v2093
    %2181 = vmatprep.subr.bf16.mxu0 0
    %2182 = vmatpush1.bf16.msra.mxu0 %v2096
    %2183 = vmatprep.subr.bf16.mxu0 0
    %2184 = vmatpush1.bf16.msra.mxu0 %v2099
    %2185 = vmatprep.subr.bf16.mxu0 0
    %2186 = vmatpush1.bf16.msra.mxu0 %v2102
    %2187 = vmatprep.subr.bf16.mxu0 0
    %2188 = vmatpush1.bf16.msra.mxu0 %v2105
    %2189 = vmatprep.subr.bf16.mxu0 0
    %2190 = vmatpush1.bf16.msra.mxu0 %v2108
    %2191 = vmatprep.subr.bf16.mxu0 0
    %2192 = vmatpush1.bf16.msra.mxu0 %v2111
    %2193 = vmatprep.subr.bf16.mxu0 0
    %2194 = vmatpush1.bf16.msra.mxu0 0
    %2195 = vmatprep.subr.bf16.mxu0 0
    %2196 = vmatpush1.bf16.msra.mxu0 0
    %2197 = vmatprep.subr.bf16.mxu0 0
    %2198 = vmatpush1.bf16.msra.mxu0 0
    %2199 = vmatprep.subr.bf16.mxu0 0
    %2200 = vmatpush1.bf16.msra.mxu0 0
    %2201 = vmatprep.subr.bf16.mxu0 0
    %2202 = vmatpush1.bf16.msra.mxu0 0
    %2203 = vmatprep.subr.bf16.mxu0 0
    %2204 = vmatpush1.bf16.msra.mxu0 0
    %2205 = vmatprep.subr.bf16.mxu0 0
    %2206 = vmatpush1.bf16.msra.mxu0 0
    %2207 = vmatprep.subr.bf16.mxu0 0
    %2208 = vmatpush1.bf16.msra.mxu0 0
    %2209 = vmatprep.mubr.bf16.mxu0 0
    %2210 = vmatmul.mubr.bf16.gmra.mrb[0].mxu0 %v1975
    %v2211 = vpop.f32.mrb[0].mxu0
    %v2212 = vadd.f32 0.0, %v2211
    %v2213 = vpop.f32.mrb[0].mxu0
    %v2214 = vpop.f32.mrb[0].mxu0
    %v2215 = vpop.f32.mrb[0].mxu0
    %2216 = vdwg.mxu0
    %v2217 = vadd.f32 %v1973, %v2171
    %v2218 = vxor.u32 %v2217, 2147483648
    %v2219 = vmul.f32 %v2218, 1.442695
    %v2220 = vpow.pop %v2219
    %v2221 = vadd.f32 %v2220, 1.0
    %v2222 = vrcp.pop %v2221
    %v2223 = vmul.f32 1.0, %v2222
    %v2225 = vrot.slane %v1973, 4
    %v2227 = vadd.f32 %v2225, %v2173
    %v2228 = vxor.u32 %v2227, 2147483648
    %v2229 = vmul.f32 %v2228, 1.442695
    %v2230 = vpow.pop %v2229
    %v2231 = vadd.f32 %v2230, 1.0
    %v2232 = vrcp.pop %v2231
    %v2233 = vmul.f32 1.0, %v2232
    %v2234 = vadd.f32 %v2212, %v60
    %v2235 = vmul.f32 %v2223, %v2234
    %v2236 = vadd.f32 %v1974, %v2235
    %v2237 = vtanh.pop %v2236
    %v2238 = vsub.f32 1.0, %v2233
    %v2239 = vmul.f32 %v2238, %v2237
    %v2240 = vmul.f32 %v2233, %v1968
    %v2241 = vadd.f32 %v2239, %v2240
    %s2242 = scalar_lea.vmem [#allocation9], 28
    %2243 = vst [vmem:[%s2242] sm:$0xf] %v2241
    %2244 = vst [vmem:[#allocation2] sm:$0xf] %v2241
    // Predicated region
    $region30: #{tpu_custom_call.1} parent=1 // pred_check
      _
    $region31: #{tpu_custom_call.1} parent=1 // pred_check_branch
      %2246 = sbr.rel (0) target = $region33
    $region32: #{tpu_custom_call.1} parent=1 // pred_region
      %s2248 = ssub.s32 512, 512
      %2249 = vsyncadd [#allocation5], %s2248
      %s2250 = sshll.u32 [#allocation9], 4
      %s2251 = int_to_ptr.vmem [resolvable:$true] %s2250
      %2256 = dma.vmem_to_hbm [thread:$0]  %s2251, 512, %s3, [#allocation5], 64, 64, 4
    $region33: #{tpu_custom_call.1} parent=1 // pred_fallthru
      _
    // Predicated region
    $region34: #{tpu_custom_call.1} parent=1 // pred_check
      _
    $region35: #{tpu_custom_call.1} parent=1 // pred_check_branch
      %2258 = sbr.rel (0) target = $region37
    $region36: #{tpu_custom_call.1} parent=1 // pred_region
      %2259 = dma.done [#allocation5], 512
    $region37: #{tpu_custom_call.1} parent=1 // pred_fallthru
      _
    %2260 = vsyncpa [#allocation4], 1
    %2261 = vsyncpa [#allocation7], 1
    %2262 = vsyncpa [#allocation5], 1

// kernel: tpu_custom_call.1
$region0: #{tpu_custom_call.1}
  #allocation0 [shape = 'u32[]', space=smem, size = 0x4, offset = 0x4, fixed_abs, tag = 'smem constant byte address 0x4 - core index']
  #allocation1 [shape = 'u32[144,128]{1,0:T(1,128)}', space=vmem, size = 0x12000, scoped, tag = 'internal scratch']
  #allocation2 [shape = 'f32[4,128]{1,0:T(4,128)}', space=vmem, size = 0x800, scoped, tag = 'scratch operand']
  %s0 = inlined_call_operand.hbm [shape: bf16[8,4,384], index: 0, kind: input, shape index: {}]
  %s1 = inlined_call_operand.hbm [shape: bf16[128,384], index: 1, kind: input, shape index: {}]
  %s2 = inlined_call_operand.hbm [shape: f32[4,128], index: 2, kind: input, shape index: {}]
  %s3 = inlined_call_operand.hbm [shape: f32[8,4,128], index: 3, kind: output, shape index: {}]
  %s4 = sld [smem:[#allocation0]]
  $region38: #{tpu_custom_call.1} parent=0
    _
  %s6 = ssub.s32 1, %s4
  %s7 = scalar_select 0, %s6, %s4
  $region1: #{tpu_custom_call.1} parent=0
    #allocation3 [shape = 'u8[24576]{0}', space=vmem, size = 0x6000, scoped, tag = 'input window, operand 0, single buffered']
    #allocation4 [shape = 's32[1]{0}', space=sflag, size = 0x4, scoped, tag = 'scoped memory for tpu_custom_call.1']
    #allocation5 [shape = 's32[1]{0}', space=sflag, size = 0x4, scoped, tag = 'scoped memory for tpu_custom_call.1']
    #allocation6 [shape = 'u8[98304]{0}', space=vmem, size = 0x18000, scoped, tag = 'input window, operand 1, single buffered']
    #allocation7 [shape = 's32[1]{0}', space=sflag, size = 0x4, scoped, tag = 'scoped memory for tpu_custom_call.1']
    #allocation8 [shape = 'u8[2048]{0}', space=vmem, size = 0x800, scoped, tag = 'input window, operand 2, single buffered']
    #allocation9 [shape = 'u8[16384]{0}', space=vmem, size = 0x4000, scoped, tag = 'output window, operand 0, single buffered']
    %8 = vsyncpa [#allocation4], 0
    %9 = vsyncpa [#allocation7], 0
    %10 = vsyncpa [#allocation5], 0
    // Predicated region
    $region2: #{tpu_custom_call.1} parent=1 // pred_check
      _
    $region3: #{tpu_custom_call.1} parent=1 // pred_check_branch
      %12 = sbr.rel (0) target = $region5
    $region4: #{tpu_custom_call.1} parent=1 // pred_region
      %s14 = ssub.s32 768, 768
      %15 = vsyncadd [#allocation4], %s14
      %s16 = sshll.u32 [#allocation3], 4
      %s17 = int_to_ptr.vmem [resolvable:$true] %s16
      %22 = dma.hbm_to_vmem [thread:$0]  %s0, 768, %s17, [#allocation4], 96, 96, 6
    $region5: #{tpu_custom_call.1} parent=1 // pred_fallthru
      _
    // Predicated region
    $region6: #{tpu_custom_call.1} parent=1 // pred_check
      _
    $region7: #{tpu_custom_call.1} parent=1 // pred_check_branch
      %24 = sbr.rel (0) target = $region9
    $region8: #{tpu_custom_call.1} parent=1 // pred_region
      %s26 = ssub.s32 3072, 3072
      %27 = vsyncadd [#allocation7], %s26
      %s28 = sshll.u32 [#allocation6], 4
      %s29 = int_to_ptr.vmem [resolvable:$true] %s28
      %34 = dma.hbm_to_vmem [thread:$0]  %s1, 3072, %s29, [#allocation7], 192, 192, 12
    $region9: #{tpu_custom_call.1} parent=1 // pred_fallthru
      _
    // Predicated region
    $region10: #{tpu_custom_call.1} parent=1 // pred_check
      _
    $region11: #{tpu_custom_call.1} parent=1 // pred_check_branch
      %36 = sbr.rel (0) target = $region13
    $region12: #{tpu_custom_call.1} parent=1 // pred_region
      %s38 = ssub.s32 64, 64
      %39 = vsyncadd [#allocation7], %s38
      %s41 = sshll.u32 [#allocation8], 4
      %s42 = int_to_ptr.vmem [resolvable:$true] %s41
      %44 = dma.hbm_to_vmem [thread:$0]  %s2, 64, %s42, [#allocation7]
    $region13: #{tpu_custom_call.1} parent=1 // pred_fallthru
      _
    // Predicated region
    $region14: #{tpu_custom_call.1} parent=1 // pred_check
      _
    $region15: #{tpu_custom_call.1} parent=1 // pred_check_branch
      %46 = sbr.rel (0) target = $region17
    $region16: #{tpu_custom_call.1} parent=1 // pred_region
      %47 = dma.done [#allocation4], 768
    $region17: #{tpu_custom_call.1} parent=1 // pred_fallthru
      _
    // Predicated region
    $region18: #{tpu_custom_call.1} parent=1 // pred_check
      _
    $region19: #{tpu_custom_call.1} parent=1 // pred_check_branch
      %49 = sbr.rel (0) target = $region21
    $region20: #{tpu_custom_call.1} parent=1 // pred_region
      %50 = dma.done [#allocation7], 3072
    $region21: #{tpu_custom_call.1} parent=1 // pred_fallthru
      _
    // Predicated region
    $region22: #{tpu_custom_call.1} parent=1 // pred_check
      _
    $region23: #{tpu_custom_call.1} parent=1 // pred_check_branch
      %52 = sbr.rel (0) target = $region25
    $region24: #{tpu_custom_call.1} parent=1 // pred_region
      %53 = dma.done [#allocation7], 64
    $region25: #{tpu_custom_call.1} parent=1 // pred_fallthru
      _
    %p55 = scmp.eq.s32.totalorder 0, 0
    // Predicated region
    $region26: #{tpu_custom_call.1} parent=1 // pred_check
      %p56 = pneg %p55
    $region27: #{tpu_custom_call.1} parent=1 // pred_check_branch
      %58 = sbr.rel (%p56) target = $region29
    $region28: #{tpu_custom_call.1} parent=1 // pred_region
      %59 = vst [vmem:[#allocation2] sm:$0xf] 0.0
    $region29: #{tpu_custom_call.1} parent=1 // pred_fallthru
      _
    %v60 = vld [vmem:[#allocation8] sm:$0xf]
    %v61 = vld [vmem:[#allocation2] sm:$0xf]
    %v62 = vld [vmem:[#allocation3] sm:$0x3f]
    %v63 = vunpack.c.l.bf16 %v62
    %v64 = vunpack.c.h.bf16 %v62
    %v65 = vpack.c.bf16 %v61, %v61
    %v66 = vld [vmem:[#allocation6] sm:$0xff]
    %v67 = vld [vmem:[#allocation6 + $0x8] sm:$0xf]
    %v68 = vld [vmem:[#allocation6 + $0xc] sm:$0xff]
    %v69 = vld [vmem:[#allocation6 + $0x14] sm:$0xf]
    %v70 = vld [vmem:[#allocation6 + $0x18] sm:$0xff]
    %v71 = vld [vmem:[#allocation6 + $0x20] sm:$0xf]
    %v72 = vld [vmem:[#allocation6 + $0x24] sm:$0xff]
    %v73 = vld [vmem:[#allocation6 + $0x2c] sm:$0xf]
    %v74 = vld [vmem:[#allocation6 + $0x30] sm:$0xff]
    %v75 = vld [vmem:[#allocation6 + $0x38] sm:$0xf]
    %v76 = vld [vmem:[#allocation6 + $0x3c] sm:$0xff]
    %v77 = vld [vmem:[#allocation6 + $0x44] sm:$0xf]
    %v78 = vld [vmem:[#allocation6 + $0x48] sm:$0xff]
    %v79 = vld [vmem:[#allocation6 + $0x50] sm:$0xf]
    %v80 = vld [vmem:[#allocation6 + $0x54] sm:$0xff]
    %v81 = vld [vmem:[#allocation6 + $0x5c] sm:$0xf]
    %v82 = vld [vmem:[#allocation6 + $0x60] sm:$0xff]
    %v83 = vld [vmem:[#allocation6 + $0x68] sm:$0xf]
    %v84 = vld [vmem:[#allocation6 + $0x6c] sm:$0xff]
    %v85 = vld [vmem:[#allocation6 + $0x74] sm:$0xf]
    %v86 = vld [vmem:[#allocation6 + $0x78] sm:$0xff]
    %v87 = vld [vmem:[#allocation6 + $0x80] sm:$0xf]
    %v88 = vld [vmem:[#allocation6 + $0x84] sm:$0xff]
    %v89 = vld [vmem:[#allocation6 + $0x8c] sm:$0xf]
    %v90 = vld [vmem:[#allocation6 + $0x90] sm:$0xff]
    %v91 = vld [vmem:[#allocation6 + $0x98] sm:$0xf]
    %v92 = vld [vmem:[#allocation6 + $0x9c] sm:$0xff]
    %v93 = vld [vmem:[#allocation6 + $0xa4] sm:$0xf]
    %v94 = vld [vmem:[#allocation6 + $0xa8] sm:$0xff]
    %v95 = vld [vmem:[#allocation6 + $0xb0] sm:$0xf]
    %v96 = vld [vmem:[#allocation6 + $0xb4] sm:$0xff]
    %v97 = vld [vmem:[#allocation6 + $0xbc] sm:$0xf]
    %v130 = vunpack.c.l.b16 %v66
    %v131 = vunpack.c.h.b16 %v66
    %v132 = vunpack.c.l.b16 %v67
    %v133 = vunpack.c.l.b16 %v68
    %v134 = vunpack.c.h.b16 %v68
    %v135 = vunpack.c.l.b16 %v69
    %v136 = vunpack.c.l.b16 %v70
    %v137 = vunpack.c.h.b16 %v70
    %v138 = vunpack.c.l.b16 %v71
    %v139 = vunpack.c.l.b16 %v72
    %v140 = vunpack.c.h.b16 %v72
    %v141 = vunpack.c.l.b16 %v73
    %v142 = vunpack.c.l.b16 %v74
    %v143 = vunpack.c.h.b16 %v74
    %v144 = vunpack.c.l.b16 %v75
    %v145 = vunpack.c.l.b16 %v76
    %v146 = vunpack.c.h.b16 %v76
    %v147 = vunpack.c.l.b16 %v77
    %v148 = vunpack.c.l.b16 %v78
    %v149 = vunpack.c.h.b16 %v78
    %v150 = vunpack.c.l.b16 %v79
    %v151 = vunpack.c.l.b16 %v80
    %v152 = vunpack.c.h.b16 %v80
    %v153 = vunpack.c.l.b16 %v81
    %v154 = vunpack.c.l.b16 %v82
    %v155 = vunpack.c.h.b16 %v82
    %v156 = vunpack.c.l.b16 %v83
    %v157 = vunpack.c.l.b16 %v84
    %v158 = vunpack.c.h.b16 %v84
    %v159 = vunpack.c.l.b16 %v85
    %v160 = vunpack.c.l.b16 %v86
    %v161 = vunpack.c.h.b16 %v86
    %v162 = vunpack.c.l.b16 %v87
    %v163 = vunpack.c.l.b16 %v88
    %v164 = vunpack.c.h.b16 %v88
    %v165 = vunpack.c.l.b16 %v89
    %v166 = vunpack.c.l.b16 %v90
    %v167 = vunpack.c.h.b16 %v90
    %v168 = vunpack.c.l.b16 %v91
    %v169 = vunpack.c.l.b16 %v92
    %v170 = vunpack.c.h.b16 %v92
    %v171 = vunpack.c.l.b16 %v93
    %v172 = vunpack.c.l.b16 %v94
    %v173 = vunpack.c.h.b16 %v94
    %v174 = vunpack.c.l.b16 %v95
    %v175 = vunpack.c.l.b16 %v96
    %v176 = vunpack.c.h.b16 %v96
    %v177 = vunpack.c.l.b16 %v97
    %v178 = vpack.c.b16 %v133, %v130
    %v179 = vpack.c.b16 %v134, %v131
    %v180 = vpack.c.b16 %v135, %v132
    %v181 = vpack.c.b16 %v139, %v136
    %v182 = vpack.c.b16 %v140, %v137
    %v183 = vpack.c.b16 %v141, %v138
    %v184 = vpack.c.b16 %v145, %v142
    %v185 = vpack.c.b16 %v146, %v143
    %v186 = vpack.c.b16 %v147, %v144
    %v187 = vpack.c.b16 %v151, %v148
    %v188 = vpack.c.b16 %v152, %v149
    %v189 = vpack.c.b16 %v153, %v150
    %v190 = vpack.c.b16 %v157, %v154
    %v191 = vpack.c.b16 %v158, %v155
    %v192 = vpack.c.b16 %v159, %v156
    %v193 = vpack.c.b16 %v163, %v160
    %v194 = vpack.c.b16 %v164, %v161
    %v195 = vpack.c.b16 %v165, %v162
    %v196 = vpack.c.b16 %v169, %v166
    %v197 = vpack.c.b16 %v170, %v167
    %v198 = vpack.c.b16 %v171, %v168
    %v199 = vpack.c.b16 %v175, %v172
    %v200 = vpack.c.b16 %v176, %v173
    %v201 = vpack.c.b16 %v177, %v174
    %226 = vmatprep.subr.bf16.mxu0 %v179
    %227 = vmatpush1.bf16.msra.mxu0 %v178
    %228 = vmatprep.subr.bf16.mxu0 %v182
    %229 = vmatpush1.bf16.msra.mxu0 %v181
    %230 = vmatprep.subr.bf16.mxu0 %v185
    %231 = vmatpush1.bf16.msra.mxu0 %v184
    %232 = vmatprep.subr.bf16.mxu0 %v188
    %233 = vmatpush1.bf16.msra.mxu0 %v187
    %234 = vmatprep.subr.bf16.mxu0 %v191
    %235 = vmatpush1.bf16.msra.mxu0 %v190
    %236 = vmatprep.subr.bf16.mxu0 %v194
    %237 = vmatpush1.bf16.msra.mxu0 %v193
    %238 = vmatprep.subr.bf16.mxu0 %v197
    %239 = vmatpush1.bf16.msra.mxu0 %v196
    %240 = vmatprep.subr.bf16.mxu0 %v200
    %241 = vmatpush1.bf16.msra.mxu0 %v199
    %242 = vmatprep.subr.bf16.mxu0 0
    %243 = vmatpush1.bf16.msra.mxu0 0
    %244 = vmatprep.subr.bf16.mxu0 0
    %245 = vmatpush1.bf16.msra.mxu0 0
    %246 = vmatprep.subr.bf16.mxu0 0
    %247 = vmatpush1.bf16.msra.mxu0 0
    %248 = vmatprep.subr.bf16.mxu0 0
    %249 = vmatpush1.bf16.msra.mxu0 0
    %250 = vmatprep.subr.bf16.mxu0 0
    %251 = vmatpush1.bf16.msra.mxu0 0
    %252 = vmatprep.subr.bf16.mxu0 0
    %253 = vmatpush1.bf16.msra.mxu0 0
    %254 = vmatprep.subr.bf16.mxu0 0
    %255 = vmatpush1.bf16.msra.mxu0 0
    %256 = vmatprep.subr.bf16.mxu0 0
    %257 = vmatpush1.bf16.msra.mxu0 0
    %258 = vmatprep.mubr.bf16.mxu0 0
    %259 = vmatmul.mubr.bf16.gmra.mrb[0].mxu0 %v65
    %v260 = vpop.f32.mrb[0].mxu0
    %v261 = vadd.f32 0.0, %v260
    %v262 = vpop.f32.mrb[0].mxu0
    %v263 = vadd.f32 0.0, %v262
    %v264 = vpop.f32.mrb[0].mxu0
    %v265 = vpop.f32.mrb[0].mxu0
    %266 = vdwg.mxu0
    %267 = vmatprep.subr.bf16.mxu0 0
    %268 = vmatpush1.bf16.msra.mxu0 %v180
    %269 = vmatprep.subr.bf16.mxu0 0
    %270 = vmatpush1.bf16.msra.mxu0 %v183
    %271 = vmatprep.subr.bf16.mxu0 0
    %272 = vmatpush1.bf16.msra.mxu0 %v186
    %273 = vmatprep.subr.bf16.mxu0 0
    %274 = vmatpush1.bf16.msra.mxu0 %v189
    %275 = vmatprep.subr.bf16.mxu0 0
    %276 = vmatpush1.bf16.msra.mxu0 %v192
    %277 = vmatprep.subr.bf16.mxu0 0
    %278 = vmatpush1.bf16.msra.mxu0 %v195
    %279 = vmatprep.subr.bf16.mxu0 0
    %280 = vmatpush1.bf16.msra.mxu0 %v198
    %281 = vmatprep.subr.bf16.mxu0 0
    %282 = vmatpush1.bf16.msra.mxu0 %v201
    %283 = vmatprep.subr.bf16.mxu0 0
    %284 = vmatpush1.bf16.msra.mxu0 0
    %285 = vmatprep.subr.bf16.mxu0 0
    %286 = vmatpush1.bf16.msra.mxu0 0
    %287 = vmatprep.subr.bf16.mxu0 0
    %288 = vmatpush1.bf16.msra.mxu0 0
    %289 = vmatprep.subr.bf16.mxu0 0
    %290 = vmatpush1.bf16.msra.mxu0 0
    %291 = vmatprep.subr.bf16.mxu0 0
    %292 = vmatpush1.bf16.msra.mxu0 0
    %293 = vmatprep.subr.bf16.mxu0 0
    %294 = vmatpush1.bf16.msra.mxu0 0
    %295 = vmatprep.subr.bf16.mxu0 0
    %296 = vmatpush1.bf16.msra.mxu0 0
    %297 = vmatprep.subr.bf16.mxu0 0
    %298 = vmatpush1.bf16.msra.mxu0 0
    %299 = vmatprep.mubr.bf16.mxu0 0
    %300 = vmatmul.mubr.bf16.gmra.mrb[0].mxu0 %v65
    %v301 = vpop.f32.mrb[0].mxu0
    %v302 = vadd.f32 0.0, %v301
    %v303 = vpop.f32.mrb[0].mxu0
    %v304 = vpop.f32.mrb[0].mxu0
    %v305 = vpop.f32.mrb[0].mxu0
    %306 = vdwg.mxu0
    %v307 = vadd.f32 %v63, %v261
    %v308 = vxor.u32 %v307, 2147483648
    %v309 = vmul.f32 %v308, 1.442695
    %v310 = vpow.pop %v309
    %v311 = vadd.f32 %v310, 1.0
    %v312 = vrcp.pop %v311
    %v313 = vmul.f32 1.0, %v312
    %v315 = vrot.slane %v63, 4
    %v317 = vadd.f32 %v315, %v263
    %v318 = vxor.u32 %v317, 2147483648
    %v319 = vmul.f32 %v318, 1.442695
    %v320 = vpow.pop %v319
    %v321 = vadd.f32 %v320, 1.0
    %v322 = vrcp.pop %v321
    %v323 = vmul.f32 1.0, %v322
    %v324 = vadd.f32 %v302, %v60
    %v325 = vmul.f32 %v313, %v324
    %v326 = vadd.f32 %v64, %v325
    %v327 = vtanh.pop %v326
    %v328 = vsub.f32 1.0, %v323
    %v329 = vmul.f32 %v328, %v327
    %v330 = vmul.f32 %v323, %v61
    %v331 = vadd.f32 %v329, %v330
    %332 = vst [vmem:[#allocation9] sm:$0xf] %v331
    %s333 = scalar_lea.vmem [#allocation3], 6
    %v334 = vld [vmem:[%s333] sm:$0x3f]
    %v335 = vunpack.c.l.bf16 %v334
    %v336 = vunpack.c.h.bf16 %v334
    %v337 = vpack.c.bf16 %v331, %v331
    %v338 = vld [vmem:[#allocation6] sm:$0xff]
    %v339 = vld [vmem:[#allocation6 + $0x8] sm:$0xf]
    %v340 = vld [vmem:[#allocation6 + $0xc] sm:$0xff]
    %v341 = vld [vmem:[#allocation6 + $0x14] sm:$0xf]
    %v342 = vld [vmem:[#allocation6 + $0x18] sm:$0xff]
    %v343 = vld [vmem:[#allocation6 + $0x20] sm:$0xf]
    %v344 = vld [vmem:[#allocation6 + $0x24] sm:$0xff]
    %v345 = vld [vmem:[#allocation6 + $0x2c] sm:$0xf]
    %v346 = vld [vmem:[#allocation6 + $0x30] sm:$0xff]
    %v347 = vld [vmem:[#allocation6 + $0x38] sm:$0xf]
    %v348 = vld [vmem:[#allocation6 + $0x3c] sm:$0xff]
    %v349 = vld [vmem:[#allocation6 + $0x44] sm:$0xf]
    %v350 = vld [vmem:[#allocation6 + $0x48] sm:$0xff]
    %v351 = vld [vmem:[#allocation6 + $0x50] sm:$0xf]
    %v352 = vld [vmem:[#allocation6 + $0x54] sm:$0xff]
    %v353 = vld [vmem:[#allocation6 + $0x5c] sm:$0xf]
    %v354 = vld [vmem:[#allocation6 + $0x60] sm:$0xff]
    %v355 = vld [vmem:[#allocation6 + $0x68] sm:$0xf]
    %v356 = vld [vmem:[#allocation6 + $0x6c] sm:$0xff]
    %v357 = vld [vmem:[#allocation6 + $0x74] sm:$0xf]
    %v358 = vld [vmem:[#allocation6 + $0x78] sm:$0xff]
    %v359 = vld [vmem:[#allocation6 + $0x80] sm:$0xf]
    %v360 = vld [vmem:[#allocation6 + $0x84] sm:$0xff]
    %v361 = vld [vmem:[#allocation6 + $0x8c] sm:$0xf]
    %v362 = vld [vmem:[#allocation6 + $0x90] sm:$0xff]
    %v363 = vld [vmem:[#allocation6 + $0x98] sm:$0xf]
    %v364 = vld [vmem:[#allocation6 + $0x9c] sm:$0xff]
    %v365 = vld [vmem:[#allocation6 + $0xa4] sm:$0xf]
    %v366 = vld [vmem:[#allocation6 + $0xa8] sm:$0xff]
    %v367 = vld [vmem:[#allocation6 + $0xb0] sm:$0xf]
    %v368 = vld [vmem:[#allocation6 + $0xb4] sm:$0xff]
    %v369 = vld [vmem:[#allocation6 + $0xbc] sm:$0xf]
    %v402 = vunpack.c.l.b16 %v338
    %v403 = vunpack.c.h.b16 %v338
    %v404 = vunpack.c.l.b16 %v339
    %v405 = vunpack.c.l.b16 %v340
    %v406 = vunpack.c.h.b16 %v340
    %v407 = vunpack.c.l.b16 %v341
    %v408 = vunpack.c.l.b16 %v342
    %v409 = vunpack.c.h.b16 %v342
    %v410 = vunpack.c.l.b16 %v343
    %v411 = vunpack.c.l.b16 %v344
    %v412 = vunpack.c.h.b16 %v344
    %v413 = vunpack.c.l.b16 %v345
    %v414 = vunpack.c.l.b16 %v346
    %v415 = vunpack.c.h.b16 %v346
    %v416 = vunpack.c.l.b16 %v347
    %v417 = vunpack.c.l.b16 %v348
    %v418 = vunpack.c.h.b16 %v348
    %v419 = vunpack.c.l.b16 %v349
    %v420 = vunpack.c.l.b16 %v350
    %v421 = vunpack.c.h.b16 %v350
    %v422 = vunpack.c.l.b16 %v351
    %v423 = vunpack.c.l.b16 %v352
    %v424 = vunpack.c.h.b16 %v352
    %v425 = vunpack.c.l.b16 %v353
    %v426 = vunpack.c.l.b16 %v354
    %v427 = vunpack.c.h.b16 %v354
    %v428 = vunpack.c.l.b16 %v355
    %v429 = vunpack.c.l.b16 %v356
    %v430 = vunpack.c.h.b16 %v356
    %v431 = vunpack.c.l.b16 %v357
    %v432 = vunpack.c.l.b16 %v358
    %v433 = vunpack.c.h.b16 %v358
    %v434 = vunpack.c.l.b16 %v359
    %v435 = vunpack.c.l.b16 %v360
    %v436 = vunpack.c.h.b16 %v360
    %v437 = vunpack.c.l.b16 %v361
    %v438 = vunpack.c.l.b16 %v362
    %v439 = vunpack.c.h.b16 %v362
    %v440 = vunpack.c.l.b16 %v363
    %v441 = vunpack.c.l.b16 %v364
    %v442 = vunpack.c.h.b16 %v364
    %v443 = vunpack.c.l.b16 %v365
    %v444 = vunpack.c.l.b16 %v366
    %v445 = vunpack.c.h.b16 %v366
    %v446 = vunpack.c.l.b16 %v367
    %v447 = vunpack.c.l.b16 %v368
    %v448 = vunpack.c.h.b16 %v368
    %v449 = vunpack.c.l.b16 %v369
    %v450 = vpack.c.b16 %v405, %v402
    %v451 = vpack.c.b16 %v406, %v403
    %v452 = vpack.c.b16 %v407, %v404
    %v453 = vpack.c.b16 %v411, %v408
    %v454 = vpack.c.b16 %v412, %v409
    %v455 = vpack.c.b16 %v413, %v410
    %v456 = vpack.c.b16 %v417, %v414
    %v457 = vpack.c.b16 %v418, %v415
    %v458 = vpack.c.b16 %v419, %v416
    %v459 = vpack.c.b16 %v423, %v420
    %v460 = vpack.c.b16 %v424, %v421
    %v461 = vpack.c.b16 %v425, %v422
    %v462 = vpack.c.b16 %v429, %v426
    %v463 = vpack.c.b16 %v430, %v427
    %v464 = vpack.c.b16 %v431, %v428
    %v465 = vpack.c.b16 %v435, %v432
    %v466 = vpack.c.b16 %v436, %v433
    %v467 = vpack.c.b16 %v437, %v434
    %v468 = vpack.c.b16 %v441, %v438
    %v469 = vpack.c.b16 %v442, %v439
    %v470 = vpack.c.b16 %v443, %v440
    %v471 = vpack.c.b16 %v447, %v444
    %v472 = vpack.c.b16 %v448, %v445
    %v473 = vpack.c.b16 %v449, %v446
    %498 = vmatprep.subr.bf16.mxu0 %v451
    %499 = vmatpush1.bf16.msra.mxu0 %v450
    %500 = vmatprep.subr.bf16.mxu0 %v454
    %501 = vmatpush1.bf16.msra.mxu0 %v453
    %502 = vmatprep.subr.bf16.mxu0 %v457
    %503 = vmatpush1.bf16.msra.mxu0 %v456
    %504 = vmatprep.subr.bf16.mxu0 %v460
    %505 = vmatpush1.bf16.msra.mxu0 %v459
    %506 = vmatprep.subr.bf16.mxu0 %v463
    %507 = vmatpush1.bf16.msra.mxu0 %v462
    %508 = vmatprep.subr.bf16.mxu0 %v466
    %509 = vmatpush1.bf16.msra.mxu0 %v465
    %510 = vmatprep.subr.bf16.mxu0 %v469
    %511 = vmatpush1.bf16.msra.mxu0 %v468
    %512 = vmatprep.subr.bf16.mxu0 %v472
    %513 = vmatpush1.bf16.msra.mxu0 %v471
    %514 = vmatprep.subr.bf16.mxu0 0
    %515 = vmatpush1.bf16.msra.mxu0 0
    %516 = vmatprep.subr.bf16.mxu0 0
    %517 = vmatpush1.bf16.msra.mxu0 0
    %518 = vmatprep.subr.bf16.mxu0 0
    %519 = vmatpush1.bf16.msra.mxu0 0
    %520 = vmatprep.subr.bf16.mxu0 0
    %521 = vmatpush1.bf16.msra.mxu0 0
    %522 = vmatprep.subr.bf16.mxu0 0
    %523 = vmatpush1.bf16.msra.mxu0 0
    %524 = vmatprep.subr.bf16.mxu0 0
    %525 = vmatpush1.bf16.msra.mxu0 0
    %526 = vmatprep.subr.bf16.mxu0 0
    %527 = vmatpush1.bf16.msra.mxu0 0
    %528 = vmatprep.subr.bf16.mxu0 0
    %529 = vmatpush1.bf16.msra.mxu0 0
    %530 = vmatprep.mubr.bf16.mxu0 0
    %531 = vmatmul.mubr.bf16.gmra.mrb[0].mxu0 %v337
    %v532 = vpop.f32.mrb[0].mxu0
    %v533 = vadd.f32 0.0, %v532
    %v534 = vpop.f32.mrb[0].mxu0
    %v535 = vadd.f32 0.0, %v534
    %v536 = vpop.f32.mrb[0].mxu0
    %v537 = vpop.f32.mrb[0].mxu0
    %538 = vdwg.mxu0
    %539 = vmatprep.subr.bf16.mxu0 0
    %540 = vmatpush1.bf16.msra.mxu0 %v452
    %541 = vmatprep.subr.bf16.mxu0 0
    %542 = vmatpush1.bf16.msra.mxu0 %v455
    %543 = vmatprep.subr.bf16.mxu0 0
    %544 = vmatpush1.bf16.msra.mxu0 %v458
    %545 = vmatprep.subr.bf16.mxu0 0
    %546 = vmatpush1.bf16.msra.mxu0 %v461
    %547 = vmatprep.subr.bf16.mxu0 0
    %548 = vmatpush1.bf16.msra.mxu0 %v464
    %549 = vmatprep.subr.bf16.mxu0 0
    %550 = vmatpush1.bf16.msra.mxu0 %v467
    %551 = vmatprep.subr.bf16.mxu0 0
    %552 = vmatpush1.bf16.msra.mxu0 %v470
    %553 = vmatprep.subr.bf16.mxu0 0
    %554 = vmatpush1.bf16.msra.mxu0 %v473
    %555 = vmatprep.subr.bf16.mxu0 0
    %556 = vmatpush1.bf16.msra.mxu0 0
    %557 = vmatprep.subr.bf16.mxu0 0
    %558 = vmatpush1.bf16.msra.mxu0 0
    %559 = vmatprep.subr.bf16.mxu0 0
    %560 = vmatpush1.bf16.msra.mxu0 0
    %561 = vmatprep.subr.bf16.mxu0 0
    %562 = vmatpush1.bf16.msra.mxu0 0
    %563 = vmatprep.subr.bf16.mxu0 0
    %564 = vmatpush1.bf16.msra.mxu0 0
    %565 = vmatprep.subr.bf16.mxu0 0
    %566 = vmatpush1.bf16.msra.mxu0 0
    %567 = vmatprep.subr.bf16.mxu0 0
    %568 = vmatpush1.bf16.msra.mxu0 0
    %569 = vmatprep.subr.bf16.mxu0 0
    %570 = vmatpush1.bf16.msra.mxu0 0
    %571 = vmatprep.mubr.bf16.mxu0 0
    %572 = vmatmul.mubr.bf16.gmra.mrb[0].mxu0 %v337
    %v573 = vpop.f32.mrb[0].mxu0
    %v574 = vadd.f32 0.0, %v573
    %v575 = vpop.f32.mrb[0].mxu0
    %v576 = vpop.f32.mrb[0].mxu0
    %v577 = vpop.f32.mrb[0].mxu0
    %578 = vdwg.mxu0
    %v579 = vadd.f32 %v335, %v533
    %v580 = vxor.u32 %v579, 2147483648
    %v581 = vmul.f32 %v580, 1.442695
    %v582 = vpow.pop %v581
    %v583 = vadd.f32 %v582, 1.0
    %v584 = vrcp.pop %v583
    %v585 = vmul.f32 1.0, %v584
    %v587 = vrot.slane %v335, 4
    %v589 = vadd.f32 %v587, %v535
    %v590 = vxor.u32 %v589, 2147483648
    %v591 = vmul.f32 %v590, 1.442695
    %v592 = vpow.pop %v591
    %v593 = vadd.f32 %v592, 1.0
    %v594 = vrcp.pop %v593
    %v595 = vmul.f32 1.0, %v594
    %v596 = vadd.f32 %v574, %v60
    %v597 = vmul.f32 %v585, %v596
    %v598 = vadd.f32 %v336, %v597
    %v599 = vtanh.pop %v598
    %v600 = vsub.f32 1.0, %v595
    %v601 = vmul.f32 %v600, %v599
    %v602 = vmul.f32 %v595, %v331
    %v603 = vadd.f32 %v601, %v602
    %s604 = scalar_lea.vmem [#allocation9], 4
    %605 = vst [vmem:[%s604] sm:$0xf] %v603
    %s606 = scalar_lea.vmem [#allocation3], 12
    %v607 = vld [vmem:[%s606] sm:$0x3f]
    %v608 = vunpack.c.l.bf16 %v607
    %v609 = vunpack.c.h.bf16 %v607
    %v610 = vpack.c.bf16 %v603, %v603
    %v611 = vld [vmem:[#allocation6] sm:$0xff]
    %v612 = vld [vmem:[#allocation6 + $0x8] sm:$0xf]
    %v613 = vld [vmem:[#allocation6 + $0xc] sm:$0xff]
    %v614 = vld [vmem:[#allocation6 + $0x14] sm:$0xf]
    %v615 = vld [vmem:[#allocation6 + $0x18] sm:$0xff]
    %v616 = vld [vmem:[#allocation6 + $0x20] sm:$0xf]
    %v617 = vld [vmem:[#allocation6 + $0x24] sm:$0xff]
    %v618 = vld [vmem:[#allocation6 + $0x2c] sm:$0xf]
    %v619 = vld [vmem:[#allocation6 + $0x30] sm:$0xff]
    %v620 = vld [vmem:[#allocation6 + $0x38] sm:$0xf]
    %v621 = vld [vmem:[#allocation6 + $0x3c] sm:$0xff]
    %v622 = vld [vmem:[#allocation6 + $0x44] sm:$0xf]
    %v623 = vld [vmem:[#allocation6 + $0x48] sm:$0xff]
    %v624 = vld [vmem:[#allocation6 + $0x50] sm:$0xf]
    %v625 = vld [vmem:[#allocation6 + $0x54] sm:$0xff]
    %v626 = vld [vmem:[#allocation6 + $0x5c] sm:$0xf]
    %v627 = vld [vmem:[#allocation6 + $0x60] sm:$0xff]
    %v628 = vld [vmem:[#allocation6 + $0x68] sm:$0xf]
    %v629 = vld [vmem:[#allocation6 + $0x6c] sm:$0xff]
    %v630 = vld [vmem:[#allocation6 + $0x74] sm:$0xf]
    %v631 = vld [vmem:[#allocation6 + $0x78] sm:$0xff]
    %v632 = vld [vmem:[#allocation6 + $0x80] sm:$0xf]
    %v633 = vld [vmem:[#allocation6 + $0x84] sm:$0xff]
    %v634 = vld [vmem:[#allocation6 + $0x8c] sm:$0xf]
    %v635 = vld [vmem:[#allocation6 + $0x90] sm:$0xff]
    %v636 = vld [vmem:[#allocation6 + $0x98] sm:$0xf]
    %v637 = vld [vmem:[#allocation6 + $0x9c] sm:$0xff]
    %v638 = vld [vmem:[#allocation6 + $0xa4] sm:$0xf]
    %v639 = vld [vmem:[#allocation6 + $0xa8] sm:$0xff]
    %v640 = vld [vmem:[#allocation6 + $0xb0] sm:$0xf]
    %v641 = vld [vmem:[#allocation6 + $0xb4] sm:$0xff]
    %v642 = vld [vmem:[#allocation6 + $0xbc] sm:$0xf]
    %v675 = vunpack.c.l.b16 %v611
    %v676 = vunpack.c.h.b16 %v611
    %v677 = vunpack.c.l.b16 %v612
    %v678 = vunpack.c.l.b16 %v613
    %v679 = vunpack.c.h.b16 %v613
    %v680 = vunpack.c.l.b16 %v614
    %v681 = vunpack.c.l.b16 %v615
    %v682 = vunpack.c.h.b16 %v615
    %v683 = vunpack.c.l.b16 %v616
    %v684 = vunpack.c.l.b16 %v617
    %v685 = vunpack.c.h.b16 %v617
    %v686 = vunpack.c.l.b16 %v618
    %v687 = vunpack.c.l.b16 %v619
    %v688 = vunpack.c.h.b16 %v619
    %v689 = vunpack.c.l.b16 %v620
    %v690 = vunpack.c.l.b16 %v621
    %v691 = vunpack.c.h.b16 %v621
    %v692 = vunpack.c.l.b16 %v622
    %v693 = vunpack.c.l.b16 %v623
    %v694 = vunpack.c.h.b16 %v623
    %v695 = vunpack.c.l.b16 %v624
    %v696 = vunpack.c.l.b16 %v625
    %v697 = vunpack.c.h.b16 %v625
    %v698 = vunpack.c.l.b16 %v626
    %v699 = vunpack.c.l.b16 %v627
    %v700 = vunpack.c.h.b16 %v627
    %v701 = vunpack.c.l.b16 %v628
    %v702 = vunpack.c.l.b16 %v629
    %v703 = vunpack.c.h.b16 %v629
    %v704 = vunpack.c.l.b16 %v630
    %v705 = vunpack.c.l.b16 %v631
    %v706 = vunpack.c.h.b16 %v631
    %v707 = vunpack.c.l.b16 %v632
    %v708 = vunpack.c.l.b16 %v633
    %v709 = vunpack.c.h.b16 %v633
    %v710 = vunpack.c.l.b16 %v634
    %v711 = vunpack.c.l.b16 %v635
    %v712 = vunpack.c.h.b16 %v635
    %v713 = vunpack.c.l.b16 %v636
    %v714 = vunpack.c.l.b16 %v637
    %v715 = vunpack.c.h.b16 %v637
    %v716 = vunpack.c.l.b16 %v638
    %v717 = vunpack.c.l.b16 %v639
    %v718 = vunpack.c.h.b16 %v639
    %v719 = vunpack.c.l.b16 %v640
    %v720 = vunpack.c.l.b16 %v641
    %v721 = vunpack.c.h.b16 %v641
    %v722 = vunpack.c.l.b16 %v642
    %v723 = vpack.c.b16 %v678, %v675
    %v724 = vpack.c.b16 %v679, %v676
    %v725 = vpack.c.b16 %v680, %v677
    %v726 = vpack.c.b16 %v684, %v681
    %v727 = vpack.c.b16 %v685, %v682
    %v728 = vpack.c.b16 %v686, %v683
    %v729 = vpack.c.b16 %v690, %v687
    %v730 = vpack.c.b16 %v691, %v688
    %v731 = vpack.c.b16 %v692, %v689
    %v732 = vpack.c.b16 %v696, %v693
    %v733 = vpack.c.b16 %v697, %v694
    %v734 = vpack.c.b16 %v698, %v695
    %v735 = vpack.c.b16 %v702, %v699
    %v736 = vpack.c.b16 %v703, %v700
    %v737 = vpack.c.b16 %v704, %v701
    %v738 = vpack.c.b16 %v708, %v705
    %v739 = vpack.c.b16 %v709, %v706
    %v740 = vpack.c.b16 %v710, %v707
    %v741 = vpack.c.b16 %v714, %v711
    %v742 = vpack.c.b16 %v715, %v712
    %v743 = vpack.c.b16 %v716, %v713
    %v744 = vpack.c.b16 %v720, %v717
    %v745 = vpack.c.b16 %v721, %v718
    %v746 = vpack.c.b16 %v722, %v719
    %771 = vmatprep.subr.bf16.mxu0 %v724
    %772 = vmatpush1.bf16.msra.mxu0 %v723
    %773 = vmatprep.subr.bf16.mxu0 %v727
    %774 = vmatpush1.bf16.msra.mxu0 %v726
    %775 = vmatprep.subr.bf16.mxu0 %v730
    %776 = vmatpush1.bf16.msra.mxu0 %v729
    %777 = vmatprep.subr.bf16.mxu0 %v733
    %778 = vmatpush1.bf16.msra.mxu0 %v732
    %779 = vmatprep.subr.bf16.mxu0 %v736
    %780 = vmatpush1.bf16.msra.mxu0 %v735
    %781 = vmatprep.subr.bf16.mxu0 %v739
    %782 = vmatpush1.bf16.msra.mxu0 %v738
    %783 = vmatprep.subr.bf16.mxu0 %v742
    %784 = vmatpush1.bf16.msra.mxu0 %v741
    %785 = vmatprep.subr.bf16.mxu0 %v745
    %786 = vmatpush1.bf16.msra.mxu0 %v744
    %787 = vmatprep.subr.bf16.mxu0 0
    %788 = vmatpush1.bf16.msra.mxu0 0
    %789 = vmatprep.subr.bf16.mxu0 0
    %790 = vmatpush1.bf16.msra.mxu0 0
    %791 = vmatprep.subr.bf16.mxu0 0
    %792 = vmatpush1.bf16.msra.mxu0 0
    %793 = vmatprep.subr.bf16.mxu0 0
    %794 = vmatpush1.bf16.msra.mxu0 0
    %795 = vmatprep.subr.bf16.mxu0 0
    %796 = vmatpush1.bf16.msra.mxu0 0
    %797 = vmatprep.subr.bf16.mxu0 0
    %798 = vmatpush1.bf16.msra.mxu0 0
    %799 = vmatprep.subr.bf16.mxu0 0
    %800 = vmatpush1.bf16.msra.mxu0 0
    %801 = vmatprep.subr.bf16.mxu0 0
    %802 = vmatpush1.bf16.msra.mxu0 0
    %803 = vmatprep.mubr.bf16.mxu0 0
    %804 = vmatmul.mubr.bf16.gmra.mrb[0].mxu0 %v610
    %v805 = vpop.f32.mrb[0].mxu0
    %v806 = vadd.f32 0.0, %v805
    %v807 = vpop.f32.mrb[0].mxu0
    %v808 = vadd.f32 0.0, %v807
    %v809 = vpop.f32.mrb[0].mxu0
    %v810 = vpop.f32.mrb[0].mxu0
    %811 = vdwg.mxu0
    %812 = vmatprep.subr.bf16.mxu0 0
    %813 = vmatpush1.bf16.msra.mxu0 %v725
    %814 = vmatprep.subr.bf16.mxu0 0
    %815 = vmatpush1.bf16.msra.mxu0 %v728
    %816 = vmatprep.subr.bf16.mxu0 0
    %817 = vmatpush1.bf16.msra.mxu0 %v731
    %818 = vmatprep.subr.bf16.mxu0 0
    %819 = vmatpush1.bf16.msra.mxu0 %v734
    %820 = vmatprep.subr.bf16.mxu0 0
    %821 = vmatpush1.bf16.msra.mxu0 %v737
    %822 = vmatprep.subr.bf16.mxu0 0
    %823 = vmatpush1.bf16.msra.mxu0 %v740
    %824 = vmatprep.subr.bf16.mxu0 0
    %825 = vmatpush1.bf16.msra.mxu0 %v743
    %826 = vmatprep.subr.bf16.mxu0 0
    %827 = vmatpush1.bf16.msra.mxu0 %v746
    %828 = vmatprep.subr.bf16.mxu0 0
    %829 = vmatpush1.bf16.msra.mxu0 0
    %830 = vmatprep.subr.bf16.mxu0 0
    %831 = vmatpush1.bf16.msra.mxu0 0
    %832 = vmatprep.subr.bf16.mxu0 0
    %833 = vmatpush1.bf16.msra.mxu0 0
    %834 = vmatprep.subr.bf16.mxu0 0
    %835 = vmatpush1.bf16.msra.mxu0 0
    %836 = vmatprep.subr.bf16.mxu0 0
    %837 = vmatpush1.bf16.msra.mxu0 0
    %838 = vmatprep.subr.bf16.mxu0 0
    %839 = vmatpush1.bf16.msra.mxu0 0
    %840 = vmatprep.subr.bf16.mxu0 0
    %841 = vmatpush1.bf16.msra.mxu0 0
    %842 = vmatprep.subr.bf16.mxu0 0
    %843 = vmatpush1.bf16.msra.mxu0 0
    %844 = vmatprep.mubr.bf16.mxu0 0
    %845 = vmatmul.mubr.bf16.gmra.mrb[0].mxu0 %v610
    %v846 = vpop.f32.mrb[0].mxu0
    %v847 = vadd.f32 0.0, %v846
    %v848 = vpop.f32.mrb[0].mxu0
    %v849 = vpop.f32.mrb[0].mxu0
    %v850 = vpop.f32.mrb[0].mxu0
    %851 = vdwg.mxu0
    %v852 = vadd.f32 %v608, %v806
    %v853 = vxor.u32 %v852, 2147483648
    %v854 = vmul.f32 %v853, 1.442695
    %v855 = vpow.pop %v854
    %v856 = vadd.f32 %v855, 1.0
    %v857 = vrcp.pop %v856
    %v858 = vmul.f32 1.0, %v857
    %v860 = vrot.slane %v608, 4
    %v862 = vadd.f32 %v860, %v808
    %v863 = vxor.u32 %v862, 2147483648
    %v864 = vmul.f32 %v863, 1.442695
    %v865 = vpow.pop %v864
    %v866 = vadd.f32 %v865, 1.0
    %v867 = vrcp.pop %v866
    %v868 = vmul.f32 1.0, %v867
    %v869 = vadd.f32 %v847, %v60
    %v870 = vmul.f32 %v858, %v869
    %v871 = vadd.f32 %v609, %v870
    %v872 = vtanh.pop %v871
    %v873 = vsub.f32 1.0, %v868
    %v874 = vmul.f32 %v873, %v872
    %v875 = vmul.f32 %v868, %v603
    %v876 = vadd.f32 %v874, %v875
    %s877 = scalar_lea.vmem [#allocation9], 8
    %878 = vst [vmem:[%s877] sm:$0xf] %v876
    %s879 = scalar_lea.vmem [#allocation3], 18
    %v880 = vld [vmem:[%s879] sm:$0x3f]
    %v881 = vunpack.c.l.bf16 %v880
    %v882 = vunpack.c.h.bf16 %v880
    %v883 = vpack.c.bf16 %v876, %v876
    %v884 = vld [vmem:[#allocation6] sm:$0xff]
    %v885 = vld [vmem:[#allocation6 + $0x8] sm:$0xf]
    %v886 = vld [vmem:[#allocation6 + $0xc] sm:$0xff]
    %v887 = vld [vmem:[#allocation6 + $0x14] sm:$0xf]
    %v888 = vld [vmem:[#allocation6 + $0x18] sm:$0xff]
    %v889 = vld [vmem:[#allocation6 + $0x20] sm:$0xf]
    %v890 = vld [vmem:[#allocation6 + $0x24] sm:$0xff]
    %v891 = vld [vmem:[#allocation6 + $0x2c] sm:$0xf]
    %v892 = vld [vmem:[#allocation6 + $0x30] sm:$0xff]
    %v893 = vld [vmem:[#allocation6 + $0x38] sm:$0xf]
    %v894 = vld [vmem:[#allocation6 + $0x3c] sm:$0xff]
    %v895 = vld [vmem:[#allocation6 + $0x44] sm:$0xf]
    %v896 = vld [vmem:[#allocation6 + $0x48] sm:$0xff]
    %v897 = vld [vmem:[#allocation6 + $0x50] sm:$0xf]
    %v898 = vld [vmem:[#allocation6 + $0x54] sm:$0xff]
    %v899 = vld [vmem:[#allocation6 + $0x5c] sm:$0xf]
    %v900 = vld [vmem:[#allocation6 + $0x60] sm:$0xff]
    %v901 = vld [vmem:[#allocation6 + $0x68] sm:$0xf]
    %v902 = vld [vmem:[#allocation6 + $0x6c] sm:$0xff]
    %v903 = vld [vmem:[#allocation6 + $0x74] sm:$0xf]
    %v904 = vld [vmem:[#allocation6 + $0x78] sm:$0xff]
    %v905 = vld [vmem:[#allocation6 + $0x80] sm:$0xf]
    %v906 = vld [vmem:[#allocation6 + $0x84] sm:$0xff]
    %v907 = vld [vmem:[#allocation6 + $0x8c] sm:$0xf]
    %v908 = vld [vmem:[#allocation6 + $0x90] sm:$0xff]
    %v909 = vld [vmem:[#allocation6 + $0x98] sm:$0xf]
    %v910 = vld [vmem:[#allocation6 + $0x9c] sm:$0xff]
    %v911 = vld [vmem:[#allocation6 + $0xa4] sm:$0xf]
    %v912 = vld [vmem:[#allocation6 + $0xa8] sm:$0xff]
    %v913 = vld [vmem:[#allocation6 + $0xb0] sm:$0xf]
    %v914 = vld [vmem:[#allocation6 + $0xb4] sm:$0xff]
    %v915 = vld [vmem:[#allocation6 + $0xbc] sm:$0xf]
    %v948 = vunpack.c.l.b16 %v884
    %v949 = vunpack.c.h.b16 %v884
    %v950 = vunpack.c.l.b16 %v885
    %v951 = vunpack.c.l.b16 %v886
    %v952 = vunpack.c.h.b16 %v886
    %v953 = vunpack.c.l.b16 %v887
    %v954 = vunpack.c.l.b16 %v888
    %v955 = vunpack.c.h.b16 %v888
    %v956 = vunpack.c.l.b16 %v889
    %v957 = vunpack.c.l.b16 %v890
    %v958 = vunpack.c.h.b16 %v890
    %v959 = vunpack.c.l.b16 %v891
    %v960 = vunpack.c.l.b16 %v892
    %v961 = vunpack.c.h.b16 %v892
    %v962 = vunpack.c.l.b16 %v893
    %v963 = vunpack.c.l.b16 %v894
    %v964 = vunpack.c.h.b16 %v894
    %v965 = vunpack.c.l.b16 %v895
    %v966 = vunpack.c.l.b16 %v896
    %v967 = vunpack.c.h.b16 %v896
    %v968 = vunpack.c.l.b16 %v897
    %v969 = vunpack.c.l.b16 %v898
    %v970 = vunpack.c.h.b16 %v898
    %v971 = vunpack.c.l.b16 %v899
    %v972 = vunpack.c.l.b16 %v900
    %v973 = vunpack.c.h.b16 %v900
    %v974 = vunpack.c.l.b16 %v901
    %v975 = vunpack.c.l.b16 %v902
    %v976 = vunpack.c.h.b16 %v902
    %v977 = vunpack.c.l.b16 %v903
    %v978 = vunpack.c.l.b16 %v904
    %v979 = vunpack.c.h.b16 %v904
    %v980 = vunpack.c.l.b16 %v905
    %v981 = vunpack.c.l.b16 %v906
    %v982 = vunpack.c.h.b16 %v906
    %v983 = vunpack.c.l.b16 %v907
    %v984 = vunpack.c.l.b16 %v908
    %v985 = vunpack.c.h.b16 %v908
    %v986 = vunpack.c.l.b16 %v909
    %v987 = vunpack.c.l.b16 %v910
    %v988 = vunpack.c.h.b16 %v910
    %v989 = vunpack.c.l.b16 %v911
    %v990 = vunpack.c.l.b16 %v912
    %v991 = vunpack.c.h.b16 %v912
    %v992 = vunpack.c.l.b16 %v913
    %v993 = vunpack.c.l.b16 %v914
    %v994 = vunpack.c.h.b16 %v914
    %v995 = vunpack.c.l.b16 %v915
    %v996 = vpack.c.b16 %v951, %v948
    %v997 = vpack.c.b16 %v952, %v949
    %v998 = vpack.c.b16 %v953, %v950
    %v999 = vpack.c.b16 %v957, %v954
    %v1000 = vpack.c.b16 %v958, %v955
    %v1001 = vpack.c.b16 %v959, %v956
    %v1002 = vpack.c.b16 %v963, %v960
    %v1003 = vpack.c.b16 %v964, %v961
    %v1004 = vpack.c.b16 %v965, %v962
    %v1005 = vpack.c.b16 %v969, %v966
    %v1006 = vpack.c.b16 %v970, %v967
    %v1007 = vpack.c.b16 %v971, %v968
    %v1008 = vpack.c.b16 %v975, %v972
    %v1009 = vpack.c.b16 %v976, %v973
    %v1010 = vpack.c.b16 %v977, %v974
    %v1011 = vpack.c.b16 %v981, %v978
    %v1012 = vpack.c.b16 %v982, %v979
    %v1013 = vpack.c.b16 %v983, %v980
    %v1014 = vpack.c.b16 %v987, %v984
    %v1015 = vpack.c.b16 %v988, %v985
    %v1016 = vpack.c.b16 %v989, %v986
    %v1017 = vpack.c.b16 %v993, %v990
    %v1018 = vpack.c.b16 %v994, %v991
    %v1019 = vpack.c.b16 %v995, %v992
    %1044 = vmatprep.subr.bf16.mxu0 %v997
    %1045 = vmatpush1.bf16.msra.mxu0 %v996
    %1046 = vmatprep.subr.bf16.mxu0 %v1000
    %1047 = vmatpush1.bf16.msra.mxu0 %v999
    %1048 = vmatprep.subr.bf16.mxu0 %v1003
    %1049 = vmatpush1.bf16.msra.mxu0 %v1002
    %1050 = vmatprep.subr.bf16.mxu0 %v1006
    %1051 = vmatpush1.bf16.msra.mxu0 %v1005
    %1052 = vmatprep.subr.bf16.mxu0 %v1009
    %1053 = vmatpush1.bf16.msra.mxu0 %v1008
    %1054 = vmatprep.subr.bf16.mxu0 %v1012
    %1055 = vmatpush1.bf16.msra.mxu0 %v1011
    %1056 = vmatprep.subr.bf16.mxu0 %v1015
    %1057 = vmatpush1.bf16.msra.mxu0 %v1014
    %1058 = vmatprep.subr.bf16.mxu0 %v1018
    %1059 = vmatpush1.bf16.msra.mxu0 %v1017
    %1060 = vmatprep.subr.bf16.mxu0 0
    %1061 = vmatpush1.bf16.msra.mxu0 0
    %1062 = vmatprep.subr.bf16.mxu0 0
    %1063 = vmatpush1.bf16.msra.mxu0 0
    %1064 = vmatprep.subr.bf16.mxu0 0
    %1065 = vmatpush1.bf16.msra.mxu0 0
    %1066 = vmatprep.subr.bf16.mxu0 0
    %1067 = vmatpush1.bf16.msra.mxu0 0
    %1068 = vmatprep.subr.bf16.mxu0 0
    %1069 = vmatpush1.bf16.msra.mxu0 0
    %1070 = vmatprep.subr.bf16.mxu0 0
    %1071 = vmatpush1.bf16.msra.mxu0 0
    %1072 = vmatprep.subr.bf16.mxu0 0
    %1073 = vmatpush1.bf16.msra.mxu0 0
    %1074 = vmatprep.subr.bf16.mxu0 0
    %1075 = vmatpush1.bf16.msra.mxu0 0
    %1076 = vmatprep.mubr.bf16.mxu0 0
    %1077 = vmatmul.mubr.bf16.gmra.mrb[0].mxu0 %v883
    %v1078 = vpop.f32.mrb[0].mxu0
    %v1079 = vadd.f32 0.0, %v1078
    %v1080 = vpop.f32.mrb[0].mxu0
    %v1081 = vadd.f32 0.0, %v1080
    %v1082 = vpop.f32.mrb[0].mxu0
    %v1083 = vpop.f32.mrb[0].mxu0
    %1084 = vdwg.mxu0
    %1085 = vmatprep.subr.bf16.mxu0 0
    %1086 = vmatpush1.bf16.msra.mxu0 %v998
    %1087 = vmatprep.subr.bf16.mxu0 0
    %1088 = vmatpush1.bf16.msra.mxu0 %v1001
    %1089 = vmatprep.subr.bf16.mxu0 0
    %1090 = vmatpush1.bf16.msra.mxu0 %v1004
    %1091 = vmatprep.subr.bf16.mxu0 0
    %1092 = vmatpush1.bf16.msra.mxu0 %v1007
    %1093 = vmatprep.subr.bf16.mxu0 0
    %1094 = vmatpush1.bf16.msra.mxu0 %v1010
    %1095 = vmatprep.subr.bf16.mxu0 0
    %1096 = vmatpush1.bf16.msra.mxu0 %v1013
    %1097 = vmatprep.subr.bf16.mxu0 0
    %1098 = vmatpush1.bf16.msra.mxu0 %v1016
    %1099 = vmatprep.subr.bf16.mxu0 0
    %1100 = vmatpush1.bf16.msra.mxu0 %v1019
    %1101 = vmatprep.subr.bf16.mxu0 0
    %1102 = vmatpush1.bf16.msra.mxu0 0
    %1103 = vmatprep.subr.bf16.mxu0 0
    %1104 = vmatpush1.bf16.msra.mxu0 0
    %1105 = vmatprep.subr.bf16.mxu0 0
    %1106 = vmatpush1.bf16.msra.mxu0 0
    %1107 = vmatprep.subr.bf16.mxu0 0
    %1108 = vmatpush1.bf16.msra.mxu0 0
    %1109 = vmatprep.subr.bf16.mxu0 0
    %1110 = vmatpush1.bf16.msra.mxu0 0
    %1111 = vmatprep.subr.bf16.mxu0 0
    %1112 = vmatpush1.bf16.msra.mxu0 0
    %1113 = vmatprep.subr.bf16.mxu0 0
    %1114 = vmatpush1.bf16.msra.mxu0 0
    %1115 = vmatprep.subr.bf16.mxu0 0
    %1116 = vmatpush1.bf16.msra.mxu0 0
    %1117 = vmatprep.mubr.bf16.mxu0 0
    %1118 = vmatmul.mubr.bf16.gmra.mrb[0].mxu0 %v883
    %v1119 = vpop.f32.mrb[0].mxu0
    %v1120 = vadd.f32 0.0, %v1119
    %v1121 = vpop.f32.mrb[0].mxu0
    %v1122 = vpop.f32.mrb[0].mxu0
    %v1123 = vpop.f32.mrb[0].mxu0
    %1124 = vdwg.mxu0
    %v1125 = vadd.f32 %v881, %v1079
    %v1126 = vxor.u32 %v1125, 2147483648
    %v1127 = vmul.f32 %v1126, 1.442695
    %v1128 = vpow.pop %v1127
    %v1129 = vadd.f32 %v1128, 1.0
    %v1130 = vrcp.pop %v1129
    %v1131 = vmul.f32 1.0, %v1130
    %v1133 = vrot.slane %v881, 4
    %v1135 = vadd.f32 %v1133, %v1081
    %v1136 = vxor.u32 %v1135, 2147483648
    %v1137 = vmul.f32 %v1136, 1.442695
    %v1138 = vpow.pop %v1137
    %v1139 = vadd.f32 %v1138, 1.0
    %v1140 = vrcp.pop %v1139
    %v1141 = vmul.f32 1.0, %v1140
    %v1142 = vadd.f32 %v1120, %v60
    %v1143 = vmul.f32 %v1131, %v1142
    %v1144 = vadd.f32 %v882, %v1143
    %v1145 = vtanh.pop %v1144
    %v1146 = vsub.f32 1.0, %v1141
    %v1147 = vmul.f32 %v1146, %v1145
    %v1148 = vmul.f32 %v1141, %v876
    %v1149 = vadd.f32 %v1147, %v1148
    %s1150 = scalar_lea.vmem [#allocation9], 12
    %1151 = vst [vmem:[%s1150] sm:$0xf] %v1149
    %s1152 = scalar_lea.vmem [#allocation3], 24
    %v1153 = vld [vmem:[%s1152] sm:$0x3f]
    %v1154 = vunpack.c.l.bf16 %v1153
    %v1155 = vunpack.c.h.bf16 %v1153
    %v1156 = vpack.c.bf16 %v1149, %v1149
    %v1157 = vld [vmem:[#allocation6] sm:$0xff]
    %v1158 = vld [vmem:[#allocation6 + $0x8] sm:$0xf]
    %v1159 = vld [vmem:[#allocation6 + $0xc] sm:$0xff]
    %v1160 = vld [vmem:[#allocation6 + $0x14] sm:$0xf]
    %v1161 = vld [vmem:[#allocation6 + $0x18] sm:$0xff]
    %v1162 = vld [vmem:[#allocation6 + $0x20] sm:$0xf]
    %v1163 = vld [vmem:[#allocation6 + $0x24] sm:$0xff]
    %v1164 = vld [vmem:[#allocation6 + $0x2c] sm:$0xf]
    %v1165 = vld [vmem:[#allocation6 + $0x30] sm:$0xff]
    %v1166 = vld [vmem:[#allocation6 + $0x38] sm:$0xf]
    %v1167 = vld [vmem:[#allocation6 + $0x3c] sm:$0xff]
    %v1168 = vld [vmem:[#allocation6 + $0x44] sm:$0xf]
    %v1169 = vld [vmem:[#allocation6 + $0x48] sm:$0xff]
    %v1170 = vld [vmem:[#allocation6 + $0x50] sm:$0xf]
    %v1171 = vld [vmem:[#allocation6 + $0x54] sm:$0xff]
    %v1172 = vld [vmem:[#allocation6 + $0x5c] sm:$0xf]
    %v1173 = vld [vmem:[#allocation6 + $0x60] sm:$0xff]
    %v1174 = vld [vmem:[#allocation6 + $0x68] sm:$0xf]
    %v1175 = vld [vmem:[#allocation6 + $0x6c] sm:$0xff]
    %v1176 = vld [vmem:[#allocation6 + $0x74] sm:$0xf]
    %v1177 = vld [vmem:[#allocation6 + $0x78] sm:$0xff]
    %v1178 = vld [vmem:[#allocation6 + $0x80] sm:$0xf]
    %v1179 = vld [vmem:[#allocation6 + $0x84] sm:$0xff]
    %v1180 = vld [vmem:[#allocation6 + $0x8c] sm:$0xf]
    %v1181 = vld [vmem:[#allocation6 + $0x90] sm:$0xff]
    %v1182 = vld [vmem:[#allocation6 + $0x98] sm:$0xf]
    %v1183 = vld [vmem:[#allocation6 + $0x9c] sm:$0xff]
    %v1184 = vld [vmem:[#allocation6 + $0xa4] sm:$0xf]
    %v1185 = vld [vmem:[#allocation6 + $0xa8] sm:$0xff]
    %v1186 = vld [vmem:[#allocation6 + $0xb0] sm:$0xf]
    %v1187 = vld [vmem:[#allocation6 + $0xb4] sm:$0xff]
    %v1188 = vld [vmem:[#allocation6 + $0xbc] sm:$0xf]
    %v1221 = vunpack.c.l.b16 %v1157
    %v1222 = vunpack.c.h.b16 %v1157
    %v1223 = vunpack.c.l.b16 %v1158
    %v1224 = vunpack.c.l.b16 %v1159
    %v1225 = vunpack.c.h.b16 %v1159
    %v1226 = vunpack.c.l.b16 %v1160
    %v1227 = vunpack.c.l.b16 %v1161
    %v1228 = vunpack.c.h.b16 %v1161
    %v1229 = vunpack.c.l.b16 %v1162
    %v1230 = vunpack.c.l.b16 %v1163
    %v1231 = vunpack.c.h.b16 %v1163
    %v1232 = vunpack.c.l.b16 %v1164
    %v1233 = vunpack.c.l.b16 %v1165
    %v1234 = vunpack.c.h.b16 %v1165
    %v1235 = vunpack.c.l.b16 %v1166
    %v1236 = vunpack.c.l.b16 %v1167
    %v1237 = vunpack.c.h.b16 %v1167
    %v1238 = vunpack.c.l.b16 %v1168
    %v1239 = vunpack.c.l.b16 %v1169
    %v1240 = vunpack.c.h.b16 %v1169
    %v1241 = vunpack.c.l.b16 %v1170
    %v1242 = vunpack.c.l.b16 %v1171
    %v1243 = vunpack.c.h.b16 %v1171
    %v1244 = vunpack.c.l.b16 %v1172
    %v1245 = vunpack.c.l.b16 %v1173
    %v1246 = vunpack.c.h.b16 %v1173
    %v1247 = vunpack.c.l.b16 %v1174
    %v1248 = vunpack.c.l.b16 %v1175
    %v1249 = vunpack.c.h.b16 %v1175
    %v1250 = vunpack.c.l.b16 %v1176
    %v1251 = vunpack.c.l.b16 %v1177
    %v1252 = vunpack.c.h.b16 %v1177
    %v1253 = vunpack.c.l.b16 %v1178
    %v1254 = vunpack.c.l.b16 %v1179
    %v1255 = vunpack.c.h.b16 %v1179
    %v1256 = vunpack.c.l.b16 %v1180
    %v1257 = vunpack.c.l.b16 %v1181
    %v1258 = vunpack.c.h.b16 %v1181
    %v1259 = vunpack.c.l.b16 %v1182
    %v1260 = vunpack.c.l.b16 %v1183
    %v1261 = vunpack.c.h.b16 %v1183
    %v1262 = vunpack.c.l.b16 %v1184
    %v1263 = vunpack.c.l.b16 %v1185
    %v1264 = vunpack.c.h.b16 %v1185
    %v1265 = vunpack.c.l.b16 %v1186
    %v1266 = vunpack.c.l.b16 %v1187
    %v1267 = vunpack.c.h.b16 %v1187
    %v1268 = vunpack.c.l.b16 %v1188
    %v1269 = vpack.c.b16 %v1224, %v1221
    %v1270 = vpack.c.b16 %v1225, %v1222
    %v1271 = vpack.c.b16 %v1226, %v1223
    %v1272 = vpack.c.b16 %v1230, %v1227
    %v1273 = vpack.c.b16 %v1231, %v1228
    %v1274 = vpack.c.b16 %v1232, %v1229
    %v1275 = vpack.c.b16 %v1236, %v1233
    %v1276 = vpack.c.b16 %v1237, %v1234
    %v1277 = vpack.c.b16 %v1238, %v1235
    %v1278 = vpack.c.b16 %v1242, %v1239
    %v1279 = vpack.c.b16 %v1243, %v1240
    %v1280 = vpack.c.b16 %v1244, %v1241
    %v1281 = vpack.c.b16 %v1248, %v1245
    %v1282 = vpack.c.b16 %v1249, %v1246
    %v1283 = vpack.c.b16 %v1250, %v1247
    %v1284 = vpack.c.b16 %v1254, %v1251
    %v1285 = vpack.c.b16 %v1255, %v1252
    %v1286 = vpack.c.b16 %v1256, %v1253
    %v1287 = vpack.c.b16 %v1260, %v1257
    %v1288 = vpack.c.b16 %v1261, %v1258
    %v1289 = vpack.c.b16 %v1262, %v1259
    %v1290 = vpack.c.b16 %v1266, %v1263
    %v1291 = vpack.c.b16 %v1267, %v1264
    %v1292 = vpack.c.b16 %v1268, %v1265
    %1317 = vmatprep.subr.bf16.mxu0 %v1270
    %1318 = vmatpush1.bf16.msra.mxu0 %v1269
    %1319 = vmatprep.subr.bf16.mxu0 %v1273
    %1320 = vmatpush1.bf16.msra.mxu0 %v1272
    %1321 = vmatprep.subr.bf16.mxu0 %v1276
    %1322 = vmatpush1.bf16.msra.mxu0 %v1275
    %1323 = vmatprep.subr.bf16.mxu0 %v1279
    %1324 = vmatpush1.bf16.msra.mxu0 %v1278
    %1325 = vmatprep.subr.bf16.mxu0 %v1282
    %1326 = vmatpush1.bf16.msra.mxu0 %v1281
    %1327 = vmatprep.subr.bf16.mxu0 %v1285
    %1328 = vmatpush1.bf16.msra.mxu0 %v1284
    %1329 = vmatprep.subr.bf16.mxu0 %v1288
    %1330 = vmatpush1.bf16.msra.mxu0 %v1287
    %1331 = vmatprep.subr.bf16.mxu0 %v1291
    %1332 = vmatpush1.bf16.msra.mxu0 %v1290
    %1333 = vmatprep.subr.bf16.mxu0 0
    %1334 = vmatpush1.bf16.msra.mxu0 0
    %1335 = vmatprep.subr.bf16.mxu0 0
    %1336 = vmatpush1.bf16.msra.mxu0 0
    %1337 = vmatprep.subr.bf16.mxu0 0
    %1338 = vmatpush1.bf16.msra.mxu0 0
    %1339 = vmatprep.subr.bf16.mxu0 0
    %1340 = vmatpush1.bf16.msra.mxu0 0
    %1341 = vmatprep.subr.bf16.mxu0 0
    %1342 = vmatpush1.bf16.msra.mxu0 0
    %1343 = vmatprep.subr.bf16.mxu0 0
    %1344 = vmatpush1.bf16.msra.mxu0 0
    %1345 = vmatprep.subr.bf16.mxu0 0
    %1346 = vmatpush1.bf16.msra.mxu0 0
    %1347 = vmatprep.subr.bf16.mxu0 0
    %1348 = vmatpush1.bf16.msra.mxu0 0
    %1349 = vmatprep.mubr.bf16.mxu0 0
    %1350 = vmatmul.mubr.bf16.gmra.mrb[0].mxu0 %v1156
    %v1351 = vpop.f32.mrb[0].mxu0
    %v1352 = vadd.f32 0.0, %v1351
    %v1353 = vpop.f32.mrb[0].mxu0
    %v1354 = vadd.f32 0.0, %v1353
    %v1355 = vpop.f32.mrb[0].mxu0
    %v1356 = vpop.f32.mrb[0].mxu0
    %1357 = vdwg.mxu0
    %1358 = vmatprep.subr.bf16.mxu0 0
    %1359 = vmatpush1.bf16.msra.mxu0 %v1271
    %1360 = vmatprep.subr.bf16.mxu0 0
    %1361 = vmatpush1.bf16.msra.mxu0 %v1274
    %1362 = vmatprep.subr.bf16.mxu0 0
    %1363 = vmatpush1.bf16.msra.mxu0 %v1277
    %1364 = vmatprep.subr.bf16.mxu0 0
    %1365 = vmatpush1.bf16.msra.mxu0 %v1280
    %1366 = vmatprep.subr.bf16.mxu0 0
    %1367 = vmatpush1.bf16.msra.mxu0 %v1283
    %1368 = vmatprep.subr.bf16.mxu0 0
    %1369 = vmatpush1.bf16.msra.mxu0 %v1286
    %1370 = vmatprep.subr.bf16.mxu0 0
    %1371 = vmatpush1.bf16.msra.mxu0 %v1289
    %1372 = vmatprep.subr.bf16.mxu0 0
    %1373 = vmatpush1.bf16.msra.mxu0 %v1292
    %1374 = vmatprep.subr.bf16.mxu0 0
    %1375 = vmatpush1.bf16.msra.mxu0 0
    %1376 = vmatprep.subr.bf16.mxu0 0
    %1377 = vmatpush1.bf16.msra.mxu0 0
    %1378 = vmatprep.subr.bf16.mxu0 0
    %1379 = vmatpush1.bf16.msra.mxu0 0
    %1380 = vmatprep.subr.bf16.mxu0 0
    %1381 = vmatpush1.bf16.msra.mxu0 0
    %1382 = vmatprep.subr.bf16.mxu0 0
    %1383 = vmatpush1.bf16.msra.mxu0 0
    %1384 = vmatprep.subr.bf16.mxu0 0
    %1385 = vmatpush1.bf16.msra.mxu0 0
    %1386 = vmatprep.subr.bf16.mxu0 0
    %1387 = vmatpush1.bf16.msra.mxu0 0
    %1388 = vmatprep.subr.bf16.mxu0 0
    %1389 = vmatpush1.bf16.msra.mxu0 0
    %1390 = vmatprep.mubr.bf16.mxu0 0
    %1391 = vmatmul.mubr.bf16.gmra.mrb[0].mxu0 %v1156
    %v1392 = vpop.f32.mrb[0].mxu0
    %v1393 = vadd.f32 0.0, %v1392
    %v1394 = vpop.f32.mrb[0].mxu0
    %v1395 = vpop.f32.mrb[0].mxu0
    %v1396 = vpop.f32.mrb[0].mxu0
    %1397 = vdwg.mxu0
    %v1398 = vadd.f32 %v1154, %v1352
    %v1399 = vxor.u32 %v1398, 2147483648
    %v1400 = vmul.f32 %v1399, 1.442695
    %v1401 = vpow.pop %v1400
    %v1402 = vadd.f32 %v1401, 1.0
    %v1403 = vrcp.pop %v1402
    %v1404 = vmul.f32 1.0, %v1403
    %v1406 = vrot.slane %v1154, 4
    %v1408 = vadd.f32 %v1406, %v1354
    %v1409 = vxor.u32 %v1408, 2147483648
    %v1410 = vmul.f32 %v1409, 1.442695
    %v1411 = vpow.pop %v1410
    %v1412 = vadd.f32 %v1411, 1.0
    %v1413 = vrcp.pop %v1412
    %v1414 = vmul.f32 1.0, %v1413
    %v1415 = vadd.f32 %v1393, %v60
    %v1416 = vmul.f32 %v1404, %v1415
    %v1417 = vadd.f32 %v1155, %v1416
    %v1418 = vtanh.pop %v1417
    %v1419 = vsub.f32 1.0, %v1414
    %v1420 = vmul.f32 %v1419, %v1418
    %v1421 = vmul.f32 %v1414, %v1149
    %v1422 = vadd.f32 %v1420, %v1421
    %s1423 = scalar_lea.vmem [#allocation9], 16
    %1424 = vst [vmem:[%s1423] sm:$0xf] %v1422
    %s1425 = scalar_lea.vmem [#allocation3], 30
    %v1426 = vld [vmem:[%s1425] sm:$0x3f]
    %v1427 = vunpack.c.l.bf16 %v1426
    %v1428 = vunpack.c.h.bf16 %v1426
    %v1429 = vpack.c.bf16 %v1422, %v1422
    %v1430 = vld [vmem:[#allocation6] sm:$0xff]
    %v1431 = vld [vmem:[#allocation6 + $0x8] sm:$0xf]
    %v1432 = vld [vmem:[#allocation6 + $0xc] sm:$0xff]
    %v1433 = vld [vmem:[#allocation6 + $0x14] sm:$0xf]
    %v1434 = vld [vmem:[#allocation6 + $0x18] sm:$0xff]
    %v1435 = vld [vmem:[#allocation6 + $0x20] sm:$0xf]
    %v1436 = vld [vmem:[#allocation6 + $0x24] sm:$0xff]
    %v1437 = vld [vmem:[#allocation6 + $0x2c] sm:$0xf]
    %v1438 = vld [vmem:[#allocation6 + $0x30] sm:$0xff]
    %v1439 = vld [vmem:[#allocation6 + $0x38] sm:$0xf]
    %v1440 = vld [vmem:[#allocation6 + $0x3c] sm:$0xff]
    %v1441 = vld [vmem:[#allocation6 + $0x44] sm:$0xf]
    %v1442 = vld [vmem:[#allocation6 + $0x48] sm:$0xff]
    %v1443 = vld [vmem:[#allocation6 + $0x50] sm:$0xf]
    %v1444 = vld [vmem:[#allocation6 + $0x54] sm:$0xff]
    %v1445 = vld [vmem:[#allocation6 + $0x5c] sm:$0xf]
    %v1446 = vld [vmem:[#allocation6 + $0x60] sm:$0xff]
    %v1447 = vld [vmem:[#allocation6 + $0x68] sm:$0xf]
    %v1448 = vld [vmem:[#allocation6 + $0x6c] sm:$0xff]
    %v1449 = vld [vmem:[#allocation6 + $0x74] sm:$0xf]
    %v1450 = vld [vmem:[#allocation6 + $0x78] sm:$0xff]
    %v1451 = vld [vmem:[#allocation6 + $0x80] sm:$0xf]
    %v1452 = vld [vmem:[#allocation6 + $0x84] sm:$0xff]
    %v1453 = vld [vmem:[#allocation6 + $0x8c] sm:$0xf]
    %v1454 = vld [vmem:[#allocation6 + $0x90] sm:$0xff]
    %v1455 = vld [vmem:[#allocation6 + $0x98] sm:$0xf]
    %v1456 = vld [vmem:[#allocation6 + $0x9c] sm:$0xff]
    %v1457 = vld [vmem:[#allocation6 + $0xa4] sm:$0xf]
    %v1458 = vld [vmem:[#allocation6 + $0xa8] sm:$0xff]
    %v1459 = vld [vmem:[#allocation6 + $0xb0] sm:$0xf]
    %v1460 = vld [vmem:[#allocation6 + $0xb4] sm:$0xff]
    %v1461 = vld [vmem:[#allocation6 + $0xbc] sm:$0xf]
    %v1494 = vunpack.c.l.b16 %v1430
    %v1495 = vunpack.c.h.b16 %v1430
    %v1496 = vunpack.c.l.b16 %v1431
    %v1497 = vunpack.c.l.b16 %v1432
    %v1498 = vunpack.c.h.b16 %v1432
    %v1499 = vunpack.c.l.b16 %v1433
    %v1500 = vunpack.c.l.b16 %v1434
    %v1501 = vunpack.c.h.b16 %v1434
    %v1502 = vunpack.c.l.b16 %v1435
    %v1503 = vunpack.c.l.b16 %v1436
    %v1504 = vunpack.c.h.b16 %v1436
    %v1505 = vunpack.c.l.b16 %v1437
    %v1506 = vunpack.c.l.b16 %v1438
    %v1507 = vunpack.c.h.b16 %v1438
    %v1508 = vunpack.c.l.b16 %v1439
    %v1509 = vunpack.c.l.b16 %v1440
    %v1510 = vunpack.c.h.b16 %v1440
    %v1511 = vunpack.c.l.b16 %v1441
    %v1512 = vunpack.c.l.b16 %v1442
    %v1513 = vunpack.c.h.b16 %v1442
    %v1514 = vunpack.c.l.b16 %v1443
    %v1515 = vunpack.c.l.b16 %v1444
    %v1516 = vunpack.c.h.b16 %v1444
    %v1517 = vunpack.c.l.b16 %v1445
    %v1518 = vunpack.c.l.b16 %v1446
    %v1519 = vunpack.c.h.b16 %v1446
    %v1520 = vunpack.c.l.b16 %v1447
    %v1521 = vunpack.c.l.b16 %v1448
    %v1522 = vunpack.c.h.b16 %v1448
    %v1523 = vunpack.c.l.b16 %v1449
    %v1524 = vunpack.c.l.b16 %v1450
    %v1525 = vunpack.c.h.b16 %v1450
    %v1526 = vunpack.c.l.b16 %v1451
    %v1527 = vunpack.c.l.b16 %v1452
    %v1528 = vunpack.c.h.b16 %v1452
    %v1529 = vunpack.c.l.b16 %v1453
    %v1530 = vunpack.c.l.b16 %v1454
    %v1531 = vunpack.c.h.b16 %v1454
    %v1532 = vunpack.c.l.b16 %v1455
    %v1533 = vunpack.c.l.b16 %v1456
    %v1534 = vunpack.c.h.b16 %v1456
    %v1535 = vunpack.c.l.b16 %v1457
    %v1536 = vunpack.c.l.b16 %v1458
    %v1537 = vunpack.c.h.b16 %v1458
    %v1538 = vunpack.c.l.b16 %v1459
    %v1539 = vunpack.c.l.b16 %v1460
    %v1540 = vunpack.c.h.b16 %v1460
    %v1541 = vunpack.c.l.b16 %v1461
    %v1542 = vpack.c.b16 %v1497, %v1494
    %v1543 = vpack.c.b16 %v1498, %v1495
    %v1544 = vpack.c.b16 %v1499, %v1496
    %v1545 = vpack.c.b16 %v1503, %v1500
    %v1546 = vpack.c.b16 %v1504, %v1501
    %v1547 = vpack.c.b16 %v1505, %v1502
    %v1548 = vpack.c.b16 %v1509, %v1506
    %v1549 = vpack.c.b16 %v1510, %v1507
    %v1550 = vpack.c.b16 %v1511, %v1508
    %v1551 = vpack.c.b16 %v1515, %v1512
    %v1552 = vpack.c.b16 %v1516, %v1513
    %v1553 = vpack.c.b16 %v1517, %v1514
    %v1554 = vpack.c.b16 %v1521, %v1518
    %v1555 = vpack.c.b16 %v1522, %v1519
    %v1556 = vpack.c.b16 %v1523, %v1520
    %v1557 = vpack.c.b16 %v1527, %v1524
    %v1558 = vpack.c.b16 %v1528, %v1525
    %v1559 = vpack.c.b16 %v1529, %v1526
    %v1560 = vpack.c.b16 %v1533, %v1530
    %v1561 = vpack.c.b16 %v1534, %v1531
    %v1562 = vpack.c.b16 %v1535, %v1532
    %v1563 = vpack.c.b16 %v1539, %v1536
    %v1564 = vpack.c.b16 %v1540, %v1537
    %v1565 = vpack.c.b16 %v1541, %v1538
    %1590 = vmatprep.subr.bf16.mxu0 %v1543
    %1591 = vmatpush1.bf16.msra.mxu0 %v1542
    %1592 = vmatprep.subr.bf16.mxu0 %v1546
    %1593 = vmatpush1.bf16.msra.mxu0 %v1545
    %1594 = vmatprep.subr.bf16.mxu0 %v1549
    %1595 = vmatpush1.bf16.msra.mxu0 %v1548
    %1596 = vmatprep.subr.bf16.mxu0 %v1552
    %1597 = vmatpush1.bf16.msra.mxu0 %v1551
    %1598 = vmatprep.subr.bf16.mxu0 %v1555
    %1599 = vmatpush1.bf16.msra.mxu0 %v1554
    %1600 = vmatprep.subr.bf16.mxu0 %v1558
    %1601 = vmatpush1.bf16.msra.mxu0 %v1557
    %1602 = vmatprep.subr.bf16.mxu0 %v1561
    %1603 = vmatpush1.bf16.msra.mxu0 %v1560
    %1604 = vmatprep.subr.bf16.mxu0 %v1564
    %1605 = vmatpush1.bf16.msra.mxu0 %v1563
    %1606 = vmatprep.subr.bf16.mxu0 0
    %1607 = vmatpush1.bf16.msra.mxu0 0
    %1608 = vmatprep.subr.bf16.mxu0 0
    %1609 = vmatpush1.bf16.msra.mxu0 0
    %1610 = vmatprep.subr.bf16.mxu0 0
    %1611 = vmatpush1.bf16.msra.mxu0 0
    %1612 = vmatprep.subr.bf16.mxu0 0
    %1613 = vmatpush1.bf16.msra.mxu0 0
    %1614 = vmatprep.subr.bf16.mxu0 0
    %1615 = vmatpush1.bf16.msra.mxu0 0
    %1616 = vmatprep.subr.bf16.mxu0 0
    %1617 = vmatpush1.bf16.msra.mxu0 0
    %1618 = vmatprep.subr.bf16.mxu0 0
    %1619 = vmatpush1.bf16.msra.mxu0 0
    %1620 = vmatprep.subr.bf16.mxu0 0
    %1621 = vmatpush1.bf16.msra.mxu0 0
    %1622 = vmatprep.mubr.bf16.mxu0 0
    %1623 = vmatmul.mubr.bf16.gmra.mrb[0].mxu0 %v1429
    %v1624 = vpop.f32.mrb[0].mxu0
    %v1625 = vadd.f32 0.0, %v1624
    %v1626 = vpop.f32.mrb[0].mxu0
    %v1627 = vadd.f32 0.0, %v1626
    %v1628 = vpop.f32.mrb[0].mxu0
    %v1629 = vpop.f32.mrb[0].mxu0
    %1630 = vdwg.mxu0
    %1631 = vmatprep.subr.bf16.mxu0 0
    %1632 = vmatpush1.bf16.msra.mxu0 %v1544
    %1633 = vmatprep.subr.bf16.mxu0 0
    %1634 = vmatpush1.bf16.msra.mxu0 %v1547
    %1635 = vmatprep.subr.bf16.mxu0 0
    %1636 = vmatpush1.bf16.msra.mxu0 %v1550
    %1637 = vmatprep.subr.bf16.mxu0 0
    %1638 = vmatpush1.bf16.msra.mxu0 %v1553
    %1639 = vmatprep.subr.bf16.mxu0 0
    %1640 = vmatpush1.bf16.msra.mxu0 %v1556
    %1641 = vmatprep.subr.bf16.mxu0 0
    %1642 = vmatpush1.bf16.msra.mxu0 %v1559
    %1643 = vmatprep.subr.bf16.mxu0 0
    %1644 = vmatpush1.bf16.msra.mxu0 %v1562
    %1645 = vmatprep.subr.bf16.mxu0 0
    %1646 = vmatpush1.bf16.msra.mxu0 %v1565
    %1647 = vmatprep.subr.bf16.mxu0 0
    %1648 = vmatpush1.bf16.msra.mxu0 0
    %1649 = vmatprep.subr.bf16.mxu0 0
    %1650 = vmatpush1.bf16.msra.mxu0 0
    %1651 = vmatprep.subr.bf16.mxu0 0
    %1652 = vmatpush1.bf16.msra.mxu0 0
    %1653 = vmatprep.subr.bf16.mxu0 0
    %1654 = vmatpush1.bf16.msra.mxu0 0
    %1655 = vmatprep.subr.bf16.mxu0 0
    %1656 = vmatpush1.bf16.msra.mxu0 0
    %1657 = vmatprep.subr.bf16.mxu0 0
    %1658 = vmatpush1.bf16.msra.mxu0 0
    %1659 = vmatprep.subr.bf16.mxu0 0
    %1660 = vmatpush1.bf16.msra.mxu0 0
    %1661 = vmatprep.subr.bf16.mxu0 0
    %1662 = vmatpush1.bf16.msra.mxu0 0
    %1663 = vmatprep.mubr.bf16.mxu0 0
    %1664 = vmatmul.mubr.bf16.gmra.mrb[0].mxu0 %v1429
    %v1665 = vpop.f32.mrb[0].mxu0
    %v1666 = vadd.f32 0.0, %v1665
    %v1667 = vpop.f32.mrb[0].mxu0
    %v1668 = vpop.f32.mrb[0].mxu0
    %v1669 = vpop.f32.mrb[0].mxu0
    %1670 = vdwg.mxu0
    %v1671 = vadd.f32 %v1427, %v1625
    %v1672 = vxor.u32 %v1671, 2147483648
    %v1673 = vmul.f32 %v1672, 1.442695
    %v1674 = vpow.pop %v1673
    %v1675 = vadd.f32 %v1674, 1.0
    %v1676 = vrcp.pop %v1675
    %v1677 = vmul.f32 1.0, %v1676
    %v1679 = vrot.slane %v1427, 4
    %v1681 = vadd.f32 %v1679, %v1627
    %v1682 = vxor.u32 %v1681, 2147483648
    %v1683 = vmul.f32 %v1682, 1.442695
    %v1684 = vpow.pop %v1683
    %v1685 = vadd.f32 %v1684, 1.0
    %v1686 = vrcp.pop %v1685
    %v1687 = vmul.f32 1.0, %v1686
    %v1688 = vadd.f32 %v1666, %v60
    %v1689 = vmul.f32 %v1677, %v1688
    %v1690 = vadd.f32 %v1428, %v1689
    %v1691 = vtanh.pop %v1690
    %v1692 = vsub.f32 1.0, %v1687
    %v1693 = vmul.f32 %v1692, %v1691
    %v1694 = vmul.f32 %v1687, %v1422
    %v1695 = vadd.f32 %v1693, %v1694
    %s1696 = scalar_lea.vmem [#allocation9], 20
    %1697 = vst [vmem:[%s1696] sm:$0xf] %v1695
    %s1698 = scalar_lea.vmem [#allocation3], 36
    %v1699 = vld [vmem:[%s1698] sm:$0x3f]
    %v1700 = vunpack.c.l.bf16 %v1699
    %v1701 = vunpack.c.h.bf16 %v1699
    %v1702 = vpack.c.bf16 %v1695, %v1695
    %v1703 = vld [vmem:[#allocation6] sm:$0xff]
    %v1704 = vld [vmem:[#allocation6 + $0x8] sm:$0xf]
    %v1705 = vld [vmem:[#allocation6 + $0xc] sm:$0xff]
    %v1706 = vld [vmem:[#allocation6 + $0x14] sm:$0xf]
    %v1707 = vld [vmem:[#allocation6 + $0x18] sm:$0xff]
    %v1708 = vld [vmem:[#allocation6 + $0x20] sm:$0xf]
    %v1709 = vld [vmem:[#allocation6 + $0x24] sm:$0xff]
    %v1710 = vld [vmem:[#allocation6 + $0x2c] sm:$0xf]
    %v1711 = vld [vmem:[#allocation6 + $0x30] sm:$0xff]
    %v1712 = vld [vmem:[#allocation6 + $0x38] sm:$0xf]
    %v1713 = vld [vmem:[#allocation6 + $0x3c] sm:$0xff]
    %v1714 = vld [vmem:[#allocation6 + $0x44] sm:$0xf]
    %v1715 = vld [vmem:[#allocation6 + $0x48] sm:$0xff]
    %v1716 = vld [vmem:[#allocation6 + $0x50] sm:$0xf]
    %v1717 = vld [vmem:[#allocation6 + $0x54] sm:$0xff]
    %v1718 = vld [vmem:[#allocation6 + $0x5c] sm:$0xf]
    %v1719 = vld [vmem:[#allocation6 + $0x60] sm:$0xff]
    %v1720 = vld [vmem:[#allocation6 + $0x68] sm:$0xf]
    %v1721 = vld [vmem:[#allocation6 + $0x6c] sm:$0xff]
    %v1722 = vld [vmem:[#allocation6 + $0x74] sm:$0xf]
    %v1723 = vld [vmem:[#allocation6 + $0x78] sm:$0xff]
    %v1724 = vld [vmem:[#allocation6 + $0x80] sm:$0xf]
    %v1725 = vld [vmem:[#allocation6 + $0x84] sm:$0xff]
    %v1726 = vld [vmem:[#allocation6 + $0x8c] sm:$0xf]
    %v1727 = vld [vmem:[#allocation6 + $0x90] sm:$0xff]
    %v1728 = vld [vmem:[#allocation6 + $0x98] sm:$0xf]
    %v1729 = vld [vmem:[#allocation6 + $0x9c] sm:$0xff]
    %v1730 = vld [vmem:[#allocation6 + $0xa4] sm:$0xf]
    %v1731 = vld [vmem:[#allocation6 + $0xa8] sm:$0xff]
    %v1732 = vld [vmem:[#allocation6 + $0xb0] sm:$0xf]
    %v1733 = vld [vmem:[#allocation6 + $0xb4] sm:$0xff]
    %v1734 = vld [vmem:[#allocation6 + $0xbc] sm:$0xf]
    %v1767 = vunpack.c.l.b16 %v1703
    %v1768 = vunpack.c.h.b16 %v1703
    %v1769 = vunpack.c.l.b16 %v1704
    %v1770 = vunpack.c.l.b16 %v1705
    %v1771 = vunpack.c.h.b16 %v1705
    %v1772 = vunpack.c.l.b16 %v1706
    %v1773 = vunpack.c.l.b16 %v1707
    %v1774 = vunpack.c.h.b16 %v1707
    %v1775 = vunpack.c.l.b16 %v1708
    %v1776 = vunpack.c.l.b16 %v1709
    %v1777 = vunpack.c.h.b16 %v1709
    %v1778 = vunpack.c.l.b16 %v1710
    %v1779 = vunpack.c.l.b16 %v1711
    %v1780 = vunpack.c.h.b16 %v1711
    %v1781 = vunpack.c.l.b16 %v1712
    %v1782 = vunpack.c.l.b16 %v1713
    %v1783 = vunpack.c.h.b16 %v1713
    %v1784 = vunpack.c.l.b16 %v1714
    %v1785 = vunpack.c.l.b16 %v1715
    %v1786 = vunpack.c.h.b16 %v1715
    %v1787 = vunpack.c.l.b16 %v1716
    %v1788 = vunpack.c.l.b16 %v1717
    %v1789 = vunpack.c.h.b16 %v1717
    %v1790 = vunpack.c.l.b16 %v1718
    %v1791 = vunpack.c.l.b16 %v1719
    %v1792 = vunpack.c.h.b16 %v1719
    %v1793 = vunpack.c.l.b16 %v1720
    %v1794 = vunpack.c.l.b16 %v1721
    %v1795 = vunpack.c.h.b16 %v1721
    %v1796 = vunpack.c.l.b16 %v1722
    %v1797 = vunpack.c.l.b16 %v1723
    %v1798 = vunpack.c.h.b16 %v1723
    %v1799 = vunpack.c.l.b16 %v1724
    %v1800 = vunpack.c.l.b16 %v1725
    %v1801 = vunpack.c.h.b16 %v1725
    %v1802 = vunpack.c.l.b16 %v1726
    %v1803 = vunpack.c.l.b16 %v1727
    %v1804 = vunpack.c.h.b16 %v1727
    %v1805 = vunpack.c.l.b16 %v1728
    %v1806 = vunpack.c.l.b16 %v1729
    %v1807 = vunpack.c.h.b16 %v1729
    %v1808 = vunpack.c.l.b16 %v1730
    %v1809 = vunpack.c.l.b16 %v1731
    %v1810 = vunpack.c.h.b16 %v1731
    %v1811 = vunpack.c.l.b16 %v1732
    %v1812 = vunpack.c.l.b16 %v1733
    %v1813 = vunpack.c.h.b16 %v1733
    %v1814 = vunpack.c.l.b16 %v1734
    %v1815 = vpack.c.b16 %v1770, %v1767
    %v1816 = vpack.c.b16 %v1771, %v1768
    %v1817 = vpack.c.b16 %v1772, %v1769
    %v1818 = vpack.c.b16 %v1776, %v1773
    %v1819 = vpack.c.b16 %v1777, %v1774
    %v1820 = vpack.c.b16 %v1778, %v1775
    %v1821 = vpack.c.b16 %v1782, %v1779
    %v1822 = vpack.c.b16 %v1783, %v1780
    %v1823 = vpack.c.b16 %v1784, %v1781
    %v1824 = vpack.c.b16 %v1788, %v1785
    %v1825 = vpack.c.b16 %v1789, %v1786
    %v1826 = vpack.c.b16 %v1790, %v1787
    %v1827 = vpack.c.b16 %v1794, %v1791
    %v1828 = vpack.c.b16 %v1795, %v1792
    %v1829 = vpack.c.b16 %v1796, %v1793
    %v1830 = vpack.c.b16 %v1800, %v1797
    %v1831 = vpack.c.b16 %v1801, %v1798
    %v1832 = vpack.c.b16 %v1802, %v1799
    %v1833 = vpack.c.b16 %v1806, %v1803
    %v1834 = vpack.c.b16 %v1807, %v1804
    %v1835 = vpack.c.b16 %v1808, %v1805
    %v1836 = vpack.c.b16 %v1812, %v1809
    %v1837 = vpack.c.b16 %v1813, %v1810
    %v1838 = vpack.c.b16 %v1814, %v1811
    %1863 = vmatprep.subr.bf16.mxu0 %v1816
    %1864 = vmatpush1.bf16.msra.mxu0 %v1815
    %1865 = vmatprep.subr.bf16.mxu0 %v1819
    %1866 = vmatpush1.bf16.msra.mxu0 %v1818
    %1867 = vmatprep.subr.bf16.mxu0 %v1822
    %1868 = vmatpush1.bf16.msra.mxu0 %v1821
    %1869 = vmatprep.subr.bf16.mxu0 %v1825
    %1870 = vmatpush1.bf16.msra.mxu0 %v1824
    %1871 = vmatprep.subr.bf16.mxu0 %v1828
    %1872 = vmatpush1.bf16.msra.mxu0 %v1827
    %1873 = vmatprep.subr.bf16.mxu0 %v1831
    %1874 = vmatpush1.bf16.msra.mxu0 %v1830
    %1875 = vmatprep.subr.bf16.mxu0 %v1834
    %1876 = vmatpush1.bf16.msra.mxu0 %v1833
    %1877 = vmatprep.subr.bf16.mxu0 %v1837
    %1878 = vmatpush1.bf16.msra.mxu0 %v1836
    %1879 = vmatprep.subr.bf16.mxu0 0
    %1880 = vmatpush1.bf16.msra.mxu0 0
    %1881 = vmatprep.subr.bf16.mxu0 0
    %1882 = vmatpush1.bf16.msra.mxu0 0
    %1883 = vmatprep.subr.bf16.mxu0 0
    %1884 = vmatpush1.bf16.msra.mxu0 0
    %1885 = vmatprep.subr.bf16.mxu0 0
    %1886 = vmatpush1.bf16.msra.mxu0 0
    %1887 = vmatprep.subr.bf16.mxu0 0
    %1888 = vmatpush1.bf16.msra.mxu0 0
    %1889 = vmatprep.subr.bf16.mxu0 0
    %1890 = vmatpush1.bf16.msra.mxu0 0
    %1891 = vmatprep.subr.bf16.mxu0 0
    %1892 = vmatpush1.bf16.msra.mxu0 0
    %1893 = vmatprep.subr.bf16.mxu0 0
    %1894 = vmatpush1.bf16.msra.mxu0 0
    %1895 = vmatprep.mubr.bf16.mxu0 0
    %1896 = vmatmul.mubr.bf16.gmra.mrb[0].mxu0 %v1702
    %v1897 = vpop.f32.mrb[0].mxu0
    %v1898 = vadd.f32 0.0, %v1897
    %v1899 = vpop.f32.mrb[0].mxu0
    %v1900 = vadd.f32 0.0, %v1899
    %v1901 = vpop.f32.mrb[0].mxu0
    %v1902 = vpop.f32.mrb[0].mxu0
    %1903 = vdwg.mxu0
    %1904 = vmatprep.subr.bf16.mxu0 0
    %1905 = vmatpush1.bf16.msra.mxu0 %v1817
    %1906 = vmatprep.subr.bf16.mxu0 0
    %1907 = vmatpush1.bf16.msra.mxu0 %v1820
    %1908 = vmatprep.subr.bf16.mxu0 0
    %1909 = vmatpush1.bf16.msra.mxu0 %v1823
    %1910 = vmatprep.subr.bf16.mxu0 0
    %1911 = vmatpush1.bf16.msra.mxu0 %v1826
    %1912 = vmatprep.subr.bf16.mxu0 0
    %1913 = vmatpush1.bf16.msra.mxu0 %v1829
    %1914 = vmatprep.subr.bf16.mxu0 0
    %1915 = vmatpush1.bf16.msra.mxu0 %v1832
    %1916 = vmatprep.subr.bf16.mxu0 0
    %1917 = vmatpush1.bf16.msra.mxu0 %v1835
    %1918 = vmatprep.subr.bf16.mxu0 0
    %1919 = vmatpush1.bf16.msra.mxu0 %v1838
    %1920 = vmatprep.subr.bf16.mxu0 0
    %1921 = vmatpush1.bf16.msra.mxu0 0
    %1922 = vmatprep.subr.bf16.mxu0 0
    %1923 = vmatpush1.bf16.msra.mxu0 0
    %1924 = vmatprep.subr.bf16.mxu0 0
    %1925 = vmatpush1.bf16.msra.mxu0 0
    %1926 = vmatprep.subr.bf16.mxu0 0
    %1927 = vmatpush1.bf16.msra.mxu0 0
    %1928 = vmatprep.subr.bf16.mxu0 0
    %1929 = vmatpush1.bf16.msra.mxu0 0
    %1930 = vmatprep.subr.bf16.mxu0 0
    %1931 = vmatpush1.bf16.msra.mxu0 0
    %1932 = vmatprep.subr.bf16.mxu0 0
    %1933 = vmatpush1.bf16.msra.mxu0 0
    %1934 = vmatprep.subr.bf16.mxu0 0
    %1935 = vmatpush1.bf16.msra.mxu0 0
    %1936 = vmatprep.mubr.bf16.mxu0 0
    %1937 = vmatmul.mubr.bf16.gmra.mrb[0].mxu0 %v1702
    %v1938 = vpop.f32.mrb[0].mxu0
    %v1939 = vadd.f32 0.0, %v1938
    %v1940 = vpop.f32.mrb[0].mxu0
    %v1941 = vpop.f32.mrb[0].mxu0
    %v1942 = vpop.f32.mrb[0].mxu0
    %1943 = vdwg.mxu0
    %v1944 = vadd.f32 %v1700, %v1898
    %v1945 = vxor.u32 %v1944, 2147483648
    %v1946 = vmul.f32 %v1945, 1.442695
    %v1947 = vpow.pop %v1946
    %v1948 = vadd.f32 %v1947, 1.0
    %v1949 = vrcp.pop %v1948
    %v1950 = vmul.f32 1.0, %v1949
    %v1952 = vrot.slane %v1700, 4
    %v1954 = vadd.f32 %v1952, %v1900
    %v1955 = vxor.u32 %v1954, 2147483648
    %v1956 = vmul.f32 %v1955, 1.442695
    %v1957 = vpow.pop %v1956
    %v1958 = vadd.f32 %v1957, 1.0
    %v1959 = vrcp.pop %v1958
    %v1960 = vmul.f32 1.0, %v1959
    %v1961 = vadd.f32 %v1939, %v60
    %v1962 = vmul.f32 %v1950, %v1961
    %v1963 = vadd.f32 %v1701, %v1962
    %v1964 = vtanh.pop %v1963
    %v1965 = vsub.f32 1.0, %v1960
    %v1966 = vmul.f32 %v1965, %v1964
    %v1967 = vmul.f32 %v1960, %v1695
    %v1968 = vadd.f32 %v1966, %v1967
    %s1969 = scalar_lea.vmem [#allocation9], 24
    %1970 = vst [vmem:[%s1969] sm:$0xf] %v1968
    %s1971 = scalar_lea.vmem [#allocation3], 42
    %v1972 = vld [vmem:[%s1971] sm:$0x3f]
    %v1973 = vunpack.c.l.bf16 %v1972
    %v1974 = vunpack.c.h.bf16 %v1972
    %v1975 = vpack.c.bf16 %v1968, %v1968
    %v1976 = vld [vmem:[#allocation6] sm:$0xff]
    %v1977 = vld [vmem:[#allocation6 + $0x8] sm:$0xf]
    %v1978 = vld [vmem:[#allocation6 + $0xc] sm:$0xff]
    %v1979 = vld [vmem:[#allocation6 + $0x14] sm:$0xf]
    %v1980 = vld [vmem:[#allocation6 + $0x18] sm:$0xff]
    %v1981 = vld [vmem:[#allocation6 + $0x20] sm:$0xf]
    %v1982 = vld [vmem:[#allocation6 + $0x24] sm:$0xff]
    %v1983 = vld [vmem:[#allocation6 + $0x2c] sm:$0xf]
    %v1984 = vld [vmem:[#allocation6 + $0x30] sm:$0xff]
    %v1985 = vld [vmem:[#allocation6 + $0x38] sm:$0xf]
    %v1986 = vld [vmem:[#allocation6 + $0x3c] sm:$0xff]
    %v1987 = vld [vmem:[#allocation6 + $0x44] sm:$0xf]
    %v1988 = vld [vmem:[#allocation6 + $0x48] sm:$0xff]
    %v1989 = vld [vmem:[#allocation6 + $0x50] sm:$0xf]
    %v1990 = vld [vmem:[#allocation6 + $0x54] sm:$0xff]
    %v1991 = vld [vmem:[#allocation6 + $0x5c] sm:$0xf]
    %v1992 = vld [vmem:[#allocation6 + $0x60] sm:$0xff]
    %v1993 = vld [vmem:[#allocation6 + $0x68] sm:$0xf]
    %v1994 = vld [vmem:[#allocation6 + $0x6c] sm:$0xff]
    %v1995 = vld [vmem:[#allocation6 + $0x74] sm:$0xf]
    %v1996 = vld [vmem:[#allocation6 + $0x78] sm:$0xff]
    %v1997 = vld [vmem:[#allocation6 + $0x80] sm:$0xf]
    %v1998 = vld [vmem:[#allocation6 + $0x84] sm:$0xff]
    %v1999 = vld [vmem:[#allocation6 + $0x8c] sm:$0xf]
    %v2000 = vld [vmem:[#allocation6 + $0x90] sm:$0xff]
    %v2001 = vld [vmem:[#allocation6 + $0x98] sm:$0xf]
    %v2002 = vld [vmem:[#allocation6 + $0x9c] sm:$0xff]
    %v2003 = vld [vmem:[#allocation6 + $0xa4] sm:$0xf]
    %v2004 = vld [vmem:[#allocation6 + $0xa8] sm:$0xff]
    %v2005 = vld [vmem:[#allocation6 + $0xb0] sm:$0xf]
    %v2006 = vld [vmem:[#allocation6 + $0xb4] sm:$0xff]
    %v2007 = vld [vmem:[#allocation6 + $0xbc] sm:$0xf]
    %v2040 = vunpack.c.l.b16 %v1976
    %v2041 = vunpack.c.h.b16 %v1976
    %v2042 = vunpack.c.l.b16 %v1977
    %v2043 = vunpack.c.l.b16 %v1978
    %v2044 = vunpack.c.h.b16 %v1978
    %v2045 = vunpack.c.l.b16 %v1979
    %v2046 = vunpack.c.l.b16 %v1980
    %v2047 = vunpack.c.h.b16 %v1980
    %v2048 = vunpack.c.l.b16 %v1981
    %v2049 = vunpack.c.l.b16 %v1982
    %v2050 = vunpack.c.h.b16 %v1982
    %v2051 = vunpack.c.l.b16 %v1983
    %v2052 = vunpack.c.l.b16 %v1984
    %v2053 = vunpack.c.h.b16 %v1984
    %v2054 = vunpack.c.l.b16 %v1985
    %v2055 = vunpack.c.l.b16 %v1986
    %v2056 = vunpack.c.h.b16 %v1986
    %v2057 = vunpack.c.l.b16 %v1987
    %v2058 = vunpack.c.l.b16 %v1988
    %v2059 = vunpack.c.h.b16 %v1988
    %v2060 = vunpack.c.l.b16 %v1989
    %v2061 = vunpack.c.l.b16 %v1990
    %v2062 = vunpack.c.h.b16 %v1990
    %v2063 = vunpack.c.l.b16 %v1991
    %v2064 = vunpack.c.l.b16 %v1992
    %v2065 = vunpack.c.h.b16 %v1992
    %v2066 = vunpack.c.l.b16 %v1993
    %v2067 = vunpack.c.l.b16 %v1994
    %v2068 = vunpack.c.h.b16 %v1994
    %v2069 = vunpack.c.l.b16 %v1995
    %v2070 = vunpack.c.l.b16 %v1996
    %v2071 = vunpack.c.h.b16 %v1996
    %v2072 = vunpack.c.l.b16 %v1997
    %v2073 = vunpack.c.l.b16 %v1998
    %v2074 = vunpack.c.h.b16 %v1998
    %v2075 = vunpack.c.l.b16 %v1999
    %v2076 = vunpack.c.l.b16 %v2000
    %v2077 = vunpack.c.h.b16 %v2000
    %v2078 = vunpack.c.l.b16 %v2001
    %v2079 = vunpack.c.l.b16 %v2002
    %v2080 = vunpack.c.h.b16 %v2002
    %v2081 = vunpack.c.l.b16 %v2003
    %v2082 = vunpack.c.l.b16 %v2004
    %v2083 = vunpack.c.h.b16 %v2004
    %v2084 = vunpack.c.l.b16 %v2005
    %v2085 = vunpack.c.l.b16 %v2006
    %v2086 = vunpack.c.h.b16 %v2006
    %v2087 = vunpack.c.l.b16 %v2007
    %v2088 = vpack.c.b16 %v2043, %v2040
    %v2089 = vpack.c.b16 %v2044, %v2041
    %v2090 = vpack.c.b16 %v2045, %v2042
    %v2091 = vpack.c.b16 %v2049, %v2046
    %v2092 = vpack.c.b16 %v2050, %v2047
    %v2093 = vpack.c.b16 %v2051, %v2048
    %v2094 = vpack.c.b16 %v2055, %v2052
    %v2095 = vpack.c.b16 %v2056, %v2053
    %v2096 = vpack.c.b16 %v2057, %v2054
    %v2097 = vpack.c.b16 %v2061, %v2058
    %v2098 = vpack.c.b16 %v2062, %v2059
    %v2099 = vpack.c.b16 %v2063, %v2060
    %v2100 = vpack.c.b16 %v2067, %v2064
    %v2101 = vpack.c.b16 %v2068, %v2065
    %v2102 = vpack.c.b16 %v2069, %v2066
    %v2103 = vpack.c.b16 %v2073, %v2070
    %v2104 = vpack.c.b16 %v2074, %v2071
    %v2105 = vpack.c.b16 %v2075, %v2072
    %v2106 = vpack.c.b16 %v2079, %v2076
    %v2107 = vpack.c.b16 %v2080, %v2077
    %v2108 = vpack.c.b16 %v2081, %v2078
    %v2109 = vpack.c.b16 %v2085, %v2082
    %v2110 = vpack.c.b16 %v2086, %v2083
    %v2111 = vpack.c.b16 %v2087, %v2084
    %2136 = vmatprep.subr.bf16.mxu0 %v2089
    %2137 = vmatpush1.bf16.msra.mxu0 %v2088
    %2138 = vmatprep.subr.bf16.mxu0 %v2092
    %2139 = vmatpush1.bf16.msra.mxu0 %v2091
    %2140 = vmatprep.subr.bf16.mxu0 %v2095
    %2141 = vmatpush1.bf16.msra.mxu0 %v2094
    %2142 = vmatprep.subr.bf16.mxu0 %v2098
    %2143 = vmatpush1.bf16.msra.mxu0 %v2097
    %2144 = vmatprep.subr.bf16.mxu0 %v2101
    %2145 = vmatpush1.bf16.msra.mxu0 %v2100
    %2146 = vmatprep.subr.bf16.mxu0 %v2104
    %2147 = vmatpush1.bf16.msra.mxu0 %v2103
    %2148 = vmatprep.subr.bf16.mxu0 %v2107
    %2149 = vmatpush1.bf16.msra.mxu0 %v2106
    %2150 = vmatprep.subr.bf16.mxu0 %v2110
    %2151 = vmatpush1.bf16.msra.mxu0 %v2109
    %2152 = vmatprep.subr.bf16.mxu0 0
    %2153 = vmatpush1.bf16.msra.mxu0 0
    %2154 = vmatprep.subr.bf16.mxu0 0
    %2155 = vmatpush1.bf16.msra.mxu0 0
    %2156 = vmatprep.subr.bf16.mxu0 0
    %2157 = vmatpush1.bf16.msra.mxu0 0
    %2158 = vmatprep.subr.bf16.mxu0 0
    %2159 = vmatpush1.bf16.msra.mxu0 0
    %2160 = vmatprep.subr.bf16.mxu0 0
    %2161 = vmatpush1.bf16.msra.mxu0 0
    %2162 = vmatprep.subr.bf16.mxu0 0
    %2163 = vmatpush1.bf16.msra.mxu0 0
    %2164 = vmatprep.subr.bf16.mxu0 0
    %2165 = vmatpush1.bf16.msra.mxu0 0
    %2166 = vmatprep.subr.bf16.mxu0 0
    %2167 = vmatpush1.bf16.msra.mxu0 0
    %2168 = vmatprep.mubr.bf16.mxu0 0
    %2169 = vmatmul.mubr.bf16.gmra.mrb[0].mxu0 %v1975
    %v2170 = vpop.f32.mrb[0].mxu0
    %v2171 = vadd.f32 0.0, %v2170
    %v2172 = vpop.f32.mrb[0].mxu0
    %v2173 = vadd.f32 0.0, %v2172
    %v2174 = vpop.f32.mrb[0].mxu0
    %v2175 = vpop.f32.mrb[0].mxu0
    %2176 = vdwg.mxu0
    %2177 = vmatprep.subr.bf16.mxu0 0
    %2178 = vmatpush1.bf16.msra.mxu0 %v2090
    %2179 = vmatprep.subr.bf16.mxu0 0
    %2180 = vmatpush1.bf16.msra.mxu0 %v2093
    %2181 = vmatprep.subr.bf16.mxu0 0
    %2182 = vmatpush1.bf16.msra.mxu0 %v2096
    %2183 = vmatprep.subr.bf16.mxu0 0
    %2184 = vmatpush1.bf16.msra.mxu0 %v2099
    %2185 = vmatprep.subr.bf16.mxu0 0
    %2186 = vmatpush1.bf16.msra.mxu0 %v2102
    %2187 = vmatprep.subr.bf16.mxu0 0
    %2188 = vmatpush1.bf16.msra.mxu0 %v2105
    %2189 = vmatprep.subr.bf16.mxu0 0
    %2190 = vmatpush1.bf16.msra.mxu0 %v2108
    %2191 = vmatprep.subr.bf16.mxu0 0
    %2192 = vmatpush1.bf16.msra.mxu0 %v2111
    %2193 = vmatprep.subr.bf16.mxu0 0
    %2194 = vmatpush1.bf16.msra.mxu0 0
    %2195 = vmatprep.subr.bf16.mxu0 0
    %2196 = vmatpush1.bf16.msra.mxu0 0
    %2197 = vmatprep.subr.bf16.mxu0 0
    %2198 = vmatpush1.bf16.msra.mxu0 0
    %2199 = vmatprep.subr.bf16.mxu0 0
    %2200 = vmatpush1.bf16.msra.mxu0 0
    %2201 = vmatprep.subr.bf16.mxu0 0
    %2202 = vmatpush1.bf16.msra.mxu0 0
    %2203 = vmatprep.subr.bf16.mxu0 0
    %2204 = vmatpush1.bf16.msra.mxu0 0
    %2205 = vmatprep.subr.bf16.mxu0 0
    %2206 = vmatpush1.bf16.msra.mxu0 0
    %2207 = vmatprep.subr.bf16.mxu0 0
    %2208 = vmatpush1.bf16.msra.mxu0 0
    %2209 = vmatprep.mubr.bf16.mxu0 0
    %2210 = vmatmul.mubr.bf16.gmra.mrb[0].mxu0 %v1975
    %v2211 = vpop.f32.mrb[0].mxu0
    %v2212 = vadd.f32 0.0, %v2211
    %v2213 = vpop.f32.mrb[0].mxu0
    %v2214 = vpop.f32.mrb[0].mxu0
    %v2215 = vpop.f32.mrb[0].mxu0
    %2216 = vdwg.mxu0
    %v2217 = vadd.f32 %v1973, %v2171
    %v2218 = vxor.u32 %v2217, 2147483648
    %v2219 = vmul.f32 %v2218, 1.442695
    %v2220 = vpow.pop %v2219
    %v2221 = vadd.f32 %v2220, 1.0
    %v2222 = vrcp.pop %v2221
    %v2223 = vmul.f32 1.0, %v2222
    %v2225 = vrot.slane %v1973, 4
    %v2227 = vadd.f32 %v2225, %v2173
    %v2228 = vxor.u32 %v2227, 2147483648
    %v2229 = vmul.f32 %v2228, 1.442695
    %v2230 = vpow.pop %v2229
    %v2231 = vadd.f32 %v2230, 1.0
    %v2232 = vrcp.pop %v2231
    %v2233 = vmul.f32 1.0, %v2232
    %v2234 = vadd.f32 %v2212, %v60
    %v2235 = vmul.f32 %v2223, %v2234
    %v2236 = vadd.f32 %v1974, %v2235
    %v2237 = vtanh.pop %v2236
    %v2238 = vsub.f32 1.0, %v2233
    %v2239 = vmul.f32 %v2238, %v2237
    %v2240 = vmul.f32 %v2233, %v1968
    %v2241 = vadd.f32 %v2239, %v2240
    %s2242 = scalar_lea.vmem [#allocation9], 28
    %2243 = vst [vmem:[%s2242] sm:$0xf] %v2241
    %2244 = vst [vmem:[#allocation2] sm:$0xf] %v2241
    // Predicated region
    $region30: #{tpu_custom_call.1} parent=1 // pred_check
      _
    $region31: #{tpu_custom_call.1} parent=1 // pred_check_branch
      %2246 = sbr.rel (0) target = $region33
    $region32: #{tpu_custom_call.1} parent=1 // pred_region
      %s2248 = ssub.s32 512, 512
      %2249 = vsyncadd [#allocation5], %s2248
      %s2250 = sshll.u32 [#allocation9], 4
      %s2251 = int_to_ptr.vmem [resolvable:$true] %s2250
      %2256 = dma.vmem_to_hbm [thread:$0]  %s2251, 512, %s3, [#allocation5], 64, 64, 4
    $region33: #{tpu_custom_call.1} parent=1 // pred_fallthru
      _
    // Predicated region
    $region34: #{tpu_custom_call.1} parent=1 // pred_check
      _
    $region35: #{tpu_custom_call.1} parent=1 // pred_check_branch
      %2258 = sbr.rel (0) target = $region37
    $region36: #{tpu_custom_call.1} parent=1 // pred_region
      %2259 = dma.done [#allocation5], 512
    $region37: #{tpu_custom_call.1} parent=1 // pred_fallthru
      _
    %2260 = vsyncpa [#allocation4], 1
    %2261 = vsyncpa [#allocation7], 1
    %2262 = vsyncpa [#allocation5], 1

</llo_original>
